<compile_context>
chip_gen: v7x
topology: tpu7x:2x2x1
jax: 0.10.0
libtpu: 0.0.40
codegen_flags: <defaults>
</compile_context>

<pallas_src>
import jax
import jax.numpy as jnp
from jax import lax
from jax.experimental import pallas as pl
from jax.experimental.pallas import tpu as pltpu


# Contract last dim of both operands: (M,K) x (N,K) -> (M,N), no transposes.
_DN_LAST = (((1,), (1,)), ((), ()))


def _round_up(a, m):
    return ((a + m - 1) // m) * m


def _pick_block_b(B, cap=8):
    """Largest divisor of B not exceeding `cap` (batch block per grid step)."""
    tb = max(1, min(B, cap))
    while B % tb:
        tb -= 1
    return tb


# ---------------------------------------------------------------------------
# Kernel 1: tiled linear  o = x @ w.T + b   (w stored (out, in))
# ---------------------------------------------------------------------------
def _linear_kernel(x_ref, w_ref, b_ref, o_ref, acc_ref):
    @pl.when(pl.program_id(2) == 0)
    def _init():
        acc_ref[...] = jnp.zeros_like(acc_ref)

    acc_ref[...] += lax.dot_general(
        x_ref[...], w_ref[...], _DN_LAST, preferred_element_type=jnp.float32)

    @pl.when(pl.program_id(2) == pl.num_programs(2) - 1)
    def _done():
        o_ref[...] = (acc_ref[...] + b_ref[...]).astype(o_ref.dtype)


def pallas_linear(x, w, b, *, tm=512, tn=256, tk=512):
    """x: (M,K), w: (N,K), b: (N,) -> x @ w.T + b.
    Non-divisible dims are zero-padded up to tile multiples (exact for matmul)
    instead of silently using a full-dim tile (review fix)."""
    M, K = x.shape
    N, K2 = w.shape
    assert K == K2

    tm = min(tm, _round_up(M, 8))
    tn = min(tn, _round_up(N, 128))
    tk = min(tk, _round_up(K, 128))
    Mp, Np, Kp = _round_up(M, tm), _round_up(N, tn), _round_up(K, tk)

    xp = x if (Mp, Kp) == (M, K) else jnp.pad(x, ((0, Mp - M), (0, Kp - K)))
    wp = w if (Np, Kp) == (N, K) else jnp.pad(w, ((0, Np - N), (0, Kp - K)))
    bp = b if Np == N else jnp.pad(b, (0, Np - N))

    out = pl.pallas_call(
        _linear_kernel,
        out_shape=jax.ShapeDtypeStruct((Mp, Np), x.dtype),
        grid=(Mp // tm, Np // tn, Kp // tk),
        in_specs=[
            pl.BlockSpec((tm, tk), lambda i, j, k: (i, k)),
            pl.BlockSpec((tn, tk), lambda i, j, k: (j, k)),
            pl.BlockSpec((1, tn), lambda i, j, k: (0, j)),
        ],
        out_specs=pl.BlockSpec((tm, tn), lambda i, j, k: (i, j)),
        scratch_shapes=[pltpu.VMEM((tm, tn), jnp.float32)],
        compiler_params=pltpu.CompilerParams(
            dimension_semantics=("parallel", "parallel", "arbitrary")),
    )(xp, wp, bp.reshape(1, Np))
    return out if (Mp, Np) == (M, N) else out[:M, :N]


# ---------------------------------------------------------------------------
# Kernel 2: fused RelationAttention over a block of TB batch elements.
#   query block : (BQ, C, H)  with BQ in {1, TB}  (1 => shared across batch)
#   key/val blk : (BK, L, H)  with BK in {1, TB}
#   mask block  : (TB, 1, L)  (optional)
#   output      : (TB, C, H) = RelationAttention(query, kv, mask) + query
#                 (both the inner "+p" residual and the outer GATLayer
#                  residual are fused into the kernel).
# ---------------------------------------------------------------------------
def _make_ra_kernel(has_mask):
    def kernel(*refs):
        refs = list(refs)
        pq_ref = refs[0]
        kv_ref = refs[1]
        m_ref = refs[2] if has_mask else None
        (wq_ref, bq_ref, wk_ref, bk_ref, wv_ref, bv_ref,
         wsq_ref, wsk_ref, bs_ref, wgo_ref, wgp_ref, bg_ref,
         o_ref) = refs[3 if has_mask else 2:]

        f32 = jnp.float32
        p = pq_ref[...]                                   # (BQ, C, H) queries
        x = kv_ref[...]                                   # (BK, L, H) keys/values
        BQ, C, H = p.shape
        BK, L, _ = x.shape
        TB = o_ref.shape[0]

        # Q/K/V projections: collapse (batch, rows) into sublanes so each
        # projection is one well-filled MXU matmul (batch-tiling review item).
        def proj(inp2, w_ref_, b_ref_):
            return lax.dot_general(inp2, w_ref_[...], _DN_LAST,
                                   preferred_element_type=f32) + b_ref_[...]

        p2 = p.reshape(BQ * C, H)
        x2 = x.reshape(BK * L, H)
        q = proj(p2, wq_ref, bq_ref).reshape(BQ, C, H)
        k = proj(x2, wk_ref, bk_ref).reshape(BK, L, H)
        v = proj(x2, wv_ref, bv_ref).reshape(BK, L, H)

        # Separable additive score (the (C,L,2H) concat is never materialized):
        #   score[b,c,l] = q[b,c]·ws_q + k[b,l]·ws_k + b_s
        # Width-1 matmuls replaced by VPU multiply + lane reduction.
        sq = jnp.sum(q * wsq_ref[...], axis=-1, keepdims=True)       # (BQ, C, 1)
        sk = jnp.sum(k * wsk_ref[...], axis=-1)[:, None, :]          # (BK, 1, L)
        score = sq + sk + bs_ref[...]                                # (TB, C, L)

        if has_mask:
            # masked_fill(mask == 0, -1e9); `< 0.5` is robust for 0/1 masks.
            score = jnp.where(m_ref[...] < 0.5, -1e9, score)

        # Numerically-stable softmax over L; reciprocal on the EUP + 1 NR step.
        score = score - jnp.max(score, axis=-1, keepdims=True)
        e = jnp.exp(score)
        denom = jnp.sum(e, axis=-1, keepdims=True)
        r = pl.reciprocal(denom, approx=True)
        r = r * (2.0 - denom * r)                                    # Newton refine
        alpha = e * r                                                # (TB, C, L)

        # Attention-weighted values + inner residual.
        if BK == alpha.shape[0]:                                     # per-batch K/V
            ctx = jnp.einsum('bcl,bld->bcd', alpha, v,
                             preferred_element_type=f32)
        else:                                                        # shared K/V (BK == 1)
            ctx = lax.dot_general(alpha.reshape(TB * C, L), v[0],
                                  (((1,), (0,)), ((), ())),
                                  preferred_element_type=f32).reshape(TB, C, H)
        out = ctx + p                                                # (TB, C, H)

        # Gate: sigmoid(cat([out, p]) @ Wg.T + bg), split into two
        # H-contractions done as mul+reduce; sigmoid via EUP tanh.
        g_lin = (jnp.sum(out * wgo_ref[...], axis=-1, keepdims=True)
                 + jnp.sum(p * wgp_ref[...], axis=-1, keepdims=True)
                 + bg_ref[...])                                      # (TB, C, 1)
        g = 0.5 * (jnp.tanh(0.5 * g_lin) + 1.0)

        gated = g * out + (1.0 - g) * p
        # Fused outer GATLayer residual: RA(query, kv, mask) + query.
        o_ref[...] = (gated + p).astype(o_ref.dtype)

    return kernel


def relation_attention(pq, kv, mask, rp, *, block_b=None, max_block_b=8,
                       vmem_limit_bytes=None):
    """pq: (B,C,H) or (C,H) [shared];  kv: (B,L,H) or (L,H) [shared];
    mask: (B,L) or None.  Returns RelationAttention(pq, kv, mask) + pq, (B,C,H)."""
    pq3 = pq if pq.ndim == 3 else pq[None]
    kv3 = kv if kv.ndim == 3 else kv[None]
    Bq, C, H = pq3.shape
    Bk, L, _ = kv3.shape
    B = max(Bq, Bk)
    assert Bq in (1, B) and Bk in (1, B)
    assert not (B > 1 and Bq == 1 and Bk == 1)

    if block_b is None:
        block_b = _pick_block_b(B, max_block_b)
    assert B % block_b == 0
    grid = (B // block_b,)

    def op_spec(full_b, d1, d2):
        if full_b == 1:          # shared across batch: VMEM-resident, one DMA
            return pl.BlockSpec((1, d1, d2), lambda b: (0, 0, 0))
        return pl.BlockSpec((block_b, d1, d2), lambda b: (b, 0, 0))

    def wspec(shape):
        return pl.BlockSpec(shape, lambda b: (0, 0))

    args = [pq3, kv3]
    in_specs = [op_spec(Bq, C, H), op_spec(Bk, L, H)]
    if mask is not None:
        args.append(mask.astype(jnp.float32).reshape(B, 1, L))
        in_specs.append(pl.BlockSpec((block_b, 1, L), lambda b: (b, 0, 0)))

    args += [rp["wq"], rp["bq"], rp["wk"], rp["bk"], rp["wv"], rp["bv"],
             rp["wsq"], rp["wsk"], rp["bs"], rp["wgo"], rp["wgp"], rp["bg"]]
    in_specs += [wspec((H, H)), wspec((1, H)),
                 wspec((H, H)), wspec((1, H)),
                 wspec((H, H)), wspec((1, H)),
                 wspec((1, H)), wspec((1, H)), wspec((1, 1)),
                 wspec((1, H)), wspec((1, H)), wspec((1, 1))]

    cp = dict(dimension_semantics=("parallel",))
    if vmem_limit_bytes is not None:
        cp["vmem_limit_bytes"] = vmem_limit_bytes

    # NOTE: H=32 under-fills lanes here; at production sizes pad H to a
    # multiple of 128 for lane-dense (unmasked) stores.
    return pl.pallas_call(
        _make_ra_kernel(has_mask=mask is not None),
        out_shape=jax.ShapeDtypeStruct((B, C, H), pq3.dtype),
        grid=grid,
        in_specs=in_specs,
        out_specs=pl.BlockSpec((block_b, C, H), lambda b: (b, 0, 0)),
        compiler_params=pltpu.CompilerParams(**cp),
    )(*args)


# ---------------------------------------------------------------------------
# One-time parameter preparation (hoists slicing/reshape out of the hot path).
# ---------------------------------------------------------------------------
def prepare_ra_params(rp, dtype=jnp.float32):
    H = rp["query_w"].shape[0]
    c = lambda a: jnp.asarray(a, dtype)
    return {
        "wq": c(rp["query_w"]), "bq": c(rp["query_b"]).reshape(1, H),
        "wk": c(rp["key_w"]),   "bk": c(rp["key_b"]).reshape(1, H),
        "wv": c(rp["value_w"]), "bv": c(rp["value_b"]).reshape(1, H),
        "wsq": c(rp["score_w"][:, :H]), "wsk": c(rp["score_w"][:, H:]),
        "bs": c(rp["score_b"]).reshape(1, 1),
        "wgo": c(rp["gate_w"][:, :H]), "wgp": c(rp["gate_w"][:, H:]),
        "bg": c(rp["gate_b"]).reshape(1, 1),
    }


def prepare_hgat_params(params, dtype=jnp.float32):
    # For v6e/v7x MXU peak, pass dtype=jnp.bfloat16 here (and cast activations)
    # — kept f32 in this script to preserve the tight parity check.
    return {
        "embedding_weight": jnp.asarray(params["embedding_weight"], dtype),
        "relation_w": jnp.asarray(params["relation_w"], dtype),
        "relation_b": jnp.asarray(params["relation_b"], dtype),
        "layers": [{"ra1": prepare_ra_params(l["ra1"], dtype),
                    "ra2": prepare_ra_params(l["ra2"], dtype)}
                   for l in params["layers"]],
    }


# ---------------------------------------------------------------------------
# HGAT forward (glue in plain JAX, hot paths in Pallas)
# ---------------------------------------------------------------------------
def hgat_forward(x, mask, prepared):
    emb = prepared["embedding_weight"]                 # (C, H)
    C, H = emb.shape
    if C >= 64 and H >= 256:
        p0 = pallas_linear(emb, prepared["relation_w"], prepared["relation_b"])
    else:
        # Tiny (C,H) projection: a dedicated pallas_call is pure launch overhead.
        p0 = emb @ prepared["relation_w"].T + prepared["relation_b"]

    p = p0   # (C, H), shared across batch — never broadcast to (B,C,H) in HBM
    for lp in prepared["layers"]:
        x = relation_attention(x, p, None, lp["ra1"])    # = ra1(x, p) + x
        p = relation_attention(p, x, mask, lp["ra2"])    # = ra2(p, x, m) + p
    return x, p


# ---------------------------------------------------------------------------
# Pure-JAX reference (literal translation of the PyTorch module)
# ---------------------------------------------------------------------------
def ref_relation_attention(pq, x, mask, rp):
    H = pq.shape[-1]
    q = pq @ rp["query_w"].T + rp["query_b"]
    k = x @ rp["key_w"].T + rp["key_b"]
    v = x @ rp["value_w"].T + rp["value_b"]
    B, C, _ = q.shape
    L = k.shape[1]
    qe = jnp.broadcast_to(q[:, :, None, :], (B, C, L, H))
    ke = jnp.broadcast_to(k[:, None, :, :], (B, C, L, H))
    temp = jnp.concatenate([qe, ke], axis=3)                     # (B,C,L,2H)
    score = jnp.squeeze(temp @ rp["score_w"].T + rp["score_b"], axis=3)
    if mask is not None:
        score = jnp.where(mask[:, None, :] == 0, -1e9, score)
    alpha = jax.nn.softmax(score, axis=2)
    out = jnp.einsum("bcl,bld->bcd", alpha, v) + pq
    g = jax.nn.sigmoid(
        jnp.concatenate([out, pq], axis=2) @ rp["gate_w"].T + rp["gate_b"])
    return g * out + (1.0 - g) * pq


def ref_hgat(x, mask, params):
    B = x.shape[0]
    p0 = params["embedding_weight"] @ params["relation_w"].T + params["relation_b"]
    p = jnp.broadcast_to(p0[None], (B,) + p0.shape)
    for lp in params["layers"]:
        x = ref_relation_attention(x, p, None, lp["ra1"]) + x
        p = ref_relation_attention(p, x, mask, lp["ra2"]) + p
    return x, p


# ---------------------------------------------------------------------------
def make_ra_params(key, H):
    ks = jax.random.split(key, 10)
    s = 0.1
    n = lambda k, shp: jax.random.normal(k, shp, jnp.float32) * s
    return {
        "query_w": n(ks[0], (H, H)), "query_b": n(ks[1], (H,)),
        "key_w": n(ks[2], (H, H)), "key_b": n(ks[3], (H,)),
        "value_w": n(ks[4], (H, H)), "value_b": n(ks[5], (H,)),
        "score_w": n(ks[6], (1, 2 * H)), "score_b": n(ks[7], (1,)),
        "gate_w": n(ks[8], (1, 2 * H)), "gate_b": n(ks[9], (1,)),
    }


if __name__ == "__main__":
    # Small deterministic problem: batch=2, seq_len=8, hidden=32, class_num=4
    B, L, H, C = 2, 8, 32, 4
    key0 = jax.random.PRNGKey(0)
    ks = jax.random.split(key0, 12)

    x = jax.random.normal(ks[0], (B, L, H), jnp.float32)
    mask = jnp.ones((B, L), jnp.float32).at[1, L - 2:].set(0.0)   # mask 2 positions

    raw_params = {
        "embedding_weight": jax.random.normal(ks[1], (C, H), jnp.float32) * 0.1,
        "relation_w": jax.random.normal(ks[2], (H, H), jnp.float32) * 0.1,
        "relation_b": jax.random.normal(ks[3], (H,), jnp.float32) * 0.1,
        "layers": [
            {"ra1": make_ra_params(ks[4], H), "ra2": make_ra_params(ks[5], H)},
            {"ra1": make_ra_params(ks[6], H), "ra2": make_ra_params(ks[7], H)},
        ],
    }
    prepared = prepare_hgat_params(raw_params)

    x_out, p_out = jax.jit(hgat_forward)(x, mask, prepared)
    x_out = jax.block_until_ready(x_out)
    p_out = jax.block_until_ready(p_out)

    x_ref, p_ref = ref_hgat(x, mask, raw_params)
    assert x_out.shape == (B, L, H) and p_out.shape == (B, C, H)
    assert jnp.allclose(x_out, x_ref, rtol=2e-4, atol=2e-4), "x mismatch vs reference"
    assert jnp.allclose(p_out, p_ref, rtol=2e-4, atol=2e-4), "p mismatch vs reference"

    # Standalone check of the padded/tiled linear kernel (used for the relation
    # projection at production sizes); exercises the non-divisible -> pad path.
    Ml, Kl, Nl = 96, 160, 72
    xa = jax.random.normal(ks[8], (Ml, Kl), jnp.float32)
    wa = jax.random.normal(ks[9], (Nl, Kl), jnp.float32) * 0.1
    ba = jax.random.normal(ks[10], (Nl,), jnp.float32) * 0.1
    lin = jax.block_until_ready(pallas_linear(xa, wa, ba))
    lin_ref = jnp.dot(xa, wa.T, precision=jax.lax.Precision.HIGHEST) + ba
    assert jnp.allclose(lin, lin_ref, rtol=2e-3, atol=2e-3), "linear mismatch"

    print("KERNEL_OK")
</pallas_src>

<mosaic_0001>
module attributes {stable_mosaic.version = 11 : i64} {
  func.func @kernel(%arg0: i32, %arg1: memref<1x4x32xf32, #tpu.memory_space<vmem>>, %arg2: memref<2x8x32xf32, #tpu.memory_space<vmem>>, %arg3: memref<2x1x8xf32, #tpu.memory_space<vmem>>, %arg4: memref<32x32xf32, #tpu.memory_space<vmem>>, %arg5: memref<1x32xf32, #tpu.memory_space<vmem>>, %arg6: memref<32x32xf32, #tpu.memory_space<vmem>>, %arg7: memref<1x32xf32, #tpu.memory_space<vmem>>, %arg8: memref<32x32xf32, #tpu.memory_space<vmem>>, %arg9: memref<1x32xf32, #tpu.memory_space<vmem>>, %arg10: memref<1x32xf32, #tpu.memory_space<vmem>>, %arg11: memref<1x32xf32, #tpu.memory_space<vmem>>, %arg12: memref<1x1xf32, #tpu.memory_space<vmem>>, %arg13: memref<1x32xf32, #tpu.memory_space<vmem>>, %arg14: memref<1x32xf32, #tpu.memory_space<vmem>>, %arg15: memref<1x1xf32, #tpu.memory_space<vmem>>, %arg16: memref<2x4x32xf32, #tpu.memory_space<vmem>>) attributes {dimension_semantics = [#tpu.dimension_semantics<parallel>], iteration_bounds = array<i64: 1>, scalar_prefetch = 0 : i64, scratch_operands = 0 : i64, tpu.core_type = #tpu.core_type<tc>, window_params = [{pipeline_mode = #tpu.pipeline_mode<synchronous>, transform_indices = @transform_0, window_bounds = array<i64: 1, 4, 32>}, {transform_indices = @transform_1, window_bounds = array<i64: 2, 8, 32>}, {transform_indices = @transform_2, window_bounds = array<i64: 2, 1, 8>}, {pipeline_mode = #tpu.pipeline_mode<synchronous>, transform_indices = @transform_3, window_bounds = array<i64: 32, 32>}, {pipeline_mode = #tpu.pipeline_mode<synchronous>, transform_indices = @transform_4, window_bounds = array<i64: 1, 32>}, {pipeline_mode = #tpu.pipeline_mode<synchronous>, transform_indices = @transform_5, window_bounds = array<i64: 32, 32>}, {pipeline_mode = #tpu.pipeline_mode<synchronous>, transform_indices = @transform_6, window_bounds = array<i64: 1, 32>}, {pipeline_mode = #tpu.pipeline_mode<synchronous>, transform_indices = @transform_7, window_bounds = array<i64: 32, 32>}, {pipeline_mode = #tpu.pipeline_mode<synchronous>, transform_indices = @transform_8, window_bounds = array<i64: 1, 32>}, {pipeline_mode = #tpu.pipeline_mode<synchronous>, transform_indices = @transform_9, window_bounds = array<i64: 1, 32>}, {pipeline_mode = #tpu.pipeline_mode<synchronous>, transform_indices = @transform_10, window_bounds = array<i64: 1, 32>}, {pipeline_mode = #tpu.pipeline_mode<synchronous>, transform_indices = @transform_11, window_bounds = array<i64: 1, 1>}, {pipeline_mode = #tpu.pipeline_mode<synchronous>, transform_indices = @transform_12, window_bounds = array<i64: 1, 32>}, {pipeline_mode = #tpu.pipeline_mode<synchronous>, transform_indices = @transform_13, window_bounds = array<i64: 1, 32>}, {pipeline_mode = #tpu.pipeline_mode<synchronous>, transform_indices = @transform_14, window_bounds = array<i64: 1, 1>}, {transform_indices = @transform_15, window_bounds = array<i64: 2, 4, 32>}]} {
    %c0 = arith.constant 0 : index
    %c0_0 = arith.constant 0 : index
    %c0_1 = arith.constant 0 : index
    %0 = vector.load %arg1[%c0, %c0_0, %c0_1] : memref<1x4x32xf32, #tpu.memory_space<vmem>>, vector<1x4x32xf32>
    %c0_2 = arith.constant 0 : index
    %c0_3 = arith.constant 0 : index
    %c0_4 = arith.constant 0 : index
    %1 = vector.load %arg2[%c0_2, %c0_3, %c0_4] : memref<2x8x32xf32, #tpu.memory_space<vmem>>, vector<2x8x32xf32>
    %2 = vector.shape_cast %0 : vector<1x4x32xf32> to vector<4x32xf32>
    %3 = vector.shape_cast %1 : vector<2x8x32xf32> to vector<16x32xf32>
    %c0_5 = arith.constant 0 : index
    %c0_6 = arith.constant 0 : index
    %4 = vector.load %arg4[%c0_5, %c0_6] : memref<32x32xf32, #tpu.memory_space<vmem>>, vector<32x32xf32>
    %cst = arith.constant dense<0.000000e+00> : vector<4x32xf32>
    %5 = tpu.matmul %2, %4, %cst {dimension_numbers = #tpu.dot_dimension_numbers<[1], [1], [0], [0], [0, 0, 1, 0], [], []>} : vector<4x32xf32>, vector<32x32xf32>, vector<4x32xf32> -> vector<4x32xf32>
    %c0_7 = arith.constant 0 : index
    %c0_8 = arith.constant 0 : index
    %6 = vector.load %arg5[%c0_7, %c0_8] : memref<1x32xf32, #tpu.memory_space<vmem>>, vector<1x32xf32>
    %7 = vector.broadcast %6 : vector<1x32xf32> to vector<4x32xf32>
    %8 = arith.addf %5, %7 : vector<4x32xf32>
    %9 = vector.shape_cast %8 : vector<4x32xf32> to vector<1x4x32xf32>
    %c0_9 = arith.constant 0 : index
    %c0_10 = arith.constant 0 : index
    %10 = vector.load %arg6[%c0_9, %c0_10] : memref<32x32xf32, #tpu.memory_space<vmem>>, vector<32x32xf32>
    %cst_11 = arith.constant dense<0.000000e+00> : vector<16x32xf32>
    %11 = tpu.matmul %3, %10, %cst_11 {dimension_numbers = #tpu.dot_dimension_numbers<[1], [1], [0], [0], [0, 0, 1, 0], [], []>} : vector<16x32xf32>, vector<32x32xf32>, vector<16x32xf32> -> vector<16x32xf32>
    %c0_12 = arith.constant 0 : index
    %c0_13 = arith.constant 0 : index
    %12 = vector.load %arg7[%c0_12, %c0_13] : memref<1x32xf32, #tpu.memory_space<vmem>>, vector<1x32xf32>
    %13 = vector.broadcast %12 : vector<1x32xf32> to vector<16x32xf32>
    %14 = arith.addf %11, %13 : vector<16x32xf32>
    %15 = vector.shape_cast %14 : vector<16x32xf32> to vector<2x8x32xf32>
    %c0_14 = arith.constant 0 : index
    %c0_15 = arith.constant 0 : index
    %16 = vector.load %arg8[%c0_14, %c0_15] : memref<32x32xf32, #tpu.memory_space<vmem>>, vector<32x32xf32>
    %cst_16 = arith.constant dense<0.000000e+00> : vector<16x32xf32>
    %17 = tpu.matmul %3, %16, %cst_16 {dimension_numbers = #tpu.dot_dimension_numbers<[1], [1], [0], [0], [0, 0, 1, 0], [], []>} : vector<16x32xf32>, vector<32x32xf32>, vector<16x32xf32> -> vector<16x32xf32>
    %c0_17 = arith.constant 0 : index
    %c0_18 = arith.constant 0 : index
    %18 = vector.load %arg9[%c0_17, %c0_18] : memref<1x32xf32, #tpu.memory_space<vmem>>, vector<1x32xf32>
    %19 = vector.broadcast %18 : vector<1x32xf32> to vector<16x32xf32>
    %20 = arith.addf %17, %19 : vector<16x32xf32>
    %21 = vector.shape_cast %20 : vector<16x32xf32> to vector<2x8x32xf32>
    %c0_19 = arith.constant 0 : index
    %c0_20 = arith.constant 0 : index
    %22 = vector.load %arg10[%c0_19, %c0_20] : memref<1x32xf32, #tpu.memory_space<vmem>>, vector<1x32xf32>
    %23 = vector.shape_cast %22 : vector<1x32xf32> to vector<1x1x32xf32>
    %24 = vector.broadcast %23 : vector<1x1x32xf32> to vector<1x4x32xf32>
    %25 = arith.mulf %9, %24 : vector<1x4x32xf32>
    %cst_21 = arith.constant dense<0.000000e+00> : vector<1x4xf32>
    %26 = vector.multi_reduction <add>, %25, %cst_21 [2] : vector<1x4x32xf32> to vector<1x4xf32>
    %27 = vector.shape_cast %26 : vector<1x4xf32> to vector<1x4x1xf32>
    %c0_22 = arith.constant 0 : index
    %c0_23 = arith.constant 0 : index
    %28 = vector.load %arg11[%c0_22, %c0_23] : memref<1x32xf32, #tpu.memory_space<vmem>>, vector<1x32xf32>
    %29 = vector.shape_cast %28 : vector<1x32xf32> to vector<1x1x32xf32>
    %30 = vector.broadcast %29 : vector<1x1x32xf32> to vector<2x8x32xf32>
    %31 = arith.mulf %15, %30 : vector<2x8x32xf32>
    %cst_24 = arith.constant dense<0.000000e+00> : vector<2x8xf32>
    %32 = vector.multi_reduction <add>, %31, %cst_24 [2] : vector<2x8x32xf32> to vector<2x8xf32>
    %33 = vector.shape_cast %32 : vector<2x8xf32> to vector<2x1x8xf32>
    %34 = vector.broadcast %27 : vector<1x4x1xf32> to vector<2x4x8xf32>
    %35 = vector.broadcast %33 : vector<2x1x8xf32> to vector<2x4x8xf32>
    %36 = arith.addf %34, %35 : vector<2x4x8xf32>
    %c0_25 = arith.constant 0 : index
    %c0_26 = arith.constant 0 : index
    %37 = vector.load %arg12[%c0_25, %c0_26] : memref<1x1xf32, #tpu.memory_space<vmem>>, vector<1x1xf32>
    %38 = vector.shape_cast %37 : vector<1x1xf32> to vector<1x1x1xf32>
    %39 = vector.broadcast %38 : vector<1x1x1xf32> to vector<2x4x8xf32>
    %40 = arith.addf %36, %39 : vector<2x4x8xf32>
    %c0_27 = arith.constant 0 : index
    %c0_28 = arith.constant 0 : index
    %c0_29 = arith.constant 0 : index
    %41 = vector.load %arg3[%c0_27, %c0_28, %c0_29] : memref<2x1x8xf32, #tpu.memory_space<vmem>>, vector<2x1x8xf32>
    %cst_30 = arith.constant 5.000000e-01 : f32
    %42 = vector.broadcast %cst_30 : f32 to vector<2x1x8xf32>
    %43 = arith.cmpf olt, %41, %42 : vector<2x1x8xf32>
    %cst_31 = arith.constant -1.000000e+09 : f32
    %44 = vector.shape_cast %43 : vector<2x1x8xi1> to vector<2x1x8xi1>
    %45 = vector.broadcast %44 : vector<2x1x8xi1> to vector<2x4x8xi1>
    %46 = vector.broadcast %cst_31 : f32 to vector<2x4x8xf32>
    %47 = arith.select %45, %46, %40 : vector<2x4x8xi1>, vector<2x4x8xf32>
    %cst_32 = arith.constant dense<0xFF800000> : vector<2x4xf32>
    %48 = vector.multi_reduction <maximumf>, %47, %cst_32 [2] : vector<2x4x8xf32> to vector<2x4xf32>
    %49 = vector.shape_cast %48 : vector<2x4xf32> to vector<2x4x1xf32>
    %50 = vector.broadcast %49 : vector<2x4x1xf32> to vector<2x4x8xf32>
    %51 = arith.subf %47, %50 : vector<2x4x8xf32>
    %52 = math.exp %51 : vector<2x4x8xf32>
    %cst_33 = arith.constant dense<0.000000e+00> : vector<2x4xf32>
    %53 = vector.multi_reduction <add>, %52, %cst_33 [2] : vector<2x4x8xf32> to vector<2x4xf32>
    %54 = vector.shape_cast %53 : vector<2x4xf32> to vector<2x4x1xf32>
    %55 = tpu.reciprocal %54 {approx = true} : vector<2x4x1xf32> -> vector<2x4x1xf32>
    %56 = arith.mulf %54, %55 : vector<2x4x1xf32>
    %cst_34 = arith.constant 2.000000e+00 : f32
    %57 = vector.broadcast %cst_34 : f32 to vector<2x4x1xf32>
    %58 = arith.subf %57, %56 : vector<2x4x1xf32>
    %59 = arith.mulf %55, %58 : vector<2x4x1xf32>
    %60 = vector.broadcast %59 : vector<2x4x1xf32> to vector<2x4x8xf32>
    %61 = arith.mulf %52, %60 : vector<2x4x8xf32>
    "tpu.trace_start"() <{level = 10 : i32, message = "bcl,bld->bcd"}> : () -> ()
    %cst_35 = arith.constant dense<0.000000e+00> : vector<2x4x32xf32>
    %62 = tpu.matmul %61, %21, %cst_35 {dimension_numbers = #tpu.dot_dimension_numbers<[2], [1], [1], [2], [0, 0, 0, 1, 1, 2], [0], [0]>} : vector<2x4x8xf32>, vector<2x8x32xf32>, vector<2x4x32xf32> -> vector<2x4x32xf32>
    "tpu.trace_stop"() : () -> ()
    %63 = vector.broadcast %0 : vector<1x4x32xf32> to vector<2x4x32xf32>
    %64 = arith.addf %62, %63 : vector<2x4x32xf32>
    %c0_36 = arith.constant 0 : index
    %c0_37 = arith.constant 0 : index
    %65 = vector.load %arg13[%c0_36, %c0_37] : memref<1x32xf32, #tpu.memory_space<vmem>>, vector<1x32xf32>
    %66 = vector.shape_cast %65 : vector<1x32xf32> to vector<1x1x32xf32>
    %67 = vector.broadcast %66 : vector<1x1x32xf32> to vector<2x4x32xf32>
    %68 = arith.mulf %64, %67 : vector<2x4x32xf32>
    %cst_38 = arith.constant dense<0.000000e+00> : vector<2x4xf32>
    %69 = vector.multi_reduction <add>, %68, %cst_38 [2] : vector<2x4x32xf32> to vector<2x4xf32>
    %70 = vector.shape_cast %69 : vector<2x4xf32> to vector<2x4x1xf32>
    %c0_39 = arith.constant 0 : index
    %c0_40 = arith.constant 0 : index
    %71 = vector.load %arg14[%c0_39, %c0_40] : memref<1x32xf32, #tpu.memory_space<vmem>>, vector<1x32xf32>
    %72 = vector.shape_cast %71 : vector<1x32xf32> to vector<1x1x32xf32>
    %73 = vector.broadcast %72 : vector<1x1x32xf32> to vector<1x4x32xf32>
    %74 = arith.mulf %0, %73 : vector<1x4x32xf32>
    %cst_41 = arith.constant dense<0.000000e+00> : vector<1x4xf32>
    %75 = vector.multi_reduction <add>, %74, %cst_41 [2] : vector<1x4x32xf32> to vector<1x4xf32>
    %76 = vector.shape_cast %75 : vector<1x4xf32> to vector<1x4x1xf32>
    %77 = vector.broadcast %76 : vector<1x4x1xf32> to vector<2x4x1xf32>
    %78 = arith.addf %70, %77 : vector<2x4x1xf32>
    %c0_42 = arith.constant 0 : index
    %c0_43 = arith.constant 0 : index
    %79 = vector.load %arg15[%c0_42, %c0_43] : memref<1x1xf32, #tpu.memory_space<vmem>>, vector<1x1xf32>
    %80 = vector.shape_cast %79 : vector<1x1xf32> to vector<1x1x1xf32>
    %81 = vector.broadcast %80 : vector<1x1x1xf32> to vector<2x4x1xf32>
    %82 = arith.addf %78, %81 : vector<2x4x1xf32>
    %cst_44 = arith.constant 5.000000e-01 : f32
    %83 = vector.broadcast %cst_44 : f32 to vector<2x4x1xf32>
    %84 = arith.mulf %83, %82 : vector<2x4x1xf32>
    %85 = math.tanh %84 : vector<2x4x1xf32>
    %cst_45 = arith.constant 1.000000e+00 : f32
    %86 = vector.broadcast %cst_45 : f32 to vector<2x4x1xf32>
    %87 = arith.addf %85, %86 : vector<2x4x1xf32>
    %cst_46 = arith.constant 5.000000e-01 : f32
    %88 = vector.broadcast %cst_46 : f32 to vector<2x4x1xf32>
    %89 = arith.mulf %88, %87 : vector<2x4x1xf32>
    %90 = vector.broadcast %89 : vector<2x4x1xf32> to vector<2x4x32xf32>
    %91 = arith.mulf %90, %64 : vector<2x4x32xf32>
    %cst_47 = arith.constant 1.000000e+00 : f32
    %92 = vector.broadcast %cst_47 : f32 to vector<2x4x1xf32>
    %93 = arith.subf %92, %89 : vector<2x4x1xf32>
    %94 = vector.broadcast %93 : vector<2x4x1xf32> to vector<2x4x32xf32>
    %95 = vector.broadcast %0 : vector<1x4x32xf32> to vector<2x4x32xf32>
    %96 = arith.mulf %94, %95 : vector<2x4x32xf32>
    %97 = arith.addf %91, %96 : vector<2x4x32xf32>
    %98 = vector.broadcast %0 : vector<1x4x32xf32> to vector<2x4x32xf32>
    %99 = arith.addf %97, %98 : vector<2x4x32xf32>
    %c0_48 = arith.constant 0 : index
    %c0_49 = arith.constant 0 : index
    %c0_50 = arith.constant 0 : index
    %100 = vector.load %arg16[%c0_48, %c0_49, %c0_50] : memref<2x4x32xf32, #tpu.memory_space<vmem>>, vector<2x4x32xf32>
    tpu.vector_store %arg16[%c0_48, %c0_49, %c0_50], %99 {strides = array<i32>} : memref<2x4x32xf32, #tpu.memory_space<vmem>>, vector<2x4x32xf32>,
    return
  }
  func.func @transform_0(%arg0: i32) -> (i32, i32, i32) {
    %c0_i32 = arith.constant 0 : i32
    %c0_i32_0 = arith.constant 0 : i32
    %c0_i32_1 = arith.constant 0 : i32
    %c0_i32_2 = arith.constant 0 : i32
    return %c0_i32, %c0_i32_0, %c0_i32_1 : i32, i32, i32
  }
  func.func @transform_1(%arg0: i32) -> (i32, i32, i32) {
    %c0_i32 = arith.constant 0 : i32
    %c0_i32_0 = arith.constant 0 : i32
    %c0_i32_1 = arith.constant 0 : i32
    return %arg0, %c0_i32, %c0_i32_0 : i32, i32, i32
  }
  func.func @transform_2(%arg0: i32) -> (i32, i32, i32) {
    %c0_i32 = arith.constant 0 : i32
    %c0_i32_0 = arith.constant 0 : i32
    %c0_i32_1 = arith.constant 0 : i32
    return %arg0, %c0_i32, %c0_i32_0 : i32, i32, i32
  }
  func.func @transform_3(%arg0: i32) -> (i32, i32) {
    %c0_i32 = arith.constant 0 : i32
    %c0_i32_0 = arith.constant 0 : i32
    %c0_i32_1 = arith.constant 0 : i32
    return %c0_i32, %c0_i32_0 : i32, i32
  }
  func.func @transform_4(%arg0: i32) -> (i32, i32) {
    %c0_i32 = arith.constant 0 : i32
    %c0_i32_0 = arith.constant 0 : i32
    %c0_i32_1 = arith.constant 0 : i32
    return %c0_i32, %c0_i32_0 : i32, i32
  }
  func.func @transform_5(%arg0: i32) -> (i32, i32) {
    %c0_i32 = arith.constant 0 : i32
    %c0_i32_0 = arith.constant 0 : i32
    %c0_i32_1 = arith.constant 0 : i32
    return %c0_i32, %c0_i32_0 : i32, i32
  }
  func.func @transform_6(%arg0: i32) -> (i32, i32) {
    %c0_i32 = arith.constant 0 : i32
    %c0_i32_0 = arith.constant 0 : i32
    %c0_i32_1 = arith.constant 0 : i32
    return %c0_i32, %c0_i32_0 : i32, i32
  }
  func.func @transform_7(%arg0: i32) -> (i32, i32) {
    %c0_i32 = arith.constant 0 : i32
    %c0_i32_0 = arith.constant 0 : i32
    %c0_i32_1 = arith.constant 0 : i32
    return %c0_i32, %c0_i32_0 : i32, i32
  }
  func.func @transform_8(%arg0: i32) -> (i32, i32) {
    %c0_i32 = arith.constant 0 : i32
    %c0_i32_0 = arith.constant 0 : i32
    %c0_i32_1 = arith.constant 0 : i32
    return %c0_i32, %c0_i32_0 : i32, i32
  }
  func.func @transform_9(%arg0: i32) -> (i32, i32) {
    %c0_i32 = arith.constant 0 : i32
    %c0_i32_0 = arith.constant 0 : i32
    %c0_i32_1 = arith.constant 0 : i32
    return %c0_i32, %c0_i32_0 : i32, i32
  }
  func.func @transform_10(%arg0: i32) -> (i32, i32) {
    %c0_i32 = arith.constant 0 : i32
    %c0_i32_0 = arith.constant 0 : i32
    %c0_i32_1 = arith.constant 0 : i32
    return %c0_i32, %c0_i32_0 : i32, i32
  }
  func.func @transform_11(%arg0: i32) -> (i32, i32) {
    %c0_i32 = arith.constant 0 : i32
    %c0_i32_0 = arith.constant 0 : i32
    %c0_i32_1 = arith.constant 0 : i32
    return %c0_i32, %c0_i32_0 : i32, i32
  }
  func.func @transform_12(%arg0: i32) -> (i32, i32) {
    %c0_i32 = arith.constant 0 : i32
    %c0_i32_0 = arith.constant 0 : i32
    %c0_i32_1 = arith.constant 0 : i32
    return %c0_i32, %c0_i32_0 : i32, i32
  }
  func.func @transform_13(%arg0: i32) -> (i32, i32) {
    %c0_i32 = arith.constant 0 : i32
    %c0_i32_0 = arith.constant 0 : i32
    %c0_i32_1 = arith.constant 0 : i32
    return %c0_i32, %c0_i32_0 : i32, i32
  }
  func.func @transform_14(%arg0: i32) -> (i32, i32) {
    %c0_i32 = arith.constant 0 : i32
    %c0_i32_0 = arith.constant 0 : i32
    %c0_i32_1 = arith.constant 0 : i32
    return %c0_i32, %c0_i32_0 : i32, i32
  }
  func.func @transform_15(%arg0: i32) -> (i32, i32, i32) {
    %c0_i32 = arith.constant 0 : i32
    %c0_i32_0 = arith.constant 0 : i32
    %c0_i32_1 = arith.constant 0 : i32
    return %arg0, %c0_i32, %c0_i32_0 : i32, i32, i32
  }
}

module attributes {stable_mosaic.version = 11 : i64} {
  func.func @kernel(%arg0: i32, %arg1: memref<2x8x32xf32, #tpu.memory_space<vmem>>, %arg2: memref<2x4x32xf32, #tpu.memory_space<vmem>>, %arg3: memref<32x32xf32, #tpu.memory_space<vmem>>, %arg4: memref<1x32xf32, #tpu.memory_space<vmem>>, %arg5: memref<32x32xf32, #tpu.memory_space<vmem>>, %arg6: memref<1x32xf32, #tpu.memory_space<vmem>>, %arg7: memref<32x32xf32, #tpu.memory_space<vmem>>, %arg8: memref<1x32xf32, #tpu.memory_space<vmem>>, %arg9: memref<1x32xf32, #tpu.memory_space<vmem>>, %arg10: memref<1x32xf32, #tpu.memory_space<vmem>>, %arg11: memref<1x1xf32, #tpu.memory_space<vmem>>, %arg12: memref<1x32xf32, #tpu.memory_space<vmem>>, %arg13: memref<1x32xf32, #tpu.memory_space<vmem>>, %arg14: memref<1x1xf32, #tpu.memory_space<vmem>>, %arg15: memref<2x8x32xf32, #tpu.memory_space<vmem>>) attributes {dimension_semantics = [#tpu.dimension_semantics<parallel>], iteration_bounds = array<i64: 1>, scalar_prefetch = 0 : i64, scratch_operands = 0 : i64, tpu.core_type = #tpu.core_type<tc>, window_params = [{transform_indices = @transform_0, window_bounds = array<i64: 2, 8, 32>}, {transform_indices = @transform_1, window_bounds = array<i64: 2, 4, 32>}, {pipeline_mode = #tpu.pipeline_mode<synchronous>, transform_indices = @transform_2, window_bounds = array<i64: 32, 32>}, {pipeline_mode = #tpu.pipeline_mode<synchronous>, transform_indices = @transform_3, window_bounds = array<i64: 1, 32>}, {pipeline_mode = #tpu.pipeline_mode<synchronous>, transform_indices = @transform_4, window_bounds = array<i64: 32, 32>}, {pipeline_mode = #tpu.pipeline_mode<synchronous>, transform_indices = @transform_5, window_bounds = array<i64: 1, 32>}, {pipeline_mode = #tpu.pipeline_mode<synchronous>, transform_indices = @transform_6, window_bounds = array<i64: 32, 32>}, {pipeline_mode = #tpu.pipeline_mode<synchronous>, transform_indices = @transform_7, window_bounds = array<i64: 1, 32>}, {pipeline_mode = #tpu.pipeline_mode<synchronous>, transform_indices = @transform_8, window_bounds = array<i64: 1, 32>}, {pipeline_mode = #tpu.pipeline_mode<synchronous>, transform_indices = @transform_9, window_bounds = array<i64: 1, 32>}, {pipeline_mode = #tpu.pipeline_mode<synchronous>, transform_indices = @transform_10, window_bounds = array<i64: 1, 1>}, {pipeline_mode = #tpu.pipeline_mode<synchronous>, transform_indices = @transform_11, window_bounds = array<i64: 1, 32>}, {pipeline_mode = #tpu.pipeline_mode<synchronous>, transform_indices = @transform_12, window_bounds = array<i64: 1, 32>}, {pipeline_mode = #tpu.pipeline_mode<synchronous>, transform_indices = @transform_13, window_bounds = array<i64: 1, 1>}, {transform_indices = @transform_14, window_bounds = array<i64: 2, 8, 32>}]} {
    %c0 = arith.constant 0 : index
    %c0_0 = arith.constant 0 : index
    %c0_1 = arith.constant 0 : index
    %0 = vector.load %arg1[%c0, %c0_0, %c0_1] : memref<2x8x32xf32, #tpu.memory_space<vmem>>, vector<2x8x32xf32>
    %c0_2 = arith.constant 0 : index
    %c0_3 = arith.constant 0 : index
    %c0_4 = arith.constant 0 : index
    %1 = vector.load %arg2[%c0_2, %c0_3, %c0_4] : memref<2x4x32xf32, #tpu.memory_space<vmem>>, vector<2x4x32xf32>
    %2 = vector.shape_cast %0 : vector<2x8x32xf32> to vector<16x32xf32>
    %3 = vector.shape_cast %1 : vector<2x4x32xf32> to vector<8x32xf32>
    %c0_5 = arith.constant 0 : index
    %c0_6 = arith.constant 0 : index
    %4 = vector.load %arg3[%c0_5, %c0_6] : memref<32x32xf32, #tpu.memory_space<vmem>>, vector<32x32xf32>
    %cst = arith.constant dense<0.000000e+00> : vector<16x32xf32>
    %5 = tpu.matmul %2, %4, %cst {dimension_numbers = #tpu.dot_dimension_numbers<[1], [1], [0], [0], [0, 0, 1, 0], [], []>} : vector<16x32xf32>, vector<32x32xf32>, vector<16x32xf32> -> vector<16x32xf32>
    %c0_7 = arith.constant 0 : index
    %c0_8 = arith.constant 0 : index
    %6 = vector.load %arg4[%c0_7, %c0_8] : memref<1x32xf32, #tpu.memory_space<vmem>>, vector<1x32xf32>
    %7 = vector.broadcast %6 : vector<1x32xf32> to vector<16x32xf32>
    %8 = arith.addf %5, %7 : vector<16x32xf32>
    %9 = vector.shape_cast %8 : vector<16x32xf32> to vector<2x8x32xf32>
    %c0_9 = arith.constant 0 : index
    %c0_10 = arith.constant 0 : index
    %10 = vector.load %arg5[%c0_9, %c0_10] : memref<32x32xf32, #tpu.memory_space<vmem>>, vector<32x32xf32>
    %cst_11 = arith.constant dense<0.000000e+00> : vector<8x32xf32>
    %11 = tpu.matmul %3, %10, %cst_11 {dimension_numbers = #tpu.dot_dimension_numbers<[1], [1], [0], [0], [0, 0, 1, 0], [], []>} : vector<8x32xf32>, vector<32x32xf32>, vector<8x32xf32> -> vector<8x32xf32>
    %c0_12 = arith.constant 0 : index
    %c0_13 = arith.constant 0 : index
    %12 = vector.load %arg6[%c0_12, %c0_13] : memref<1x32xf32, #tpu.memory_space<vmem>>, vector<1x32xf32>
    %13 = vector.broadcast %12 : vector<1x32xf32> to vector<8x32xf32>
    %14 = arith.addf %11, %13 : vector<8x32xf32>
    %15 = vector.shape_cast %14 : vector<8x32xf32> to vector<2x4x32xf32>
    %c0_14 = arith.constant 0 : index
    %c0_15 = arith.constant 0 : index
    %16 = vector.load %arg7[%c0_14, %c0_15] : memref<32x32xf32, #tpu.memory_space<vmem>>, vector<32x32xf32>
    %cst_16 = arith.constant dense<0.000000e+00> : vector<8x32xf32>
    %17 = tpu.matmul %3, %16, %cst_16 {dimension_numbers = #tpu.dot_dimension_numbers<[1], [1], [0], [0], [0, 0, 1, 0], [], []>} : vector<8x32xf32>, vector<32x32xf32>, vector<8x32xf32> -> vector<8x32xf32>
    %c0_17 = arith.constant 0 : index
    %c0_18 = arith.constant 0 : index
    %18 = vector.load %arg8[%c0_17, %c0_18] : memref<1x32xf32, #tpu.memory_space<vmem>>, vector<1x32xf32>
    %19 = vector.broadcast %18 : vector<1x32xf32> to vector<8x32xf32>
    %20 = arith.addf %17, %19 : vector<8x32xf32>
    %21 = vector.shape_cast %20 : vector<8x32xf32> to vector<2x4x32xf32>
    %c0_19 = arith.constant 0 : index
    %c0_20 = arith.constant 0 : index
    %22 = vector.load %arg9[%c0_19, %c0_20] : memref<1x32xf32, #tpu.memory_space<vmem>>, vector<1x32xf32>
    %23 = vector.shape_cast %22 : vector<1x32xf32> to vector<1x1x32xf32>
    %24 = vector.broadcast %23 : vector<1x1x32xf32> to vector<2x8x32xf32>
    %25 = arith.mulf %9, %24 : vector<2x8x32xf32>
    %cst_21 = arith.constant dense<0.000000e+00> : vector<2x8xf32>
    %26 = vector.multi_reduction <add>, %25, %cst_21 [2] : vector<2x8x32xf32> to vector<2x8xf32>
    %27 = vector.shape_cast %26 : vector<2x8xf32> to vector<2x8x1xf32>
    %c0_22 = arith.constant 0 : index
    %c0_23 = arith.constant 0 : index
    %28 = vector.load %arg10[%c0_22, %c0_23] : memref<1x32xf32, #tpu.memory_space<vmem>>, vector<1x32xf32>
    %29 = vector.shape_cast %28 : vector<1x32xf32> to vector<1x1x32xf32>
    %30 = vector.broadcast %29 : vector<1x1x32xf32> to vector<2x4x32xf32>
    %31 = arith.mulf %15, %30 : vector<2x4x32xf32>
    %cst_24 = arith.constant dense<0.000000e+00> : vector<2x4xf32>
    %32 = vector.multi_reduction <add>, %31, %cst_24 [2] : vector<2x4x32xf32> to vector<2x4xf32>
    %33 = vector.shape_cast %32 : vector<2x4xf32> to vector<2x1x4xf32>
    %34 = vector.broadcast %27 : vector<2x8x1xf32> to vector<2x8x4xf32>
    %35 = vector.broadcast %33 : vector<2x1x4xf32> to vector<2x8x4xf32>
    %36 = arith.addf %34, %35 : vector<2x8x4xf32>
    %c0_25 = arith.constant 0 : index
    %c0_26 = arith.constant 0 : index
    %37 = vector.load %arg11[%c0_25, %c0_26] : memref<1x1xf32, #tpu.memory_space<vmem>>, vector<1x1xf32>
    %38 = vector.shape_cast %37 : vector<1x1xf32> to vector<1x1x1xf32>
    %39 = vector.broadcast %38 : vector<1x1x1xf32> to vector<2x8x4xf32>
    %40 = arith.addf %36, %39 : vector<2x8x4xf32>
    %cst_27 = arith.constant dense<0xFF800000> : vector<2x8xf32>
    %41 = vector.multi_reduction <maximumf>, %40, %cst_27 [2] : vector<2x8x4xf32> to vector<2x8xf32>
    %42 = vector.shape_cast %41 : vector<2x8xf32> to vector<2x8x1xf32>
    %43 = vector.broadcast %42 : vector<2x8x1xf32> to vector<2x8x4xf32>
    %44 = arith.subf %40, %43 : vector<2x8x4xf32>
    %45 = math.exp %44 : vector<2x8x4xf32>
    %cst_28 = arith.constant dense<0.000000e+00> : vector<2x8xf32>
    %46 = vector.multi_reduction <add>, %45, %cst_28 [2] : vector<2x8x4xf32> to vector<2x8xf32>
    %47 = vector.shape_cast %46 : vector<2x8xf32> to vector<2x8x1xf32>
    %48 = tpu.reciprocal %47 {approx = true} : vector<2x8x1xf32> -> vector<2x8x1xf32>
    %49 = arith.mulf %47, %48 : vector<2x8x1xf32>
    %cst_29 = arith.constant 2.000000e+00 : f32
    %50 = vector.broadcast %cst_29 : f32 to vector<2x8x1xf32>
    %51 = arith.subf %50, %49 : vector<2x8x1xf32>
    %52 = arith.mulf %48, %51 : vector<2x8x1xf32>
    %53 = vector.broadcast %52 : vector<2x8x1xf32> to vector<2x8x4xf32>
    %54 = arith.mulf %45, %53 : vector<2x8x4xf32>
    "tpu.trace_start"() <{level = 10 : i32, message = "bcl,bld->bcd"}> : () -> ()
    %cst_30 = arith.constant dense<0.000000e+00> : vector<2x8x32xf32>
    %55 = tpu.matmul %54, %21, %cst_30 {dimension_numbers = #tpu.dot_dimension_numbers<[2], [1], [1], [2], [0, 0, 0, 1, 1, 2], [0], [0]>} : vector<2x8x4xf32>, vector<2x4x32xf32>, vector<2x8x32xf32> -> vector<2x8x32xf32>
    "tpu.trace_stop"() : () -> ()
    %56 = arith.addf %55, %0 : vector<2x8x32xf32>
    %c0_31 = arith.constant 0 : index
    %c0_32 = arith.constant 0 : index
    %57 = vector.load %arg12[%c0_31, %c0_32] : memref<1x32xf32, #tpu.memory_space<vmem>>, vector<1x32xf32>
    %58 = vector.shape_cast %57 : vector<1x32xf32> to vector<1x1x32xf32>
    %59 = vector.broadcast %58 : vector<1x1x32xf32> to vector<2x8x32xf32>
    %60 = arith.mulf %56, %59 : vector<2x8x32xf32>
    %cst_33 = arith.constant dense<0.000000e+00> : vector<2x8xf32>
    %61 = vector.multi_reduction <add>, %60, %cst_33 [2] : vector<2x8x32xf32> to vector<2x8xf32>
    %62 = vector.shape_cast %61 : vector<2x8xf32> to vector<2x8x1xf32>
    %c0_34 = arith.constant 0 : index
    %c0_35 = arith.constant 0 : index
    %63 = vector.load %arg13[%c0_34, %c0_35] : memref<1x32xf32, #tpu.memory_space<vmem>>, vector<1x32xf32>
    %64 = vector.shape_cast %63 : vector<1x32xf32> to vector<1x1x32xf32>
    %65 = vector.broadcast %64 : vector<1x1x32xf32> to vector<2x8x32xf32>
    %66 = arith.mulf %0, %65 : vector<2x8x32xf32>
    %cst_36 = arith.constant dense<0.000000e+00> : vector<2x8xf32>
    %67 = vector.multi_reduction <add>, %66, %cst_36 [2] : vector<2x8x32xf32> to vector<2x8xf32>
    %68 = vector.shape_cast %67 : vector<2x8xf32> to vector<2x8x1xf32>
    %69 = arith.addf %62, %68 : vector<2x8x1xf32>
    %c0_37 = arith.constant 0 : index
    %c0_38 = arith.constant 0 : index
    %70 = vector.load %arg14[%c0_37, %c0_38] : memref<1x1xf32, #tpu.memory_space<vmem>>, vector<1x1xf32>
    %71 = vector.shape_cast %70 : vector<1x1xf32> to vector<1x1x1xf32>
    %72 = vector.broadcast %71 : vector<1x1x1xf32> to vector<2x8x1xf32>
    %73 = arith.addf %69, %72 : vector<2x8x1xf32>
    %cst_39 = arith.constant 5.000000e-01 : f32
    %74 = vector.broadcast %cst_39 : f32 to vector<2x8x1xf32>
    %75 = arith.mulf %74, %73 : vector<2x8x1xf32>
    %76 = math.tanh %75 : vector<2x8x1xf32>
    %cst_40 = arith.constant 1.000000e+00 : f32
    %77 = vector.broadcast %cst_40 : f32 to vector<2x8x1xf32>
    %78 = arith.addf %76, %77 : vector<2x8x1xf32>
    %cst_41 = arith.constant 5.000000e-01 : f32
    %79 = vector.broadcast %cst_41 : f32 to vector<2x8x1xf32>
    %80 = arith.mulf %79, %78 : vector<2x8x1xf32>
    %81 = vector.broadcast %80 : vector<2x8x1xf32> to vector<2x8x32xf32>
    %82 = arith.mulf %81, %56 : vector<2x8x32xf32>
    %cst_42 = arith.constant 1.000000e+00 : f32
    %83 = vector.broadcast %cst_42 : f32 to vector<2x8x1xf32>
    %84 = arith.subf %83, %80 : vector<2x8x1xf32>
    %85 = vector.broadcast %84 : vector<2x8x1xf32> to vector<2x8x32xf32>
    %86 = arith.mulf %85, %0 : vector<2x8x32xf32>
    %87 = arith.addf %82, %86 : vector<2x8x32xf32>
    %88 = arith.addf %87, %0 : vector<2x8x32xf32>
    %c0_43 = arith.constant 0 : index
    %c0_44 = arith.constant 0 : index
    %c0_45 = arith.constant 0 : index
    %89 = vector.load %arg15[%c0_43, %c0_44, %c0_45] : memref<2x8x32xf32, #tpu.memory_space<vmem>>, vector<2x8x32xf32>
    tpu.vector_store %arg15[%c0_43, %c0_44, %c0_45], %88 {strides = array<i32>} : memref<2x8x32xf32, #tpu.memory_space<vmem>>, vector<2x8x32xf32>,
    return
  }
  func.func @transform_0(%arg0: i32) -> (i32, i32, i32) {
    %c0_i32 = arith.constant 0 : i32
    %c0_i32_0 = arith.constant 0 : i32
    %c0_i32_1 = arith.constant 0 : i32
    return %arg0, %c0_i32, %c0_i32_0 : i32, i32, i32
  }
  func.func @transform_1(%arg0: i32) -> (i32, i32, i32) {
    %c0_i32 = arith.constant 0 : i32
    %c0_i32_0 = arith.constant 0 : i32
    %c0_i32_1 = arith.constant 0 : i32
    return %arg0, %c0_i32, %c0_i32_0 : i32, i32, i32
  }
  func.func @transform_2(%arg0: i32) -> (i32, i32) {
    %c0_i32 = arith.constant 0 : i32
    %c0_i32_0 = arith.constant 0 : i32
    %c0_i32_1 = arith.constant 0 : i32
    return %c0_i32, %c0_i32_0 : i32, i32
  }
  func.func @transform_3(%arg0: i32) -> (i32, i32) {
    %c0_i32 = arith.constant 0 : i32
    %c0_i32_0 = arith.constant 0 : i32
    %c0_i32_1 = arith.constant 0 : i32
    return %c0_i32, %c0_i32_0 : i32, i32
  }
  func.func @transform_4(%arg0: i32) -> (i32, i32) {
    %c0_i32 = arith.constant 0 : i32
    %c0_i32_0 = arith.constant 0 : i32
    %c0_i32_1 = arith.constant 0 : i32
    return %c0_i32, %c0_i32_0 : i32, i32
  }
  func.func @transform_5(%arg0: i32) -> (i32, i32) {
    %c0_i32 = arith.constant 0 : i32
    %c0_i32_0 = arith.constant 0 : i32
    %c0_i32_1 = arith.constant 0 : i32
    return %c0_i32, %c0_i32_0 : i32, i32
  }
  func.func @transform_6(%arg0: i32) -> (i32, i32) {
    %c0_i32 = arith.constant 0 : i32
    %c0_i32_0 = arith.constant 0 : i32
    %c0_i32_1 = arith.constant 0 : i32
    return %c0_i32, %c0_i32_0 : i32, i32
  }
  func.func @transform_7(%arg0: i32) -> (i32, i32) {
    %c0_i32 = arith.constant 0 : i32
    %c0_i32_0 = arith.constant 0 : i32
    %c0_i32_1 = arith.constant 0 : i32
    return %c0_i32, %c0_i32_0 : i32, i32
  }
  func.func @transform_8(%arg0: i32) -> (i32, i32) {
    %c0_i32 = arith.constant 0 : i32
    %c0_i32_0 = arith.constant 0 : i32
    %c0_i32_1 = arith.constant 0 : i32
    return %c0_i32, %c0_i32_0 : i32, i32
  }
  func.func @transform_9(%arg0: i32) -> (i32, i32) {
    %c0_i32 = arith.constant 0 : i32
    %c0_i32_0 = arith.constant 0 : i32
    %c0_i32_1 = arith.constant 0 : i32
    return %c0_i32, %c0_i32_0 : i32, i32
  }
  func.func @transform_10(%arg0: i32) -> (i32, i32) {
    %c0_i32 = arith.constant 0 : i32
    %c0_i32_0 = arith.constant 0 : i32
    %c0_i32_1 = arith.constant 0 : i32
    return %c0_i32, %c0_i32_0 : i32, i32
  }
  func.func @transform_11(%arg0: i32) -> (i32, i32) {
    %c0_i32 = arith.constant 0 : i32
    %c0_i32_0 = arith.constant 0 : i32
    %c0_i32_1 = arith.constant 0 : i32
    return %c0_i32, %c0_i32_0 : i32, i32
  }
  func.func @transform_12(%arg0: i32) -> (i32, i32) {
    %c0_i32 = arith.constant 0 : i32
    %c0_i32_0 = arith.constant 0 : i32
    %c0_i32_1 = arith.constant 0 : i32
    return %c0_i32, %c0_i32_0 : i32, i32
  }
  func.func @transform_13(%arg0: i32) -> (i32, i32) {
    %c0_i32 = arith.constant 0 : i32
    %c0_i32_0 = arith.constant 0 : i32
    %c0_i32_1 = arith.constant 0 : i32
    return %c0_i32, %c0_i32_0 : i32, i32
  }
  func.func @transform_14(%arg0: i32) -> (i32, i32, i32) {
    %c0_i32 = arith.constant 0 : i32
    %c0_i32_0 = arith.constant 0 : i32
    %c0_i32_1 = arith.constant 0 : i32
    return %arg0, %c0_i32, %c0_i32_0 : i32, i32, i32
  }
}

module attributes {stable_mosaic.version = 11 : i64} {
  func.func @kernel(%arg0: i32, %arg1: memref<2x8x32xf32, #tpu.memory_space<vmem>>, %arg2: memref<1x4x32xf32, #tpu.memory_space<vmem>>, %arg3: memref<32x32xf32, #tpu.memory_space<vmem>>, %arg4: memref<1x32xf32, #tpu.memory_space<vmem>>, %arg5: memref<32x32xf32, #tpu.memory_space<vmem>>, %arg6: memref<1x32xf32, #tpu.memory_space<vmem>>, %arg7: memref<32x32xf32, #tpu.memory_space<vmem>>, %arg8: memref<1x32xf32, #tpu.memory_space<vmem>>, %arg9: memref<1x32xf32, #tpu.memory_space<vmem>>, %arg10: memref<1x32xf32, #tpu.memory_space<vmem>>, %arg11: memref<1x1xf32, #tpu.memory_space<vmem>>, %arg12: memref<1x32xf32, #tpu.memory_space<vmem>>, %arg13: memref<1x32xf32, #tpu.memory_space<vmem>>, %arg14: memref<1x1xf32, #tpu.memory_space<vmem>>, %arg15: memref<2x8x32xf32, #tpu.memory_space<vmem>>) attributes {dimension_semantics = [#tpu.dimension_semantics<parallel>], iteration_bounds = array<i64: 1>, scalar_prefetch = 0 : i64, scratch_operands = 0 : i64, tpu.core_type = #tpu.core_type<tc>, window_params = [{transform_indices = @transform_0, window_bounds = array<i64: 2, 8, 32>}, {pipeline_mode = #tpu.pipeline_mode<synchronous>, transform_indices = @transform_1, window_bounds = array<i64: 1, 4, 32>}, {pipeline_mode = #tpu.pipeline_mode<synchronous>, transform_indices = @transform_2, window_bounds = array<i64: 32, 32>}, {pipeline_mode = #tpu.pipeline_mode<synchronous>, transform_indices = @transform_3, window_bounds = array<i64: 1, 32>}, {pipeline_mode = #tpu.pipeline_mode<synchronous>, transform_indices = @transform_4, window_bounds = array<i64: 32, 32>}, {pipeline_mode = #tpu.pipeline_mode<synchronous>, transform_indices = @transform_5, window_bounds = array<i64: 1, 32>}, {pipeline_mode = #tpu.pipeline_mode<synchronous>, transform_indices = @transform_6, window_bounds = array<i64: 32, 32>}, {pipeline_mode = #tpu.pipeline_mode<synchronous>, transform_indices = @transform_7, window_bounds = array<i64: 1, 32>}, {pipeline_mode = #tpu.pipeline_mode<synchronous>, transform_indices = @transform_8, window_bounds = array<i64: 1, 32>}, {pipeline_mode = #tpu.pipeline_mode<synchronous>, transform_indices = @transform_9, window_bounds = array<i64: 1, 32>}, {pipeline_mode = #tpu.pipeline_mode<synchronous>, transform_indices = @transform_10, window_bounds = array<i64: 1, 1>}, {pipeline_mode = #tpu.pipeline_mode<synchronous>, transform_indices = @transform_11, window_bounds = array<i64: 1, 32>}, {pipeline_mode = #tpu.pipeline_mode<synchronous>, transform_indices = @transform_12, window_bounds = array<i64: 1, 32>}, {pipeline_mode = #tpu.pipeline_mode<synchronous>, transform_indices = @transform_13, window_bounds = array<i64: 1, 1>}, {transform_indices = @transform_14, window_bounds = array<i64: 2, 8, 32>}]} {
    %c0 = arith.constant 0 : index
    %c0_0 = arith.constant 0 : index
    %c0_1 = arith.constant 0 : index
    %0 = vector.load %arg1[%c0, %c0_0, %c0_1] : memref<2x8x32xf32, #tpu.memory_space<vmem>>, vector<2x8x32xf32>
    %c0_2 = arith.constant 0 : index
    %c0_3 = arith.constant 0 : index
    %c0_4 = arith.constant 0 : index
    %1 = vector.load %arg2[%c0_2, %c0_3, %c0_4] : memref<1x4x32xf32, #tpu.memory_space<vmem>>, vector<1x4x32xf32>
    %2 = vector.shape_cast %0 : vector<2x8x32xf32> to vector<16x32xf32>
    %3 = vector.shape_cast %1 : vector<1x4x32xf32> to vector<4x32xf32>
    %c0_5 = arith.constant 0 : index
    %c0_6 = arith.constant 0 : index
    %4 = vector.load %arg3[%c0_5, %c0_6] : memref<32x32xf32, #tpu.memory_space<vmem>>, vector<32x32xf32>
    %cst = arith.constant dense<0.000000e+00> : vector<16x32xf32>
    %5 = tpu.matmul %2, %4, %cst {dimension_numbers = #tpu.dot_dimension_numbers<[1], [1], [0], [0], [0, 0, 1, 0], [], []>} : vector<16x32xf32>, vector<32x32xf32>, vector<16x32xf32> -> vector<16x32xf32>
    %c0_7 = arith.constant 0 : index
    %c0_8 = arith.constant 0 : index
    %6 = vector.load %arg4[%c0_7, %c0_8] : memref<1x32xf32, #tpu.memory_space<vmem>>, vector<1x32xf32>
    %7 = vector.broadcast %6 : vector<1x32xf32> to vector<16x32xf32>
    %8 = arith.addf %5, %7 : vector<16x32xf32>
    %9 = vector.shape_cast %8 : vector<16x32xf32> to vector<2x8x32xf32>
    %c0_9 = arith.constant 0 : index
    %c0_10 = arith.constant 0 : index
    %10 = vector.load %arg5[%c0_9, %c0_10] : memref<32x32xf32, #tpu.memory_space<vmem>>, vector<32x32xf32>
    %cst_11 = arith.constant dense<0.000000e+00> : vector<4x32xf32>
    %11 = tpu.matmul %3, %10, %cst_11 {dimension_numbers = #tpu.dot_dimension_numbers<[1], [1], [0], [0], [0, 0, 1, 0], [], []>} : vector<4x32xf32>, vector<32x32xf32>, vector<4x32xf32> -> vector<4x32xf32>
    %c0_12 = arith.constant 0 : index
    %c0_13 = arith.constant 0 : index
    %12 = vector.load %arg6[%c0_12, %c0_13] : memref<1x32xf32, #tpu.memory_space<vmem>>, vector<1x32xf32>
    %13 = vector.broadcast %12 : vector<1x32xf32> to vector<4x32xf32>
    %14 = arith.addf %11, %13 : vector<4x32xf32>
    %15 = vector.shape_cast %14 : vector<4x32xf32> to vector<1x4x32xf32>
    %c0_14 = arith.constant 0 : index
    %c0_15 = arith.constant 0 : index
    %16 = vector.load %arg7[%c0_14, %c0_15] : memref<32x32xf32, #tpu.memory_space<vmem>>, vector<32x32xf32>
    %cst_16 = arith.constant dense<0.000000e+00> : vector<4x32xf32>
    %17 = tpu.matmul %3, %16, %cst_16 {dimension_numbers = #tpu.dot_dimension_numbers<[1], [1], [0], [0], [0, 0, 1, 0], [], []>} : vector<4x32xf32>, vector<32x32xf32>, vector<4x32xf32> -> vector<4x32xf32>
    %c0_17 = arith.constant 0 : index
    %c0_18 = arith.constant 0 : index
    %18 = vector.load %arg8[%c0_17, %c0_18] : memref<1x32xf32, #tpu.memory_space<vmem>>, vector<1x32xf32>
    %19 = vector.broadcast %18 : vector<1x32xf32> to vector<4x32xf32>
    %20 = arith.addf %17, %19 : vector<4x32xf32>
    %21 = vector.shape_cast %20 : vector<4x32xf32> to vector<1x4x32xf32>
    %c0_19 = arith.constant 0 : index
    %c0_20 = arith.constant 0 : index
    %22 = vector.load %arg9[%c0_19, %c0_20] : memref<1x32xf32, #tpu.memory_space<vmem>>, vector<1x32xf32>
    %23 = vector.shape_cast %22 : vector<1x32xf32> to vector<1x1x32xf32>
    %24 = vector.broadcast %23 : vector<1x1x32xf32> to vector<2x8x32xf32>
    %25 = arith.mulf %9, %24 : vector<2x8x32xf32>
    %cst_21 = arith.constant dense<0.000000e+00> : vector<2x8xf32>
    %26 = vector.multi_reduction <add>, %25, %cst_21 [2] : vector<2x8x32xf32> to vector<2x8xf32>
    %27 = vector.shape_cast %26 : vector<2x8xf32> to vector<2x8x1xf32>
    %c0_22 = arith.constant 0 : index
    %c0_23 = arith.constant 0 : index
    %28 = vector.load %arg10[%c0_22, %c0_23] : memref<1x32xf32, #tpu.memory_space<vmem>>, vector<1x32xf32>
    %29 = vector.shape_cast %28 : vector<1x32xf32> to vector<1x1x32xf32>
    %30 = vector.broadcast %29 : vector<1x1x32xf32> to vector<1x4x32xf32>
    %31 = arith.mulf %15, %30 : vector<1x4x32xf32>
    %cst_24 = arith.constant dense<0.000000e+00> : vector<1x4xf32>
    %32 = vector.multi_reduction <add>, %31, %cst_24 [2] : vector<1x4x32xf32> to vector<1x4xf32>
    %33 = vector.shape_cast %32 : vector<1x4xf32> to vector<1x1x4xf32>
    %34 = vector.broadcast %27 : vector<2x8x1xf32> to vector<2x8x4xf32>
    %35 = vector.broadcast %33 : vector<1x1x4xf32> to vector<2x8x4xf32>
    %36 = arith.addf %34, %35 : vector<2x8x4xf32>
    %c0_25 = arith.constant 0 : index
    %c0_26 = arith.constant 0 : index
    %37 = vector.load %arg11[%c0_25, %c0_26] : memref<1x1xf32, #tpu.memory_space<vmem>>, vector<1x1xf32>
    %38 = vector.shape_cast %37 : vector<1x1xf32> to vector<1x1x1xf32>
    %39 = vector.broadcast %38 : vector<1x1x1xf32> to vector<2x8x4xf32>
    %40 = arith.addf %36, %39 : vector<2x8x4xf32>
    %cst_27 = arith.constant dense<0xFF800000> : vector<2x8xf32>
    %41 = vector.multi_reduction <maximumf>, %40, %cst_27 [2] : vector<2x8x4xf32> to vector<2x8xf32>
    %42 = vector.shape_cast %41 : vector<2x8xf32> to vector<2x8x1xf32>
    %43 = vector.broadcast %42 : vector<2x8x1xf32> to vector<2x8x4xf32>
    %44 = arith.subf %40, %43 : vector<2x8x4xf32>
    %45 = math.exp %44 : vector<2x8x4xf32>
    %cst_28 = arith.constant dense<0.000000e+00> : vector<2x8xf32>
    %46 = vector.multi_reduction <add>, %45, %cst_28 [2] : vector<2x8x4xf32> to vector<2x8xf32>
    %47 = vector.shape_cast %46 : vector<2x8xf32> to vector<2x8x1xf32>
    %48 = tpu.reciprocal %47 {approx = true} : vector<2x8x1xf32> -> vector<2x8x1xf32>
    %49 = arith.mulf %47, %48 : vector<2x8x1xf32>
    %cst_29 = arith.constant 2.000000e+00 : f32
    %50 = vector.broadcast %cst_29 : f32 to vector<2x8x1xf32>
    %51 = arith.subf %50, %49 : vector<2x8x1xf32>
    %52 = arith.mulf %48, %51 : vector<2x8x1xf32>
    %53 = vector.broadcast %52 : vector<2x8x1xf32> to vector<2x8x4xf32>
    %54 = arith.mulf %45, %53 : vector<2x8x4xf32>
    %55 = vector.shape_cast %54 : vector<2x8x4xf32> to vector<16x4xf32>
    %56 = vector.shape_cast %21 : vector<1x4x32xf32> to vector<4x32xf32>
    %cst_30 = arith.constant dense<0.000000e+00> : vector<16x32xf32>
    %57 = tpu.matmul %55, %56, %cst_30 {dimension_numbers = #tpu.dot_dimension_numbers<[1], [0], [0], [1], [0, 0, 1, 1], [], []>} : vector<16x4xf32>, vector<4x32xf32>, vector<16x32xf32> -> vector<16x32xf32>
    %58 = vector.shape_cast %57 : vector<16x32xf32> to vector<2x8x32xf32>
    %59 = arith.addf %58, %0 : vector<2x8x32xf32>
    %c0_31 = arith.constant 0 : index
    %c0_32 = arith.constant 0 : index
    %60 = vector.load %arg12[%c0_31, %c0_32] : memref<1x32xf32, #tpu.memory_space<vmem>>, vector<1x32xf32>
    %61 = vector.shape_cast %60 : vector<1x32xf32> to vector<1x1x32xf32>
    %62 = vector.broadcast %61 : vector<1x1x32xf32> to vector<2x8x32xf32>
    %63 = arith.mulf %59, %62 : vector<2x8x32xf32>
    %cst_33 = arith.constant dense<0.000000e+00> : vector<2x8xf32>
    %64 = vector.multi_reduction <add>, %63, %cst_33 [2] : vector<2x8x32xf32> to vector<2x8xf32>
    %65 = vector.shape_cast %64 : vector<2x8xf32> to vector<2x8x1xf32>
    %c0_34 = arith.constant 0 : index
    %c0_35 = arith.constant 0 : index
    %66 = vector.load %arg13[%c0_34, %c0_35] : memref<1x32xf32, #tpu.memory_space<vmem>>, vector<1x32xf32>
    %67 = vector.shape_cast %66 : vector<1x32xf32> to vector<1x1x32xf32>
    %68 = vector.broadcast %67 : vector<1x1x32xf32> to vector<2x8x32xf32>
    %69 = arith.mulf %0, %68 : vector<2x8x32xf32>
    %cst_36 = arith.constant dense<0.000000e+00> : vector<2x8xf32>
    %70 = vector.multi_reduction <add>, %69, %cst_36 [2] : vector<2x8x32xf32> to vector<2x8xf32>
    %71 = vector.shape_cast %70 : vector<2x8xf32> to vector<2x8x1xf32>
    %72 = arith.addf %65, %71 : vector<2x8x1xf32>
    %c0_37 = arith.constant 0 : index
    %c0_38 = arith.constant 0 : index
    %73 = vector.load %arg14[%c0_37, %c0_38] : memref<1x1xf32, #tpu.memory_space<vmem>>, vector<1x1xf32>
    %74 = vector.shape_cast %73 : vector<1x1xf32> to vector<1x1x1xf32>
    %75 = vector.broadcast %74 : vector<1x1x1xf32> to vector<2x8x1xf32>
    %76 = arith.addf %72, %75 : vector<2x8x1xf32>
    %cst_39 = arith.constant 5.000000e-01 : f32
    %77 = vector.broadcast %cst_39 : f32 to vector<2x8x1xf32>
    %78 = arith.mulf %77, %76 : vector<2x8x1xf32>
    %79 = math.tanh %78 : vector<2x8x1xf32>
    %cst_40 = arith.constant 1.000000e+00 : f32
    %80 = vector.broadcast %cst_40 : f32 to vector<2x8x1xf32>
    %81 = arith.addf %79, %80 : vector<2x8x1xf32>
    %cst_41 = arith.constant 5.000000e-01 : f32
    %82 = vector.broadcast %cst_41 : f32 to vector<2x8x1xf32>
    %83 = arith.mulf %82, %81 : vector<2x8x1xf32>
    %84 = vector.broadcast %83 : vector<2x8x1xf32> to vector<2x8x32xf32>
    %85 = arith.mulf %84, %59 : vector<2x8x32xf32>
    %cst_42 = arith.constant 1.000000e+00 : f32
    %86 = vector.broadcast %cst_42 : f32 to vector<2x8x1xf32>
    %87 = arith.subf %86, %83 : vector<2x8x1xf32>
    %88 = vector.broadcast %87 : vector<2x8x1xf32> to vector<2x8x32xf32>
    %89 = arith.mulf %88, %0 : vector<2x8x32xf32>
    %90 = arith.addf %85, %89 : vector<2x8x32xf32>
    %91 = arith.addf %90, %0 : vector<2x8x32xf32>
    %c0_43 = arith.constant 0 : index
    %c0_44 = arith.constant 0 : index
    %c0_45 = arith.constant 0 : index
    %92 = vector.load %arg15[%c0_43, %c0_44, %c0_45] : memref<2x8x32xf32, #tpu.memory_space<vmem>>, vector<2x8x32xf32>
    tpu.vector_store %arg15[%c0_43, %c0_44, %c0_45], %91 {strides = array<i32>} : memref<2x8x32xf32, #tpu.memory_space<vmem>>, vector<2x8x32xf32>,
    return
  }
  func.func @transform_0(%arg0: i32) -> (i32, i32, i32) {
    %c0_i32 = arith.constant 0 : i32
    %c0_i32_0 = arith.constant 0 : i32
    %c0_i32_1 = arith.constant 0 : i32
    return %arg0, %c0_i32, %c0_i32_0 : i32, i32, i32
  }
  func.func @transform_1(%arg0: i32) -> (i32, i32, i32) {
    %c0_i32 = arith.constant 0 : i32
    %c0_i32_0 = arith.constant 0 : i32
    %c0_i32_1 = arith.constant 0 : i32
    %c0_i32_2 = arith.constant 0 : i32
    return %c0_i32, %c0_i32_0, %c0_i32_1 : i32, i32, i32
  }
  func.func @transform_2(%arg0: i32) -> (i32, i32) {
    %c0_i32 = arith.constant 0 : i32
    %c0_i32_0 = arith.constant 0 : i32
    %c0_i32_1 = arith.constant 0 : i32
    return %c0_i32, %c0_i32_0 : i32, i32
  }
  func.func @transform_3(%arg0: i32) -> (i32, i32) {
    %c0_i32 = arith.constant 0 : i32
    %c0_i32_0 = arith.constant 0 : i32
    %c0_i32_1 = arith.constant 0 : i32
    return %c0_i32, %c0_i32_0 : i32, i32
  }
  func.func @transform_4(%arg0: i32) -> (i32, i32) {
    %c0_i32 = arith.constant 0 : i32
    %c0_i32_0 = arith.constant 0 : i32
    %c0_i32_1 = arith.constant 0 : i32
    return %c0_i32, %c0_i32_0 : i32, i32
  }
  func.func @transform_5(%arg0: i32) -> (i32, i32) {
    %c0_i32 = arith.constant 0 : i32
    %c0_i32_0 = arith.constant 0 : i32
    %c0_i32_1 = arith.constant 0 : i32
    return %c0_i32, %c0_i32_0 : i32, i32
  }
  func.func @transform_6(%arg0: i32) -> (i32, i32) {
    %c0_i32 = arith.constant 0 : i32
    %c0_i32_0 = arith.constant 0 : i32
    %c0_i32_1 = arith.constant 0 : i32
    return %c0_i32, %c0_i32_0 : i32, i32
  }
  func.func @transform_7(%arg0: i32) -> (i32, i32) {
    %c0_i32 = arith.constant 0 : i32
    %c0_i32_0 = arith.constant 0 : i32
    %c0_i32_1 = arith.constant 0 : i32
    return %c0_i32, %c0_i32_0 : i32, i32
  }
  func.func @transform_8(%arg0: i32) -> (i32, i32) {
    %c0_i32 = arith.constant 0 : i32
    %c0_i32_0 = arith.constant 0 : i32
    %c0_i32_1 = arith.constant 0 : i32
    return %c0_i32, %c0_i32_0 : i32, i32
  }
  func.func @transform_9(%arg0: i32) -> (i32, i32) {
    %c0_i32 = arith.constant 0 : i32
    %c0_i32_0 = arith.constant 0 : i32
    %c0_i32_1 = arith.constant 0 : i32
    return %c0_i32, %c0_i32_0 : i32, i32
  }
  func.func @transform_10(%arg0: i32) -> (i32, i32) {
    %c0_i32 = arith.constant 0 : i32
    %c0_i32_0 = arith.constant 0 : i32
    %c0_i32_1 = arith.constant 0 : i32
    return %c0_i32, %c0_i32_0 : i32, i32
  }
  func.func @transform_11(%arg0: i32) -> (i32, i32) {
    %c0_i32 = arith.constant 0 : i32
    %c0_i32_0 = arith.constant 0 : i32
    %c0_i32_1 = arith.constant 0 : i32
    return %c0_i32, %c0_i32_0 : i32, i32
  }
  func.func @transform_12(%arg0: i32) -> (i32, i32) {
    %c0_i32 = arith.constant 0 : i32
    %c0_i32_0 = arith.constant 0 : i32
    %c0_i32_1 = arith.constant 0 : i32
    return %c0_i32, %c0_i32_0 : i32, i32
  }
  func.func @transform_13(%arg0: i32) -> (i32, i32) {
    %c0_i32 = arith.constant 0 : i32
    %c0_i32_0 = arith.constant 0 : i32
    %c0_i32_1 = arith.constant 0 : i32
    return %c0_i32, %c0_i32_0 : i32, i32
  }
  func.func @transform_14(%arg0: i32) -> (i32, i32, i32) {
    %c0_i32 = arith.constant 0 : i32
    %c0_i32_0 = arith.constant 0 : i32
    %c0_i32_1 = arith.constant 0 : i32
    return %arg0, %c0_i32, %c0_i32_0 : i32, i32, i32
  }
}

module attributes {stable_mosaic.version = 11 : i64} {
  func.func @kernel(%arg0: i32, %arg1: memref<2x4x32xf32, #tpu.memory_space<vmem>>, %arg2: memref<2x8x32xf32, #tpu.memory_space<vmem>>, %arg3: memref<2x1x8xf32, #tpu.memory_space<vmem>>, %arg4: memref<32x32xf32, #tpu.memory_space<vmem>>, %arg5: memref<1x32xf32, #tpu.memory_space<vmem>>, %arg6: memref<32x32xf32, #tpu.memory_space<vmem>>, %arg7: memref<1x32xf32, #tpu.memory_space<vmem>>, %arg8: memref<32x32xf32, #tpu.memory_space<vmem>>, %arg9: memref<1x32xf32, #tpu.memory_space<vmem>>, %arg10: memref<1x32xf32, #tpu.memory_space<vmem>>, %arg11: memref<1x32xf32, #tpu.memory_space<vmem>>, %arg12: memref<1x1xf32, #tpu.memory_space<vmem>>, %arg13: memref<1x32xf32, #tpu.memory_space<vmem>>, %arg14: memref<1x32xf32, #tpu.memory_space<vmem>>, %arg15: memref<1x1xf32, #tpu.memory_space<vmem>>, %arg16: memref<2x4x32xf32, #tpu.memory_space<vmem>>) attributes {dimension_semantics = [#tpu.dimension_semantics<parallel>], iteration_bounds = array<i64: 1>, scalar_prefetch = 0 : i64, scratch_operands = 0 : i64, tpu.core_type = #tpu.core_type<tc>, window_params = [{transform_indices = @transform_0, window_bounds = array<i64: 2, 4, 32>}, {transform_indices = @transform_1, window_bounds = array<i64: 2, 8, 32>}, {transform_indices = @transform_2, window_bounds = array<i64: 2, 1, 8>}, {pipeline_mode = #tpu.pipeline_mode<synchronous>, transform_indices = @transform_3, window_bounds = array<i64: 32, 32>}, {pipeline_mode = #tpu.pipeline_mode<synchronous>, transform_indices = @transform_4, window_bounds = array<i64: 1, 32>}, {pipeline_mode = #tpu.pipeline_mode<synchronous>, transform_indices = @transform_5, window_bounds = array<i64: 32, 32>}, {pipeline_mode = #tpu.pipeline_mode<synchronous>, transform_indices = @transform_6, window_bounds = array<i64: 1, 32>}, {pipeline_mode = #tpu.pipeline_mode<synchronous>, transform_indices = @transform_7, window_bounds = array<i64: 32, 32>}, {pipeline_mode = #tpu.pipeline_mode<synchronous>, transform_indices = @transform_8, window_bounds = array<i64: 1, 32>}, {pipeline_mode = #tpu.pipeline_mode<synchronous>, transform_indices = @transform_9, window_bounds = array<i64: 1, 32>}, {pipeline_mode = #tpu.pipeline_mode<synchronous>, transform_indices = @transform_10, window_bounds = array<i64: 1, 32>}, {pipeline_mode = #tpu.pipeline_mode<synchronous>, transform_indices = @transform_11, window_bounds = array<i64: 1, 1>}, {pipeline_mode = #tpu.pipeline_mode<synchronous>, transform_indices = @transform_12, window_bounds = array<i64: 1, 32>}, {pipeline_mode = #tpu.pipeline_mode<synchronous>, transform_indices = @transform_13, window_bounds = array<i64: 1, 32>}, {pipeline_mode = #tpu.pipeline_mode<synchronous>, transform_indices = @transform_14, window_bounds = array<i64: 1, 1>}, {transform_indices = @transform_15, window_bounds = array<i64: 2, 4, 32>}]} {
    %c0 = arith.constant 0 : index
    %c0_0 = arith.constant 0 : index
    %c0_1 = arith.constant 0 : index
    %0 = vector.load %arg1[%c0, %c0_0, %c0_1] : memref<2x4x32xf32, #tpu.memory_space<vmem>>, vector<2x4x32xf32>
    %c0_2 = arith.constant 0 : index
    %c0_3 = arith.constant 0 : index
    %c0_4 = arith.constant 0 : index
    %1 = vector.load %arg2[%c0_2, %c0_3, %c0_4] : memref<2x8x32xf32, #tpu.memory_space<vmem>>, vector<2x8x32xf32>
    %2 = vector.shape_cast %0 : vector<2x4x32xf32> to vector<8x32xf32>
    %3 = vector.shape_cast %1 : vector<2x8x32xf32> to vector<16x32xf32>
    %c0_5 = arith.constant 0 : index
    %c0_6 = arith.constant 0 : index
    %4 = vector.load %arg4[%c0_5, %c0_6] : memref<32x32xf32, #tpu.memory_space<vmem>>, vector<32x32xf32>
    %cst = arith.constant dense<0.000000e+00> : vector<8x32xf32>
    %5 = tpu.matmul %2, %4, %cst {dimension_numbers = #tpu.dot_dimension_numbers<[1], [1], [0], [0], [0, 0, 1, 0], [], []>} : vector<8x32xf32>, vector<32x32xf32>, vector<8x32xf32> -> vector<8x32xf32>
    %c0_7 = arith.constant 0 : index
    %c0_8 = arith.constant 0 : index
    %6 = vector.load %arg5[%c0_7, %c0_8] : memref<1x32xf32, #tpu.memory_space<vmem>>, vector<1x32xf32>
    %7 = vector.broadcast %6 : vector<1x32xf32> to vector<8x32xf32>
    %8 = arith.addf %5, %7 : vector<8x32xf32>
    %9 = vector.shape_cast %8 : vector<8x32xf32> to vector<2x4x32xf32>
    %c0_9 = arith.constant 0 : index
    %c0_10 = arith.constant 0 : index
    %10 = vector.load %arg6[%c0_9, %c0_10] : memref<32x32xf32, #tpu.memory_space<vmem>>, vector<32x32xf32>
    %cst_11 = arith.constant dense<0.000000e+00> : vector<16x32xf32>
    %11 = tpu.matmul %3, %10, %cst_11 {dimension_numbers = #tpu.dot_dimension_numbers<[1], [1], [0], [0], [0, 0, 1, 0], [], []>} : vector<16x32xf32>, vector<32x32xf32>, vector<16x32xf32> -> vector<16x32xf32>
    %c0_12 = arith.constant 0 : index
    %c0_13 = arith.constant 0 : index
    %12 = vector.load %arg7[%c0_12, %c0_13] : memref<1x32xf32, #tpu.memory_space<vmem>>, vector<1x32xf32>
    %13 = vector.broadcast %12 : vector<1x32xf32> to vector<16x32xf32>
    %14 = arith.addf %11, %13 : vector<16x32xf32>
    %15 = vector.shape_cast %14 : vector<16x32xf32> to vector<2x8x32xf32>
    %c0_14 = arith.constant 0 : index
    %c0_15 = arith.constant 0 : index
    %16 = vector.load %arg8[%c0_14, %c0_15] : memref<32x32xf32, #tpu.memory_space<vmem>>, vector<32x32xf32>
    %cst_16 = arith.constant dense<0.000000e+00> : vector<16x32xf32>
    %17 = tpu.matmul %3, %16, %cst_16 {dimension_numbers = #tpu.dot_dimension_numbers<[1], [1], [0], [0], [0, 0, 1, 0], [], []>} : vector<16x32xf32>, vector<32x32xf32>, vector<16x32xf32> -> vector<16x32xf32>
    %c0_17 = arith.constant 0 : index
    %c0_18 = arith.constant 0 : index
    %18 = vector.load %arg9[%c0_17, %c0_18] : memref<1x32xf32, #tpu.memory_space<vmem>>, vector<1x32xf32>
    %19 = vector.broadcast %18 : vector<1x32xf32> to vector<16x32xf32>
    %20 = arith.addf %17, %19 : vector<16x32xf32>
    %21 = vector.shape_cast %20 : vector<16x32xf32> to vector<2x8x32xf32>
    %c0_19 = arith.constant 0 : index
    %c0_20 = arith.constant 0 : index
    %22 = vector.load %arg10[%c0_19, %c0_20] : memref<1x32xf32, #tpu.memory_space<vmem>>, vector<1x32xf32>
    %23 = vector.shape_cast %22 : vector<1x32xf32> to vector<1x1x32xf32>
    %24 = vector.broadcast %23 : vector<1x1x32xf32> to vector<2x4x32xf32>
    %25 = arith.mulf %9, %24 : vector<2x4x32xf32>
    %cst_21 = arith.constant dense<0.000000e+00> : vector<2x4xf32>
    %26 = vector.multi_reduction <add>, %25, %cst_21 [2] : vector<2x4x32xf32> to vector<2x4xf32>
    %27 = vector.shape_cast %26 : vector<2x4xf32> to vector<2x4x1xf32>
    %c0_22 = arith.constant 0 : index
    %c0_23 = arith.constant 0 : index
    %28 = vector.load %arg11[%c0_22, %c0_23] : memref<1x32xf32, #tpu.memory_space<vmem>>, vector<1x32xf32>
    %29 = vector.shape_cast %28 : vector<1x32xf32> to vector<1x1x32xf32>
    %30 = vector.broadcast %29 : vector<1x1x32xf32> to vector<2x8x32xf32>
    %31 = arith.mulf %15, %30 : vector<2x8x32xf32>
    %cst_24 = arith.constant dense<0.000000e+00> : vector<2x8xf32>
    %32 = vector.multi_reduction <add>, %31, %cst_24 [2] : vector<2x8x32xf32> to vector<2x8xf32>
    %33 = vector.shape_cast %32 : vector<2x8xf32> to vector<2x1x8xf32>
    %34 = vector.broadcast %27 : vector<2x4x1xf32> to vector<2x4x8xf32>
    %35 = vector.broadcast %33 : vector<2x1x8xf32> to vector<2x4x8xf32>
    %36 = arith.addf %34, %35 : vector<2x4x8xf32>
    %c0_25 = arith.constant 0 : index
    %c0_26 = arith.constant 0 : index
    %37 = vector.load %arg12[%c0_25, %c0_26] : memref<1x1xf32, #tpu.memory_space<vmem>>, vector<1x1xf32>
    %38 = vector.shape_cast %37 : vector<1x1xf32> to vector<1x1x1xf32>
    %39 = vector.broadcast %38 : vector<1x1x1xf32> to vector<2x4x8xf32>
    %40 = arith.addf %36, %39 : vector<2x4x8xf32>
    %c0_27 = arith.constant 0 : index
    %c0_28 = arith.constant 0 : index
    %c0_29 = arith.constant 0 : index
    %41 = vector.load %arg3[%c0_27, %c0_28, %c0_29] : memref<2x1x8xf32, #tpu.memory_space<vmem>>, vector<2x1x8xf32>
    %cst_30 = arith.constant 5.000000e-01 : f32
    %42 = vector.broadcast %cst_30 : f32 to vector<2x1x8xf32>
    %43 = arith.cmpf olt, %41, %42 : vector<2x1x8xf32>
    %cst_31 = arith.constant -1.000000e+09 : f32
    %44 = vector.shape_cast %43 : vector<2x1x8xi1> to vector<2x1x8xi1>
    %45 = vector.broadcast %44 : vector<2x1x8xi1> to vector<2x4x8xi1>
    %46 = vector.broadcast %cst_31 : f32 to vector<2x4x8xf32>
    %47 = arith.select %45, %46, %40 : vector<2x4x8xi1>, vector<2x4x8xf32>
    %cst_32 = arith.constant dense<0xFF800000> : vector<2x4xf32>
    %48 = vector.multi_reduction <maximumf>, %47, %cst_32 [2] : vector<2x4x8xf32> to vector<2x4xf32>
    %49 = vector.shape_cast %48 : vector<2x4xf32> to vector<2x4x1xf32>
    %50 = vector.broadcast %49 : vector<2x4x1xf32> to vector<2x4x8xf32>
    %51 = arith.subf %47, %50 : vector<2x4x8xf32>
    %52 = math.exp %51 : vector<2x4x8xf32>
    %cst_33 = arith.constant dense<0.000000e+00> : vector<2x4xf32>
    %53 = vector.multi_reduction <add>, %52, %cst_33 [2] : vector<2x4x8xf32> to vector<2x4xf32>
    %54 = vector.shape_cast %53 : vector<2x4xf32> to vector<2x4x1xf32>
    %55 = tpu.reciprocal %54 {approx = true} : vector<2x4x1xf32> -> vector<2x4x1xf32>
    %56 = arith.mulf %54, %55 : vector<2x4x1xf32>
    %cst_34 = arith.constant 2.000000e+00 : f32
    %57 = vector.broadcast %cst_34 : f32 to vector<2x4x1xf32>
    %58 = arith.subf %57, %56 : vector<2x4x1xf32>
    %59 = arith.mulf %55, %58 : vector<2x4x1xf32>
    %60 = vector.broadcast %59 : vector<2x4x1xf32> to vector<2x4x8xf32>
    %61 = arith.mulf %52, %60 : vector<2x4x8xf32>
    "tpu.trace_start"() <{level = 10 : i32, message = "bcl,bld->bcd"}> : () -> ()
    %cst_35 = arith.constant dense<0.000000e+00> : vector<2x4x32xf32>
    %62 = tpu.matmul %61, %21, %cst_35 {dimension_numbers = #tpu.dot_dimension_numbers<[2], [1], [1], [2], [0, 0, 0, 1, 1, 2], [0], [0]>} : vector<2x4x8xf32>, vector<2x8x32xf32>, vector<2x4x32xf32> -> vector<2x4x32xf32>
    "tpu.trace_stop"() : () -> ()
    %63 = arith.addf %62, %0 : vector<2x4x32xf32>
    %c0_36 = arith.constant 0 : index
    %c0_37 = arith.constant 0 : index
    %64 = vector.load %arg13[%c0_36, %c0_37] : memref<1x32xf32, #tpu.memory_space<vmem>>, vector<1x32xf32>
    %65 = vector.shape_cast %64 : vector<1x32xf32> to vector<1x1x32xf32>
    %66 = vector.broadcast %65 : vector<1x1x32xf32> to vector<2x4x32xf32>
    %67 = arith.mulf %63, %66 : vector<2x4x32xf32>
    %cst_38 = arith.constant dense<0.000000e+00> : vector<2x4xf32>
    %68 = vector.multi_reduction <add>, %67, %cst_38 [2] : vector<2x4x32xf32> to vector<2x4xf32>
    %69 = vector.shape_cast %68 : vector<2x4xf32> to vector<2x4x1xf32>
    %c0_39 = arith.constant 0 : index
    %c0_40 = arith.constant 0 : index
    %70 = vector.load %arg14[%c0_39, %c0_40] : memref<1x32xf32, #tpu.memory_space<vmem>>, vector<1x32xf32>
    %71 = vector.shape_cast %70 : vector<1x32xf32> to vector<1x1x32xf32>
    %72 = vector.broadcast %71 : vector<1x1x32xf32> to vector<2x4x32xf32>
    %73 = arith.mulf %0, %72 : vector<2x4x32xf32>
    %cst_41 = arith.constant dense<0.000000e+00> : vector<2x4xf32>
    %74 = vector.multi_reduction <add>, %73, %cst_41 [2] : vector<2x4x32xf32> to vector<2x4xf32>
    %75 = vector.shape_cast %74 : vector<2x4xf32> to vector<2x4x1xf32>
    %76 = arith.addf %69, %75 : vector<2x4x1xf32>
    %c0_42 = arith.constant 0 : index
    %c0_43 = arith.constant 0 : index
    %77 = vector.load %arg15[%c0_42, %c0_43] : memref<1x1xf32, #tpu.memory_space<vmem>>, vector<1x1xf32>
    %78 = vector.shape_cast %77 : vector<1x1xf32> to vector<1x1x1xf32>
    %79 = vector.broadcast %78 : vector<1x1x1xf32> to vector<2x4x1xf32>
    %80 = arith.addf %76, %79 : vector<2x4x1xf32>
    %cst_44 = arith.constant 5.000000e-01 : f32
    %81 = vector.broadcast %cst_44 : f32 to vector<2x4x1xf32>
    %82 = arith.mulf %81, %80 : vector<2x4x1xf32>
    %83 = math.tanh %82 : vector<2x4x1xf32>
    %cst_45 = arith.constant 1.000000e+00 : f32
    %84 = vector.broadcast %cst_45 : f32 to vector<2x4x1xf32>
    %85 = arith.addf %83, %84 : vector<2x4x1xf32>
    %cst_46 = arith.constant 5.000000e-01 : f32
    %86 = vector.broadcast %cst_46 : f32 to vector<2x4x1xf32>
    %87 = arith.mulf %86, %85 : vector<2x4x1xf32>
    %88 = vector.broadcast %87 : vector<2x4x1xf32> to vector<2x4x32xf32>
    %89 = arith.mulf %88, %63 : vector<2x4x32xf32>
    %cst_47 = arith.constant 1.000000e+00 : f32
    %90 = vector.broadcast %cst_47 : f32 to vector<2x4x1xf32>
    %91 = arith.subf %90, %87 : vector<2x4x1xf32>
    %92 = vector.broadcast %91 : vector<2x4x1xf32> to vector<2x4x32xf32>
    %93 = arith.mulf %92, %0 : vector<2x4x32xf32>
    %94 = arith.addf %89, %93 : vector<2x4x32xf32>
    %95 = arith.addf %94, %0 : vector<2x4x32xf32>
    %c0_48 = arith.constant 0 : index
    %c0_49 = arith.constant 0 : index
    %c0_50 = arith.constant 0 : index
    %96 = vector.load %arg16[%c0_48, %c0_49, %c0_50] : memref<2x4x32xf32, #tpu.memory_space<vmem>>, vector<2x4x32xf32>
    tpu.vector_store %arg16[%c0_48, %c0_49, %c0_50], %95 {strides = array<i32>} : memref<2x4x32xf32, #tpu.memory_space<vmem>>, vector<2x4x32xf32>,
    return
  }
  func.func @transform_0(%arg0: i32) -> (i32, i32, i32) {
    %c0_i32 = arith.constant 0 : i32
    %c0_i32_0 = arith.constant 0 : i32
    %c0_i32_1 = arith.constant 0 : i32
    return %arg0, %c0_i32, %c0_i32_0 : i32, i32, i32
  }
  func.func @transform_1(%arg0: i32) -> (i32, i32, i32) {
    %c0_i32 = arith.constant 0 : i32
    %c0_i32_0 = arith.constant 0 : i32
    %c0_i32_1 = arith.constant 0 : i32
    return %arg0, %c0_i32, %c0_i32_0 : i32, i32, i32
  }
  func.func @transform_2(%arg0: i32) -> (i32, i32, i32) {
    %c0_i32 = arith.constant 0 : i32
    %c0_i32_0 = arith.constant 0 : i32
    %c0_i32_1 = arith.constant 0 : i32
    return %arg0, %c0_i32, %c0_i32_0 : i32, i32, i32
  }
  func.func @transform_3(%arg0: i32) -> (i32, i32) {
    %c0_i32 = arith.constant 0 : i32
    %c0_i32_0 = arith.constant 0 : i32
    %c0_i32_1 = arith.constant 0 : i32
    return %c0_i32, %c0_i32_0 : i32, i32
  }
  func.func @transform_4(%arg0: i32) -> (i32, i32) {
    %c0_i32 = arith.constant 0 : i32
    %c0_i32_0 = arith.constant 0 : i32
    %c0_i32_1 = arith.constant 0 : i32
    return %c0_i32, %c0_i32_0 : i32, i32
  }
  func.func @transform_5(%arg0: i32) -> (i32, i32) {
    %c0_i32 = arith.constant 0 : i32
    %c0_i32_0 = arith.constant 0 : i32
    %c0_i32_1 = arith.constant 0 : i32
    return %c0_i32, %c0_i32_0 : i32, i32
  }
  func.func @transform_6(%arg0: i32) -> (i32, i32) {
    %c0_i32 = arith.constant 0 : i32
    %c0_i32_0 = arith.constant 0 : i32
    %c0_i32_1 = arith.constant 0 : i32
    return %c0_i32, %c0_i32_0 : i32, i32
  }
  func.func @transform_7(%arg0: i32) -> (i32, i32) {
    %c0_i32 = arith.constant 0 : i32
    %c0_i32_0 = arith.constant 0 : i32
    %c0_i32_1 = arith.constant 0 : i32
    return %c0_i32, %c0_i32_0 : i32, i32
  }
  func.func @transform_8(%arg0: i32) -> (i32, i32) {
    %c0_i32 = arith.constant 0 : i32
    %c0_i32_0 = arith.constant 0 : i32
    %c0_i32_1 = arith.constant 0 : i32
    return %c0_i32, %c0_i32_0 : i32, i32
  }
  func.func @transform_9(%arg0: i32) -> (i32, i32) {
    %c0_i32 = arith.constant 0 : i32
    %c0_i32_0 = arith.constant 0 : i32
    %c0_i32_1 = arith.constant 0 : i32
    return %c0_i32, %c0_i32_0 : i32, i32
  }
  func.func @transform_10(%arg0: i32) -> (i32, i32) {
    %c0_i32 = arith.constant 0 : i32
    %c0_i32_0 = arith.constant 0 : i32
    %c0_i32_1 = arith.constant 0 : i32
    return %c0_i32, %c0_i32_0 : i32, i32
  }
  func.func @transform_11(%arg0: i32) -> (i32, i32) {
    %c0_i32 = arith.constant 0 : i32
    %c0_i32_0 = arith.constant 0 : i32
    %c0_i32_1 = arith.constant 0 : i32
    return %c0_i32, %c0_i32_0 : i32, i32
  }
  func.func @transform_12(%arg0: i32) -> (i32, i32) {
    %c0_i32 = arith.constant 0 : i32
    %c0_i32_0 = arith.constant 0 : i32
    %c0_i32_1 = arith.constant 0 : i32
    return %c0_i32, %c0_i32_0 : i32, i32
  }
  func.func @transform_13(%arg0: i32) -> (i32, i32) {
    %c0_i32 = arith.constant 0 : i32
    %c0_i32_0 = arith.constant 0 : i32
    %c0_i32_1 = arith.constant 0 : i32
    return %c0_i32, %c0_i32_0 : i32, i32
  }
  func.func @transform_14(%arg0: i32) -> (i32, i32) {
    %c0_i32 = arith.constant 0 : i32
    %c0_i32_0 = arith.constant 0 : i32
    %c0_i32_1 = arith.constant 0 : i32
    return %c0_i32, %c0_i32_0 : i32, i32
  }
  func.func @transform_15(%arg0: i32) -> (i32, i32, i32) {
    %c0_i32 = arith.constant 0 : i32
    %c0_i32_0 = arith.constant 0 : i32
    %c0_i32_1 = arith.constant 0 : i32
    return %arg0, %c0_i32, %c0_i32_0 : i32, i32, i32
  }
}

</mosaic_0001>

<llo_original>
// kernel: hgat_forward.5
$region0: #{hgat_forward.5}
  #allocation0 [shape = 'u32[]', space=smem, size = 0x4, offset = 0x4, fixed_abs, tag = 'smem constant byte address 0x4 - core index']
  #allocation1 [shape = 'u32[144,128]{1,0:T(1,128)}', space=vmem, size = 0x12000, scoped, tag = 'internal scratch']
  #allocation2 [shape = 'f32[1,1]{1,0:T(1,128)S(1)}', space=vmem, size = 0x200, scoped, tag = 'scoped memory for hgat_forward.5']
  #allocation3 [shape = 'f32[1,1]{1,0:T(1,128)S(1)}', space=vmem, size = 0x200, scoped, tag = 'scoped memory for hgat_forward.5']
  %s0 = inlined_call_operand.vmem [shape: f32[1,4,32], index: 0, kind: input, shape index: {}]
  %s1 = inlined_call_operand.vmem [shape: f32[2,8,32], index: 1, kind: input, shape index: {}]
  %s2 = inlined_call_operand.vmem [shape: f32[2,1,8], index: 2, kind: input, shape index: {}]
  %s3 = inlined_call_operand.vmem [shape: f32[32,32], index: 3, kind: input, shape index: {}]
  %s4 = inlined_call_operand.vmem [shape: f32[1,32], index: 4, kind: input, shape index: {}]
  %s5 = inlined_call_operand.vmem [shape: f32[32,32], index: 5, kind: input, shape index: {}]
  %s6 = inlined_call_operand.vmem [shape: f32[1,32], index: 6, kind: input, shape index: {}]
  %s7 = inlined_call_operand.vmem [shape: f32[32,32], index: 7, kind: input, shape index: {}]
  %s8 = inlined_call_operand.vmem [shape: f32[1,32], index: 8, kind: input, shape index: {}]
  %s9 = inlined_call_operand.vmem [shape: f32[1,32], index: 9, kind: input, shape index: {}]
  %s10 = inlined_call_operand.vmem [shape: f32[1,32], index: 10, kind: input, shape index: {}]
  %s11 = inlined_call_operand.<no memory space> [shape: f32[1,1], index: 11, kind: input, shape index: {}]
  %s12 = inlined_call_operand.vmem [shape: f32[1,32], index: 12, kind: input, shape index: {}]
  %s13 = inlined_call_operand.vmem [shape: f32[1,32], index: 13, kind: input, shape index: {}]
  %s14 = inlined_call_operand.<no memory space> [shape: f32[1,1], index: 14, kind: input, shape index: {}]
  %s15 = inlined_call_operand.vmem [shape: f32[2,4,32], index: 15, kind: output, shape index: {}]
  %s16 = sld [smem:[#allocation0]]
  $region70: #{hgat_forward.5} parent=0
    _
  %s18 = ssub.s32 1, %s16
  %s19 = scalar_select 0, %s18, %s16
  %v20 = vstv %s11
  %21 = vst [vmem:[#allocation2] sm:$0x1] %v20
  %v22 = vstv %s14
  %23 = vst [vmem:[#allocation3] sm:$0x1] %v22
  // Predicated region
  $region2: #{hgat_forward.5} parent=0 // pred_check
    _
  $region3: #{hgat_forward.5} parent=0 // pred_check_branch
    %25 = sbr.rel (0) target = $region5
  $region4: #{hgat_forward.5} parent=0 // pred_region
    _
  $region5: #{hgat_forward.5} parent=0 // pred_fallthru
    _
  // Predicated region
  $region6: #{hgat_forward.5} parent=0 // pred_check
    _
  $region7: #{hgat_forward.5} parent=0 // pred_check_branch
    %27 = sbr.rel (0) target = $region9
  $region8: #{hgat_forward.5} parent=0 // pred_region
    _
  $region9: #{hgat_forward.5} parent=0 // pred_fallthru
    _
  // Predicated region
  $region10: #{hgat_forward.5} parent=0 // pred_check
    _
  $region11: #{hgat_forward.5} parent=0 // pred_check_branch
    %29 = sbr.rel (0) target = $region13
  $region12: #{hgat_forward.5} parent=0 // pred_region
    _
  $region13: #{hgat_forward.5} parent=0 // pred_fallthru
    _
  // Predicated region
  $region14: #{hgat_forward.5} parent=0 // pred_check
    _
  $region15: #{hgat_forward.5} parent=0 // pred_check_branch
    %31 = sbr.rel (0) target = $region17
  $region16: #{hgat_forward.5} parent=0 // pred_region
    _
  $region17: #{hgat_forward.5} parent=0 // pred_fallthru
    _
  // Predicated region
  $region18: #{hgat_forward.5} parent=0 // pred_check
    _
  $region19: #{hgat_forward.5} parent=0 // pred_check_branch
    %33 = sbr.rel (0) target = $region21
  $region20: #{hgat_forward.5} parent=0 // pred_region
    _
  $region21: #{hgat_forward.5} parent=0 // pred_fallthru
    _
  // Predicated region
  $region22: #{hgat_forward.5} parent=0 // pred_check
    _
  $region23: #{hgat_forward.5} parent=0 // pred_check_branch
    %35 = sbr.rel (0) target = $region25
  $region24: #{hgat_forward.5} parent=0 // pred_region
    _
  $region25: #{hgat_forward.5} parent=0 // pred_fallthru
    _
  // Predicated region
  $region26: #{hgat_forward.5} parent=0 // pred_check
    _
  $region27: #{hgat_forward.5} parent=0 // pred_check_branch
    %37 = sbr.rel (0) target = $region29
  $region28: #{hgat_forward.5} parent=0 // pred_region
    _
  $region29: #{hgat_forward.5} parent=0 // pred_fallthru
    _
  // Predicated region
  $region30: #{hgat_forward.5} parent=0 // pred_check
    _
  $region31: #{hgat_forward.5} parent=0 // pred_check_branch
    %39 = sbr.rel (0) target = $region33
  $region32: #{hgat_forward.5} parent=0 // pred_region
    _
  $region33: #{hgat_forward.5} parent=0 // pred_fallthru
    _
  // Predicated region
  $region34: #{hgat_forward.5} parent=0 // pred_check
    _
  $region35: #{hgat_forward.5} parent=0 // pred_check_branch
    %41 = sbr.rel (0) target = $region37
  $region36: #{hgat_forward.5} parent=0 // pred_region
    _
  $region37: #{hgat_forward.5} parent=0 // pred_fallthru
    _
  // Predicated region
  $region38: #{hgat_forward.5} parent=0 // pred_check
    _
  $region39: #{hgat_forward.5} parent=0 // pred_check_branch
    %43 = sbr.rel (0) target = $region41
  $region40: #{hgat_forward.5} parent=0 // pred_region
    _
  $region41: #{hgat_forward.5} parent=0 // pred_fallthru
    _
  // Predicated region
  $region42: #{hgat_forward.5} parent=0 // pred_check
    _
  $region43: #{hgat_forward.5} parent=0 // pred_check_branch
    %45 = sbr.rel (0) target = $region45
  $region44: #{hgat_forward.5} parent=0 // pred_region
    _
  $region45: #{hgat_forward.5} parent=0 // pred_fallthru
    _
  // Predicated region
  $region46: #{hgat_forward.5} parent=0 // pred_check
    _
  $region47: #{hgat_forward.5} parent=0 // pred_check_branch
    %47 = sbr.rel (0) target = $region49
  $region48: #{hgat_forward.5} parent=0 // pred_region
    _
  $region49: #{hgat_forward.5} parent=0 // pred_fallthru
    _
  // Predicated region
  $region50: #{hgat_forward.5} parent=0 // pred_check
    _
  $region51: #{hgat_forward.5} parent=0 // pred_check_branch
    %49 = sbr.rel (0) target = $region53
  $region52: #{hgat_forward.5} parent=0 // pred_region
    _
  $region53: #{hgat_forward.5} parent=0 // pred_fallthru
    _
  // Predicated region
  $region54: #{hgat_forward.5} parent=0 // pred_check
    _
  $region55: #{hgat_forward.5} parent=0 // pred_check_branch
    %51 = sbr.rel (0) target = $region57
  $region56: #{hgat_forward.5} parent=0 // pred_region
    _
  $region57: #{hgat_forward.5} parent=0 // pred_fallthru
    _
  // Predicated region
  $region58: #{hgat_forward.5} parent=0 // pred_check
    _
  $region59: #{hgat_forward.5} parent=0 // pred_check_branch
    %53 = sbr.rel (0) target = $region61
  $region60: #{hgat_forward.5} parent=0 // pred_region
    _
  $region61: #{hgat_forward.5} parent=0 // pred_fallthru
    _
  %v54 = vld [vmem:[%s0] sm:$0xf]
  %v55 = vld [vmem:[%s1] sm:$0xff]
  %v56 = vld [vmem:[%s1 + $0x8] sm:$0xff]
  %v57 = vld [vmem:[%s3] sm:$0xff]
  %v58 = vld [vmem:[%s3 + $0x8] sm:$0xff]
  %v59 = vld [vmem:[%s3 + $0x10] sm:$0xff]
  %v60 = vld [vmem:[%s3 + $0x18] sm:$0xff]
  %v61 = vld [vmem:[%s4] sm:$0x1]
  %v63 = vlaneseq
  %v64 = vshrl.u32 %v63, 7
  %v65 = vsub.s32 0, %v64
  %v66 = vrot.slane %v61, %v65
  %vm68 = vcmask 261120
  %v70 = vsel %vm68, %v54, 0
  %v73 = vsel %vm68, %v57, 0
  %v76 = vsel %vm68, %v58, 0
  %v79 = vsel %vm68, %v59, 0
  %v82 = vsel %vm68, %v60, 0
  %84 = vmatprep.subr.mxu0 0.0
  %85 = vmatpush1.xpose.msra.mxu0 %v73
  %86 = vmatprep.subr.mxu0 0.0
  %87 = vmatpush1.xpose.msra.mxu0 %v76
  %88 = vmatprep.subr.mxu0 0.0
  %89 = vmatpush1.xpose.msra.mxu0 %v79
  %90 = vmatprep.subr.mxu0 0.0
  %91 = vmatpush1.xpose.msra.mxu0 %v82
  %92 = vmatprep.subr.mxu0 0.0
  %93 = vmatpush1.xpose.msra.mxu0 0.0
  %94 = vmatprep.subr.mxu0 0.0
  %95 = vmatpush1.xpose.msra.mxu0 0.0
  %96 = vmatprep.subr.mxu0 0.0
  %97 = vmatpush1.xpose.msra.mxu0 0.0
  %98 = vmatprep.subr.mxu0 0.0
  %99 = vmatpush1.xpose.msra.mxu0 0.0
  %100 = vmatprep.subr.mxu0 0.0
  %101 = vmatpush1.xpose.msra.mxu0 0.0
  %102 = vmatprep.subr.mxu0 0.0
  %103 = vmatpush1.xpose.msra.mxu0 0.0
  %104 = vmatprep.subr.mxu0 0.0
  %105 = vmatpush1.xpose.msra.mxu0 0.0
  %106 = vmatprep.subr.mxu0 0.0
  %107 = vmatpush1.xpose.msra.mxu0 0.0
  %108 = vmatprep.subr.mxu0 0.0
  %109 = vmatpush1.xpose.msra.mxu0 0.0
  %110 = vmatprep.subr.mxu0 0.0
  %111 = vmatpush1.xpose.msra.mxu0 0.0
  %112 = vmatprep.subr.mxu0 0.0
  %113 = vmatpush1.xpose.msra.mxu0 0.0
  %114 = vmatprep.subr.mxu0 0.0
  %115 = vmatpush1.xpose.msra.mxu0 0.0
  %116 = vmatprep.subr.mxu0 0.0
  %117 = vmatpush1.xpose.msra.mxu0 0.0
  %118 = vmatprep.subr.mxu0 0.0
  %119 = vmatpush1.xpose.msra.mxu0 0.0
  %120 = vmatprep.subr.mxu0 0.0
  %121 = vmatpush1.xpose.msra.mxu0 0.0
  %122 = vmatprep.subr.mxu0 0.0
  %123 = vmatpush1.xpose.msra.mxu0 0.0
  %124 = vmatprep.subr.mxu0 0.0
  %125 = vmatpush1.xpose.msra.mxu0 0.0
  %126 = vmatprep.subr.mxu0 0.0
  %127 = vmatpush1.xpose.msra.mxu0 0.0
  %128 = vmatprep.subr.mxu0 0.0
  %129 = vmatpush1.xpose.msra.mxu0 0.0
  %130 = vmatprep.subr.mxu0 0.0
  %131 = vmatpush1.xpose.msra.mxu0 0.0
  %132 = vmatprep.subr.mxu0 0.0
  %133 = vmatpush1.xpose.msra.mxu0 0.0
  %134 = vmatprep.subr.mxu0 0.0
  %135 = vmatpush1.xpose.msra.mxu0 0.0
  %136 = vmatprep.subr.mxu0 0.0
  %137 = vmatpush1.xpose.msra.mxu0 0.0
  %138 = vmatprep.subr.mxu0 0.0
  %139 = vmatpush1.xpose.msra.mxu0 0.0
  %140 = vmatprep.subr.mxu0 0.0
  %141 = vmatpush1.xpose.msra.mxu0 0.0
  %142 = vmatprep.subr.mxu0 0.0
  %143 = vmatpush1.xpose.msra.mxu0 0.0
  %144 = vmatprep.subr.mxu0 0.0
  %145 = vmatpush1.xpose.msra.mxu0 0.0
  %146 = vmatprep.subr.mxu0 0.0
  %147 = vmatpush1.xpose.msra.mxu0 0.0
  %148 = vmatprep.mubr.f32.mxu0 0.0
  %149 = vmatmul.mubr.f32.gmra.mrb[0].mxu0 %v70
  %v150 = vpop.f32.mrb[0].mxu0
  %v151 = vadd.f32 %v66, %v150
  %v152 = vpop.f32.mrb[0].mxu0
  %153 = vdwg.mxu0
  %v154 = vld [vmem:[%s5] sm:$0xff]
  %v155 = vld [vmem:[%s5 + $0x8] sm:$0xff]
  %v156 = vld [vmem:[%s5 + $0x10] sm:$0xff]
  %v157 = vld [vmem:[%s5 + $0x18] sm:$0xff]
  %v158 = vld [vmem:[%s6] sm:$0x1]
  %v160 = vlaneseq
  %v161 = vshrl.u32 %v160, 7
  %v162 = vsub.s32 0, %v161
  %v163 = vrot.slane %v158, %v162
  %v166 = vsel %vm68, %v55, 0
  %v169 = vsel %vm68, %v56, 0
  %v172 = vsel %vm68, %v154, 0
  %v175 = vsel %vm68, %v155, 0
  %v178 = vsel %vm68, %v156, 0
  %v181 = vsel %vm68, %v157, 0
  %183 = vmatprep.subr.mxu0 0.0
  %184 = vmatpush1.xpose.msra.mxu0 %v172
  %185 = vmatprep.subr.mxu0 0.0
  %186 = vmatpush1.xpose.msra.mxu0 %v175
  %187 = vmatprep.subr.mxu0 0.0
  %188 = vmatpush1.xpose.msra.mxu0 %v178
  %189 = vmatprep.subr.mxu0 0.0
  %190 = vmatpush1.xpose.msra.mxu0 %v181
  %191 = vmatprep.subr.mxu0 0.0
  %192 = vmatpush1.xpose.msra.mxu0 0.0
  %193 = vmatprep.subr.mxu0 0.0
  %194 = vmatpush1.xpose.msra.mxu0 0.0
  %195 = vmatprep.subr.mxu0 0.0
  %196 = vmatpush1.xpose.msra.mxu0 0.0
  %197 = vmatprep.subr.mxu0 0.0
  %198 = vmatpush1.xpose.msra.mxu0 0.0
  %199 = vmatprep.subr.mxu0 0.0
  %200 = vmatpush1.xpose.msra.mxu0 0.0
  %201 = vmatprep.subr.mxu0 0.0
  %202 = vmatpush1.xpose.msra.mxu0 0.0
  %203 = vmatprep.subr.mxu0 0.0
  %204 = vmatpush1.xpose.msra.mxu0 0.0
  %205 = vmatprep.subr.mxu0 0.0
  %206 = vmatpush1.xpose.msra.mxu0 0.0
  %207 = vmatprep.subr.mxu0 0.0
  %208 = vmatpush1.xpose.msra.mxu0 0.0
  %209 = vmatprep.subr.mxu0 0.0
  %210 = vmatpush1.xpose.msra.mxu0 0.0
  %211 = vmatprep.subr.mxu0 0.0
  %212 = vmatpush1.xpose.msra.mxu0 0.0
  %213 = vmatprep.subr.mxu0 0.0
  %214 = vmatpush1.xpose.msra.mxu0 0.0
  %215 = vmatprep.subr.mxu0 0.0
  %216 = vmatpush1.xpose.msra.mxu0 0.0
  %217 = vmatprep.subr.mxu0 0.0
  %218 = vmatpush1.xpose.msra.mxu0 0.0
  %219 = vmatprep.subr.mxu0 0.0
  %220 = vmatpush1.xpose.msra.mxu0 0.0
  %221 = vmatprep.subr.mxu0 0.0
  %222 = vmatpush1.xpose.msra.mxu0 0.0
  %223 = vmatprep.subr.mxu0 0.0
  %224 = vmatpush1.xpose.msra.mxu0 0.0
  %225 = vmatprep.subr.mxu0 0.0
  %226 = vmatpush1.xpose.msra.mxu0 0.0
  %227 = vmatprep.subr.mxu0 0.0
  %228 = vmatpush1.xpose.msra.mxu0 0.0
  %229 = vmatprep.subr.mxu0 0.0
  %230 = vmatpush1.xpose.msra.mxu0 0.0
  %231 = vmatprep.subr.mxu0 0.0
  %232 = vmatpush1.xpose.msra.mxu0 0.0
  %233 = vmatprep.subr.mxu0 0.0
  %234 = vmatpush1.xpose.msra.mxu0 0.0
  %235 = vmatprep.subr.mxu0 0.0
  %236 = vmatpush1.xpose.msra.mxu0 0.0
  %237 = vmatprep.subr.mxu0 0.0
  %238 = vmatpush1.xpose.msra.mxu0 0.0
  %239 = vmatprep.subr.mxu0 0.0
  %240 = vmatpush1.xpose.msra.mxu0 0.0
  %241 = vmatprep.subr.mxu0 0.0
  %242 = vmatpush1.xpose.msra.mxu0 0.0
  %243 = vmatprep.subr.mxu0 0.0
  %244 = vmatpush1.xpose.msra.mxu0 0.0
  %245 = vmatprep.subr.mxu0 0.0
  %246 = vmatpush1.xpose.msra.mxu0 0.0
  %247 = vmatprep.mubr.f32.mxu0 0.0
  %248 = vmatmul.mubr.f32.gmra.mrb[0].mxu0 %v166
  %v249 = vpop.f32.mrb[0].mxu0
  %v250 = vadd.f32 %v163, %v249
  %v251 = vpop.f32.mrb[0].mxu0
  %252 = vmatprep.mubr.f32.mxu0 0.0
  %253 = vmatmul.mubr.f32.gmra.mrb[0].mxu0 %v169
  %v254 = vpop.f32.mrb[0].mxu0
  %v255 = vadd.f32 %v163, %v254
  %v256 = vpop.f32.mrb[0].mxu0
  %257 = vdwg.mxu0
  %v258 = vld [vmem:[%s7] sm:$0xff]
  %v259 = vld [vmem:[%s7 + $0x8] sm:$0xff]
  %v260 = vld [vmem:[%s7 + $0x10] sm:$0xff]
  %v261 = vld [vmem:[%s7 + $0x18] sm:$0xff]
  %v262 = vld [vmem:[%s8] sm:$0x1]
  %v264 = vlaneseq
  %v265 = vshrl.u32 %v264, 7
  %v266 = vsub.s32 0, %v265
  %v267 = vrot.slane %v262, %v266
  %v270 = vsel %vm68, %v258, 0
  %v273 = vsel %vm68, %v259, 0
  %v276 = vsel %vm68, %v260, 0
  %v279 = vsel %vm68, %v261, 0
  %281 = vmatprep.subr.mxu0 0.0
  %282 = vmatpush1.xpose.msra.mxu0 %v270
  %283 = vmatprep.subr.mxu0 0.0
  %284 = vmatpush1.xpose.msra.mxu0 %v273
  %285 = vmatprep.subr.mxu0 0.0
  %286 = vmatpush1.xpose.msra.mxu0 %v276
  %287 = vmatprep.subr.mxu0 0.0
  %288 = vmatpush1.xpose.msra.mxu0 %v279
  %289 = vmatprep.subr.mxu0 0.0
  %290 = vmatpush1.xpose.msra.mxu0 0.0
  %291 = vmatprep.subr.mxu0 0.0
  %292 = vmatpush1.xpose.msra.mxu0 0.0
  %293 = vmatprep.subr.mxu0 0.0
  %294 = vmatpush1.xpose.msra.mxu0 0.0
  %295 = vmatprep.subr.mxu0 0.0
  %296 = vmatpush1.xpose.msra.mxu0 0.0
  %297 = vmatprep.subr.mxu0 0.0
  %298 = vmatpush1.xpose.msra.mxu0 0.0
  %299 = vmatprep.subr.mxu0 0.0
  %300 = vmatpush1.xpose.msra.mxu0 0.0
  %301 = vmatprep.subr.mxu0 0.0
  %302 = vmatpush1.xpose.msra.mxu0 0.0
  %303 = vmatprep.subr.mxu0 0.0
  %304 = vmatpush1.xpose.msra.mxu0 0.0
  %305 = vmatprep.subr.mxu0 0.0
  %306 = vmatpush1.xpose.msra.mxu0 0.0
  %307 = vmatprep.subr.mxu0 0.0
  %308 = vmatpush1.xpose.msra.mxu0 0.0
  %309 = vmatprep.subr.mxu0 0.0
  %310 = vmatpush1.xpose.msra.mxu0 0.0
  %311 = vmatprep.subr.mxu0 0.0
  %312 = vmatpush1.xpose.msra.mxu0 0.0
  %313 = vmatprep.subr.mxu0 0.0
  %314 = vmatpush1.xpose.msra.mxu0 0.0
  %315 = vmatprep.subr.mxu0 0.0
  %316 = vmatpush1.xpose.msra.mxu0 0.0
  %317 = vmatprep.subr.mxu0 0.0
  %318 = vmatpush1.xpose.msra.mxu0 0.0
  %319 = vmatprep.subr.mxu0 0.0
  %320 = vmatpush1.xpose.msra.mxu0 0.0
  %321 = vmatprep.subr.mxu0 0.0
  %322 = vmatpush1.xpose.msra.mxu0 0.0
  %323 = vmatprep.subr.mxu0 0.0
  %324 = vmatpush1.xpose.msra.mxu0 0.0
  %325 = vmatprep.subr.mxu0 0.0
  %326 = vmatpush1.xpose.msra.mxu0 0.0
  %327 = vmatprep.subr.mxu0 0.0
  %328 = vmatpush1.xpose.msra.mxu0 0.0
  %329 = vmatprep.subr.mxu0 0.0
  %330 = vmatpush1.xpose.msra.mxu0 0.0
  %331 = vmatprep.subr.mxu0 0.0
  %332 = vmatpush1.xpose.msra.mxu0 0.0
  %333 = vmatprep.subr.mxu0 0.0
  %334 = vmatpush1.xpose.msra.mxu0 0.0
  %335 = vmatprep.subr.mxu0 0.0
  %336 = vmatpush1.xpose.msra.mxu0 0.0
  %337 = vmatprep.subr.mxu0 0.0
  %338 = vmatpush1.xpose.msra.mxu0 0.0
  %339 = vmatprep.subr.mxu0 0.0
  %340 = vmatpush1.xpose.msra.mxu0 0.0
  %341 = vmatprep.subr.mxu0 0.0
  %342 = vmatpush1.xpose.msra.mxu0 0.0
  %343 = vmatprep.subr.mxu0 0.0
  %344 = vmatpush1.xpose.msra.mxu0 0.0
  %345 = vmatprep.mubr.f32.mxu0 0.0
  %346 = vmatmul.mubr.f32.gmra.mrb[0].mxu0 %v166
  %v347 = vpop.f32.mrb[0].mxu0
  %v348 = vadd.f32 %v267, %v347
  %v349 = vpop.f32.mrb[0].mxu0
  %350 = vmatprep.mubr.f32.mxu0 0.0
  %351 = vmatmul.mubr.f32.gmra.mrb[0].mxu0 %v169
  %v352 = vpop.f32.mrb[0].mxu0
  %v353 = vadd.f32 %v267, %v352
  %v354 = vpop.f32.mrb[0].mxu0
  %355 = vdwg.mxu0
  %v356 = vld [vmem:[%s9] sm:$0x1]
  %v358 = vlaneseq
  %v359 = vshrl.u32 %v358, 7
  %v360 = vsub.s32 0, %v359
  %v361 = vrot.slane %v356, %v360
  %v363 = vmul.f32 %v151, %v361
  %vm364 = vcmask 257024
  %v365 = vsel %vm364, %v363, 0.0
  %366 = vadd.xlane.f32.xlu0 %v365
  %v367 = vpop.xlane.xlu0 %366
  %v368 = vld [vmem:[%s10] sm:$0x1]
  %v370 = vlaneseq
  %v371 = vshrl.u32 %v370, 7
  %v372 = vsub.s32 0, %v371
  %v373 = vrot.slane %v368, %v372
  %v375 = vmul.f32 %v250, %v373
  %v376 = vmul.f32 %v255, %v373
  %v377 = vsel %vm68, %v375, 0.0
  %378 = vadd.xlane.f32.xlu0 %v377
  %v379 = vpop.xlane.xlu0 %378
  %v380 = vsel %vm68, %v376, 0.0
  %381 = vadd.xlane.f32.xlu0 %v380
  %v382 = vpop.xlane.xlu0 %381
  %v385 = vlaneseq
  %v386 = vand.u32 %v385, 127
  %v387 = vlaneseq
  %v388 = vshrl.u32 %v387, 7
  %v389 = vsub.s32 %v386, %v388
  %v390 = vrot.slane %v379, %v389
  %v391 = vlaneseq
  %v392 = vshrl.u32 %v391, 7
  %v393 = vsub.s32 %v386, %v392
  %v394 = vrot.slane %v382, %v393
  %vm395 = vcmask 1042434
  %v396 = vsel %vm395, %v390, %v390
  %vm397 = vcmask 1043459
  %v398 = vsel %vm397, %v390, %v396
  %v399 = vsel %vm395, %v394, %v394
  %v400 = vsel %vm397, %v394, %v399
  %v403 = vadd.f32 %v367, %v398
  %v404 = vadd.f32 %v367, %v400
  %v405 = vld [vmem:[#allocation2] sm:$0x1]
  %v407 = vlaneseq
  %v408 = vshrl.u32 %v407, 7
  %v409 = vsub.s32 0, %v408
  %v410 = vrot.slane %v405, %v409
  %411 = vset.pattern.permute.xlu0 0
  %412 = vperm.xlu0 %411, %v410
  %v413 = vpop.permute.xlu0 %412
  %v415 = vadd.f32 %v403, %v413
  %v416 = vadd.f32 %v404, %v413
  %v417 = vld [vmem:[%s2] sm:$0x1]
  %v418 = vld [vmem:[%s2 + $0x1] sm:$0x1]
  %vm419 = vcmp.lt.f32.partialorder %v417, 0.5
  %vm420 = vcmp.lt.f32.partialorder %v418, 0.5
  %v421 = vsel %vm419, 1, 0
  %v422 = vsel %vm420, 1, 0
  %v423 = vlaneseq
  %v424 = vshrl.u32 %v423, 7
  %v425 = vsub.s32 0, %v424
  %v426 = vrot.slane %v421, %v425
  %v427 = vlaneseq
  %v428 = vshrl.u32 %v427, 7
  %v429 = vsub.s32 0, %v428
  %v430 = vrot.slane %v422, %v429
  %vm431 = vcmp.eq.s32.totalorder %v426, 1
  %vm432 = vcmp.eq.s32.totalorder %v430, 1
  %v433 = vsel %vm431, -1e+09, %v415
  %v434 = vsel %vm432, -1e+09, %v416
  %vm435 = vcmask 60416
  %v436 = vsel %vm435, %v433, -inf
  %437 = vmax.xlane.f32.xlu0 %v436
  %v438 = vpop.xlane.xlu0 %437
  %v439 = vsel %vm435, %v434, -inf
  %440 = vmax.xlane.f32.xlu0 %v439
  %v441 = vpop.xlane.xlu0 %440
  %v442 = vsub.f32 %v433, %v438
  %v443 = vsub.f32 %v434, %v441
  %v444 = vmul.f32 %v442, 1.442695
  %v445 = vpow.pop %v444
  %v446 = vmul.f32 %v443, 1.442695
  %v447 = vpow.pop %v446
  %v448 = vsel %vm435, %v445, 0.0
  %449 = vadd.xlane.f32.xlu0 %v448
  %v450 = vpop.xlane.xlu0 %449
  %v451 = vsel %vm435, %v447, 0.0
  %452 = vadd.xlane.f32.xlu0 %v451
  %v453 = vpop.xlane.xlu0 %452
  %v454 = vrcp.pop %v450
  %v455 = vrcp.pop %v453
  %v456 = vmul.f32 %v450, %v454
  %v457 = vmul.f32 %v453, %v455
  %v458 = vsub.f32 2.0, %v456
  %v459 = vsub.f32 2.0, %v457
  %v460 = vmul.f32 %v454, %v458
  %v461 = vmul.f32 %v455, %v459
  %v462 = vmul.f32 %v445, %v460
  %v463 = vmul.f32 %v447, %v461
  %vm464 = vcmask 64512
  %v466 = vsel %vm464, %v462, 0
  %468 = vmatprep.subr.mxu0 0.0
  %469 = vmatpush1.msra.mxu0 %v348
  %470 = vmatprep.subr.mxu0 0.0
  %471 = vmatpush1.msra.mxu0 0.0
  %472 = vmatprep.subr.mxu0 0.0
  %473 = vmatpush1.msra.mxu0 0.0
  %474 = vmatprep.subr.mxu0 0.0
  %475 = vmatpush1.msra.mxu0 0.0
  %476 = vmatprep.subr.mxu0 0.0
  %477 = vmatpush1.msra.mxu0 0.0
  %478 = vmatprep.subr.mxu0 0.0
  %479 = vmatpush1.msra.mxu0 0.0
  %480 = vmatprep.subr.mxu0 0.0
  %481 = vmatpush1.msra.mxu0 0.0
  %482 = vmatprep.subr.mxu0 0.0
  %483 = vmatpush1.msra.mxu0 0.0
  %484 = vmatprep.subr.mxu0 0.0
  %485 = vmatpush1.msra.mxu0 0.0
  %486 = vmatprep.subr.mxu0 0.0
  %487 = vmatpush1.msra.mxu0 0.0
  %488 = vmatprep.subr.mxu0 0.0
  %489 = vmatpush1.msra.mxu0 0.0
  %490 = vmatprep.subr.mxu0 0.0
  %491 = vmatpush1.msra.mxu0 0.0
  %492 = vmatprep.subr.mxu0 0.0
  %493 = vmatpush1.msra.mxu0 0.0
  %494 = vmatprep.subr.mxu0 0.0
  %495 = vmatpush1.msra.mxu0 0.0
  %496 = vmatprep.subr.mxu0 0.0
  %497 = vmatpush1.msra.mxu0 0.0
  %498 = vmatprep.subr.mxu0 0.0
  %499 = vmatpush1.msra.mxu0 0.0
  %500 = vmatprep.subr.mxu0 0.0
  %501 = vmatpush1.msra.mxu0 0.0
  %502 = vmatprep.subr.mxu0 0.0
  %503 = vmatpush1.msra.mxu0 0.0
  %504 = vmatprep.subr.mxu0 0.0
  %505 = vmatpush1.msra.mxu0 0.0
  %506 = vmatprep.subr.mxu0 0.0
  %507 = vmatpush1.msra.mxu0 0.0
  %508 = vmatprep.subr.mxu0 0.0
  %509 = vmatpush1.msra.mxu0 0.0
  %510 = vmatprep.subr.mxu0 0.0
  %511 = vmatpush1.msra.mxu0 0.0
  %512 = vmatprep.subr.mxu0 0.0
  %513 = vmatpush1.msra.mxu0 0.0
  %514 = vmatprep.subr.mxu0 0.0
  %515 = vmatpush1.msra.mxu0 0.0
  %516 = vmatprep.subr.mxu0 0.0
  %517 = vmatpush1.msra.mxu0 0.0
  %518 = vmatprep.subr.mxu0 0.0
  %519 = vmatpush1.msra.mxu0 0.0
  %520 = vmatprep.subr.mxu0 0.0
  %521 = vmatpush1.msra.mxu0 0.0
  %522 = vmatprep.subr.mxu0 0.0
  %523 = vmatpush1.msra.mxu0 0.0
  %524 = vmatprep.subr.mxu0 0.0
  %525 = vmatpush1.msra.mxu0 0.0
  %526 = vmatprep.subr.mxu0 0.0
  %527 = vmatpush1.msra.mxu0 0.0
  %528 = vmatprep.subr.mxu0 0.0
  %529 = vmatpush1.msra.mxu0 0.0
  %530 = vmatprep.subr.mxu0 0.0
  %531 = vmatpush1.msra.mxu0 0.0
  %532 = vmatprep.mubr.f32.mxu0 0.0
  %533 = vmatmul.mubr.f32.gmra.mrb[0].mxu0 %v466
  %v534 = vpop.f32.mrb[0].mxu0
  %v535 = vadd.f32 %v54, %v534
  %v536 = vpop.f32.mrb[0].mxu0
  %537 = vdwg.mxu0
  %v539 = vsel %vm464, %v463, 0
  %541 = vmatprep.subr.mxu0 0.0
  %542 = vmatpush1.msra.mxu0 %v353
  %543 = vmatprep.subr.mxu0 0.0
  %544 = vmatpush1.msra.mxu0 0.0
  %545 = vmatprep.subr.mxu0 0.0
  %546 = vmatpush1.msra.mxu0 0.0
  %547 = vmatprep.subr.mxu0 0.0
  %548 = vmatpush1.msra.mxu0 0.0
  %549 = vmatprep.subr.mxu0 0.0
  %550 = vmatpush1.msra.mxu0 0.0
  %551 = vmatprep.subr.mxu0 0.0
  %552 = vmatpush1.msra.mxu0 0.0
  %553 = vmatprep.subr.mxu0 0.0
  %554 = vmatpush1.msra.mxu0 0.0
  %555 = vmatprep.subr.mxu0 0.0
  %556 = vmatpush1.msra.mxu0 0.0
  %557 = vmatprep.subr.mxu0 0.0
  %558 = vmatpush1.msra.mxu0 0.0
  %559 = vmatprep.subr.mxu0 0.0
  %560 = vmatpush1.msra.mxu0 0.0
  %561 = vmatprep.subr.mxu0 0.0
  %562 = vmatpush1.msra.mxu0 0.0
  %563 = vmatprep.subr.mxu0 0.0
  %564 = vmatpush1.msra.mxu0 0.0
  %565 = vmatprep.subr.mxu0 0.0
  %566 = vmatpush1.msra.mxu0 0.0
  %567 = vmatprep.subr.mxu0 0.0
  %568 = vmatpush1.msra.mxu0 0.0
  %569 = vmatprep.subr.mxu0 0.0
  %570 = vmatpush1.msra.mxu0 0.0
  %571 = vmatprep.subr.mxu0 0.0
  %572 = vmatpush1.msra.mxu0 0.0
  %573 = vmatprep.subr.mxu0 0.0
  %574 = vmatpush1.msra.mxu0 0.0
  %575 = vmatprep.subr.mxu0 0.0
  %576 = vmatpush1.msra.mxu0 0.0
  %577 = vmatprep.subr.mxu0 0.0
  %578 = vmatpush1.msra.mxu0 0.0
  %579 = vmatprep.subr.mxu0 0.0
  %580 = vmatpush1.msra.mxu0 0.0
  %581 = vmatprep.subr.mxu0 0.0
  %582 = vmatpush1.msra.mxu0 0.0
  %583 = vmatprep.subr.mxu0 0.0
  %584 = vmatpush1.msra.mxu0 0.0
  %585 = vmatprep.subr.mxu0 0.0
  %586 = vmatpush1.msra.mxu0 0.0
  %587 = vmatprep.subr.mxu0 0.0
  %588 = vmatpush1.msra.mxu0 0.0
  %589 = vmatprep.subr.mxu0 0.0
  %590 = vmatpush1.msra.mxu0 0.0
  %591 = vmatprep.subr.mxu0 0.0
  %592 = vmatpush1.msra.mxu0 0.0
  %593 = vmatprep.subr.mxu0 0.0
  %594 = vmatpush1.msra.mxu0 0.0
  %595 = vmatprep.subr.mxu0 0.0
  %596 = vmatpush1.msra.mxu0 0.0
  %597 = vmatprep.subr.mxu0 0.0
  %598 = vmatpush1.msra.mxu0 0.0
  %599 = vmatprep.subr.mxu0 0.0
  %600 = vmatpush1.msra.mxu0 0.0
  %601 = vmatprep.subr.mxu0 0.0
  %602 = vmatpush1.msra.mxu0 0.0
  %603 = vmatprep.subr.mxu0 0.0
  %604 = vmatpush1.msra.mxu0 0.0
  %605 = vmatprep.mubr.f32.mxu0 0.0
  %606 = vmatmul.mubr.f32.gmra.mrb[0].mxu0 %v539
  %v607 = vpop.f32.mrb[0].mxu0
  %v608 = vadd.f32 %v54, %v607
  %v609 = vpop.f32.mrb[0].mxu0
  %610 = vdwg.mxu0
  %v611 = vld [vmem:[%s12] sm:$0x1]
  %v613 = vlaneseq
  %v614 = vshrl.u32 %v613, 7
  %v615 = vsub.s32 0, %v614
  %v616 = vrot.slane %v611, %v615
  %v618 = vmul.f32 %v535, %v616
  %v619 = vmul.f32 %v608, %v616
  %v620 = vsel %vm364, %v618, 0.0
  %621 = vadd.xlane.f32.xlu0 %v620
  %v622 = vpop.xlane.xlu0 %621
  %v623 = vsel %vm364, %v619, 0.0
  %624 = vadd.xlane.f32.xlu0 %v623
  %v625 = vpop.xlane.xlu0 %624
  %v626 = vld [vmem:[%s13] sm:$0x1]
  %v628 = vlaneseq
  %v629 = vshrl.u32 %v628, 7
  %v630 = vsub.s32 0, %v629
  %v631 = vrot.slane %v626, %v630
  %v633 = vmul.f32 %v54, %v631
  %v634 = vsel %vm364, %v633, 0.0
  %635 = vadd.xlane.f32.xlu0 %v634
  %v636 = vpop.xlane.xlu0 %635
  %v637 = vadd.f32 %v622, %v636
  %v638 = vadd.f32 %v625, %v636
  %v639 = vld [vmem:[#allocation3] sm:$0x1]
  %v641 = vlaneseq
  %v642 = vshrl.u32 %v641, 7
  %v643 = vsub.s32 0, %v642
  %v644 = vrot.slane %v639, %v643
  %v646 = vadd.f32 %v637, %v644
  %v647 = vadd.f32 %v638, %v644
  %v648 = vmul.f32 %v646, 0.5
  %v649 = vmul.f32 %v647, 0.5
  %v650 = vtanh.pop %v648
  %v651 = vtanh.pop %v649
  %v652 = vadd.f32 %v650, 1.0
  %v653 = vadd.f32 %v651, 1.0
  %v654 = vmul.f32 %v652, 0.5
  %v655 = vmul.f32 %v653, 0.5
  %657 = vset.pattern.permute.xlu0 0
  %658 = vperm.xlu0 %657, %v654
  %v659 = vpop.permute.xlu0 %658
  %662 = vset.pattern.permute.xlu0 0
  %663 = vperm.xlu0 %662, %v655
  %v664 = vpop.permute.xlu0 %663
  %v666 = vmul.f32 %v659, %v535
  %v667 = vmul.f32 %v664, %v608
  %v668 = vsub.f32 1.0, %v654
  %v669 = vsub.f32 1.0, %v655
  %671 = vset.pattern.permute.xlu0 0
  %672 = vperm.xlu0 %671, %v668
  %v673 = vpop.permute.xlu0 %672
  %676 = vset.pattern.permute.xlu0 0
  %677 = vperm.xlu0 %676, %v669
  %v678 = vpop.permute.xlu0 %677
  %v680 = vmul.f32 %v673, %v54
  %v681 = vmul.f32 %v678, %v54
  %v682 = vadd.f32 %v666, %v680
  %v683 = vadd.f32 %v667, %v681
  %v684 = vadd.f32 %v682, %v54
  %v685 = vadd.f32 %v683, %v54
  %686 = vst.msk [vmem:[%s15] sm:$0xf] %vm364, %v684
  %687 = vst.msk [vmem:[%s15 + $0x4] sm:$0xf] %vm364, %v685
  // Predicated region
  $region62: #{hgat_forward.5} parent=0 // pred_check
    _
  $region63: #{hgat_forward.5} parent=0 // pred_check_branch
    %689 = sbr.rel (0) target = $region65
  $region64: #{hgat_forward.5} parent=0 // pred_region
    _
  $region65: #{hgat_forward.5} parent=0 // pred_fallthru
    _
  // Predicated region
  $region66: #{hgat_forward.5} parent=0 // pred_check
    _
  $region67: #{hgat_forward.5} parent=0 // pred_check_branch
    %691 = sbr.rel (0) target = $region69
  $region68: #{hgat_forward.5} parent=0 // pred_region
    _
  $region69: #{hgat_forward.5} parent=0 // pred_fallthru
    _

// kernel: hgat_forward.4
$region0: #{hgat_forward.4}
  #allocation0 [shape = 'u32[]', space=smem, size = 0x4, offset = 0x4, fixed_abs, tag = 'smem constant byte address 0x4 - core index']
  #allocation1 [shape = 'u32[144,128]{1,0:T(1,128)}', space=vmem, size = 0x12000, scoped, tag = 'internal scratch']
  #allocation2 [shape = 'f32[1,1]{1,0:T(1,128)S(1)}', space=vmem, size = 0x200, scoped, tag = 'scoped memory for hgat_forward.4']
  #allocation3 [shape = 'f32[1,1]{1,0:T(1,128)S(1)}', space=vmem, size = 0x200, scoped, tag = 'scoped memory for hgat_forward.4']
  %s0 = inlined_call_operand.vmem [shape: f32[2,8,32], index: 0, kind: input, shape index: {}]
  %s1 = inlined_call_operand.vmem [shape: f32[1,4,32], index: 1, kind: input, shape index: {}]
  %s2 = inlined_call_operand.vmem [shape: f32[32,32], index: 2, kind: input, shape index: {}]
  %s3 = inlined_call_operand.vmem [shape: f32[1,32], index: 3, kind: input, shape index: {}]
  %s4 = inlined_call_operand.vmem [shape: f32[32,32], index: 4, kind: input, shape index: {}]
  %s5 = inlined_call_operand.vmem [shape: f32[1,32], index: 5, kind: input, shape index: {}]
  %s6 = inlined_call_operand.vmem [shape: f32[32,32], index: 6, kind: input, shape index: {}]
  %s7 = inlined_call_operand.vmem [shape: f32[1,32], index: 7, kind: input, shape index: {}]
  %s8 = inlined_call_operand.vmem [shape: f32[1,32], index: 8, kind: input, shape index: {}]
  %s9 = inlined_call_operand.vmem [shape: f32[1,32], index: 9, kind: input, shape index: {}]
  %s10 = inlined_call_operand.<no memory space> [shape: f32[1,1], index: 10, kind: input, shape index: {}]
  %s11 = inlined_call_operand.vmem [shape: f32[1,32], index: 11, kind: input, shape index: {}]
  %s12 = inlined_call_operand.vmem [shape: f32[1,32], index: 12, kind: input, shape index: {}]
  %s13 = inlined_call_operand.<no memory space> [shape: f32[1,1], index: 13, kind: input, shape index: {}]
  %s14 = inlined_call_operand.vmem [shape: f32[2,8,32], index: 14, kind: output, shape index: {}]
  %s15 = sld [smem:[#allocation0]]
  $region66: #{hgat_forward.4} parent=0
    _
  %s17 = ssub.s32 1, %s15
  %s18 = scalar_select 0, %s17, %s15
  %v19 = vstv %s10
  %20 = vst [vmem:[#allocation2] sm:$0x1] %v19
  %v21 = vstv %s13
  %22 = vst [vmem:[#allocation3] sm:$0x1] %v21
  // Predicated region
  $region2: #{hgat_forward.4} parent=0 // pred_check
    _
  $region3: #{hgat_forward.4} parent=0 // pred_check_branch
    %24 = sbr.rel (0) target = $region5
  $region4: #{hgat_forward.4} parent=0 // pred_region
    _
  $region5: #{hgat_forward.4} parent=0 // pred_fallthru
    _
  // Predicated region
  $region6: #{hgat_forward.4} parent=0 // pred_check
    _
  $region7: #{hgat_forward.4} parent=0 // pred_check_branch
    %26 = sbr.rel (0) target = $region9
  $region8: #{hgat_forward.4} parent=0 // pred_region
    _
  $region9: #{hgat_forward.4} parent=0 // pred_fallthru
    _
  // Predicated region
  $region10: #{hgat_forward.4} parent=0 // pred_check
    _
  $region11: #{hgat_forward.4} parent=0 // pred_check_branch
    %28 = sbr.rel (0) target = $region13
  $region12: #{hgat_forward.4} parent=0 // pred_region
    _
  $region13: #{hgat_forward.4} parent=0 // pred_fallthru
    _
  // Predicated region
  $region14: #{hgat_forward.4} parent=0 // pred_check
    _
  $region15: #{hgat_forward.4} parent=0 // pred_check_branch
    %30 = sbr.rel (0) target = $region17
  $region16: #{hgat_forward.4} parent=0 // pred_region
    _
  $region17: #{hgat_forward.4} parent=0 // pred_fallthru
    _
  // Predicated region
  $region18: #{hgat_forward.4} parent=0 // pred_check
    _
  $region19: #{hgat_forward.4} parent=0 // pred_check_branch
    %32 = sbr.rel (0) target = $region21
  $region20: #{hgat_forward.4} parent=0 // pred_region
    _
  $region21: #{hgat_forward.4} parent=0 // pred_fallthru
    _
  // Predicated region
  $region22: #{hgat_forward.4} parent=0 // pred_check
    _
  $region23: #{hgat_forward.4} parent=0 // pred_check_branch
    %34 = sbr.rel (0) target = $region25
  $region24: #{hgat_forward.4} parent=0 // pred_region
    _
  $region25: #{hgat_forward.4} parent=0 // pred_fallthru
    _
  // Predicated region
  $region26: #{hgat_forward.4} parent=0 // pred_check
    _
  $region27: #{hgat_forward.4} parent=0 // pred_check_branch
    %36 = sbr.rel (0) target = $region29
  $region28: #{hgat_forward.4} parent=0 // pred_region
    _
  $region29: #{hgat_forward.4} parent=0 // pred_fallthru
    _
  // Predicated region
  $region30: #{hgat_forward.4} parent=0 // pred_check
    _
  $region31: #{hgat_forward.4} parent=0 // pred_check_branch
    %38 = sbr.rel (0) target = $region33
  $region32: #{hgat_forward.4} parent=0 // pred_region
    _
  $region33: #{hgat_forward.4} parent=0 // pred_fallthru
    _
  // Predicated region
  $region34: #{hgat_forward.4} parent=0 // pred_check
    _
  $region35: #{hgat_forward.4} parent=0 // pred_check_branch
    %40 = sbr.rel (0) target = $region37
  $region36: #{hgat_forward.4} parent=0 // pred_region
    _
  $region37: #{hgat_forward.4} parent=0 // pred_fallthru
    _
  // Predicated region
  $region38: #{hgat_forward.4} parent=0 // pred_check
    _
  $region39: #{hgat_forward.4} parent=0 // pred_check_branch
    %42 = sbr.rel (0) target = $region41
  $region40: #{hgat_forward.4} parent=0 // pred_region
    _
  $region41: #{hgat_forward.4} parent=0 // pred_fallthru
    _
  // Predicated region
  $region42: #{hgat_forward.4} parent=0 // pred_check
    _
  $region43: #{hgat_forward.4} parent=0 // pred_check_branch
    %44 = sbr.rel (0) target = $region45
  $region44: #{hgat_forward.4} parent=0 // pred_region
    _
  $region45: #{hgat_forward.4} parent=0 // pred_fallthru
    _
  // Predicated region
  $region46: #{hgat_forward.4} parent=0 // pred_check
    _
  $region47: #{hgat_forward.4} parent=0 // pred_check_branch
    %46 = sbr.rel (0) target = $region49
  $region48: #{hgat_forward.4} parent=0 // pred_region
    _
  $region49: #{hgat_forward.4} parent=0 // pred_fallthru
    _
  // Predicated region
  $region50: #{hgat_forward.4} parent=0 // pred_check
    _
  $region51: #{hgat_forward.4} parent=0 // pred_check_branch
    %48 = sbr.rel (0) target = $region53
  $region52: #{hgat_forward.4} parent=0 // pred_region
    _
  $region53: #{hgat_forward.4} parent=0 // pred_fallthru
    _
  // Predicated region
  $region54: #{hgat_forward.4} parent=0 // pred_check
    _
  $region55: #{hgat_forward.4} parent=0 // pred_check_branch
    %50 = sbr.rel (0) target = $region57
  $region56: #{hgat_forward.4} parent=0 // pred_region
    _
  $region57: #{hgat_forward.4} parent=0 // pred_fallthru
    _
  %v51 = vld [vmem:[%s0] sm:$0xff]
  %v52 = vld [vmem:[%s0 + $0x8] sm:$0xff]
  %v53 = vld [vmem:[%s1] sm:$0xf]
  %v54 = vld [vmem:[%s2] sm:$0xff]
  %v55 = vld [vmem:[%s2 + $0x8] sm:$0xff]
  %v56 = vld [vmem:[%s2 + $0x10] sm:$0xff]
  %v57 = vld [vmem:[%s2 + $0x18] sm:$0xff]
  %v58 = vld [vmem:[%s3] sm:$0x1]
  %v60 = vlaneseq
  %v61 = vshrl.u32 %v60, 7
  %v62 = vsub.s32 0, %v61
  %v63 = vrot.slane %v58, %v62
  %vm65 = vcmask 261120
  %v67 = vsel %vm65, %v51, 0
  %v70 = vsel %vm65, %v52, 0
  %v73 = vsel %vm65, %v54, 0
  %v76 = vsel %vm65, %v55, 0
  %v79 = vsel %vm65, %v56, 0
  %v82 = vsel %vm65, %v57, 0
  %84 = vmatprep.subr.mxu0 0.0
  %85 = vmatpush1.xpose.msra.mxu0 %v73
  %86 = vmatprep.subr.mxu0 0.0
  %87 = vmatpush1.xpose.msra.mxu0 %v76
  %88 = vmatprep.subr.mxu0 0.0
  %89 = vmatpush1.xpose.msra.mxu0 %v79
  %90 = vmatprep.subr.mxu0 0.0
  %91 = vmatpush1.xpose.msra.mxu0 %v82
  %92 = vmatprep.subr.mxu0 0.0
  %93 = vmatpush1.xpose.msra.mxu0 0.0
  %94 = vmatprep.subr.mxu0 0.0
  %95 = vmatpush1.xpose.msra.mxu0 0.0
  %96 = vmatprep.subr.mxu0 0.0
  %97 = vmatpush1.xpose.msra.mxu0 0.0
  %98 = vmatprep.subr.mxu0 0.0
  %99 = vmatpush1.xpose.msra.mxu0 0.0
  %100 = vmatprep.subr.mxu0 0.0
  %101 = vmatpush1.xpose.msra.mxu0 0.0
  %102 = vmatprep.subr.mxu0 0.0
  %103 = vmatpush1.xpose.msra.mxu0 0.0
  %104 = vmatprep.subr.mxu0 0.0
  %105 = vmatpush1.xpose.msra.mxu0 0.0
  %106 = vmatprep.subr.mxu0 0.0
  %107 = vmatpush1.xpose.msra.mxu0 0.0
  %108 = vmatprep.subr.mxu0 0.0
  %109 = vmatpush1.xpose.msra.mxu0 0.0
  %110 = vmatprep.subr.mxu0 0.0
  %111 = vmatpush1.xpose.msra.mxu0 0.0
  %112 = vmatprep.subr.mxu0 0.0
  %113 = vmatpush1.xpose.msra.mxu0 0.0
  %114 = vmatprep.subr.mxu0 0.0
  %115 = vmatpush1.xpose.msra.mxu0 0.0
  %116 = vmatprep.subr.mxu0 0.0
  %117 = vmatpush1.xpose.msra.mxu0 0.0
  %118 = vmatprep.subr.mxu0 0.0
  %119 = vmatpush1.xpose.msra.mxu0 0.0
  %120 = vmatprep.subr.mxu0 0.0
  %121 = vmatpush1.xpose.msra.mxu0 0.0
  %122 = vmatprep.subr.mxu0 0.0
  %123 = vmatpush1.xpose.msra.mxu0 0.0
  %124 = vmatprep.subr.mxu0 0.0
  %125 = vmatpush1.xpose.msra.mxu0 0.0
  %126 = vmatprep.subr.mxu0 0.0
  %127 = vmatpush1.xpose.msra.mxu0 0.0
  %128 = vmatprep.subr.mxu0 0.0
  %129 = vmatpush1.xpose.msra.mxu0 0.0
  %130 = vmatprep.subr.mxu0 0.0
  %131 = vmatpush1.xpose.msra.mxu0 0.0
  %132 = vmatprep.subr.mxu0 0.0
  %133 = vmatpush1.xpose.msra.mxu0 0.0
  %134 = vmatprep.subr.mxu0 0.0
  %135 = vmatpush1.xpose.msra.mxu0 0.0
  %136 = vmatprep.subr.mxu0 0.0
  %137 = vmatpush1.xpose.msra.mxu0 0.0
  %138 = vmatprep.subr.mxu0 0.0
  %139 = vmatpush1.xpose.msra.mxu0 0.0
  %140 = vmatprep.subr.mxu0 0.0
  %141 = vmatpush1.xpose.msra.mxu0 0.0
  %142 = vmatprep.subr.mxu0 0.0
  %143 = vmatpush1.xpose.msra.mxu0 0.0
  %144 = vmatprep.subr.mxu0 0.0
  %145 = vmatpush1.xpose.msra.mxu0 0.0
  %146 = vmatprep.subr.mxu0 0.0
  %147 = vmatpush1.xpose.msra.mxu0 0.0
  %148 = vmatprep.mubr.f32.mxu0 0.0
  %149 = vmatmul.mubr.f32.gmra.mrb[0].mxu0 %v67
  %v150 = vpop.f32.mrb[0].mxu0
  %v151 = vadd.f32 %v63, %v150
  %v152 = vpop.f32.mrb[0].mxu0
  %153 = vmatprep.mubr.f32.mxu0 0.0
  %154 = vmatmul.mubr.f32.gmra.mrb[0].mxu0 %v70
  %v155 = vpop.f32.mrb[0].mxu0
  %v156 = vadd.f32 %v63, %v155
  %v157 = vpop.f32.mrb[0].mxu0
  %158 = vdwg.mxu0
  %v159 = vld [vmem:[%s4] sm:$0xff]
  %v160 = vld [vmem:[%s4 + $0x8] sm:$0xff]
  %v161 = vld [vmem:[%s4 + $0x10] sm:$0xff]
  %v162 = vld [vmem:[%s4 + $0x18] sm:$0xff]
  %v163 = vld [vmem:[%s5] sm:$0x1]
  %v165 = vlaneseq
  %v166 = vshrl.u32 %v165, 7
  %v167 = vsub.s32 0, %v166
  %v168 = vrot.slane %v163, %v167
  %v171 = vsel %vm65, %v53, 0
  %v174 = vsel %vm65, %v159, 0
  %v177 = vsel %vm65, %v160, 0
  %v180 = vsel %vm65, %v161, 0
  %v183 = vsel %vm65, %v162, 0
  %185 = vmatprep.subr.mxu0 0.0
  %186 = vmatpush1.xpose.msra.mxu0 %v174
  %187 = vmatprep.subr.mxu0 0.0
  %188 = vmatpush1.xpose.msra.mxu0 %v177
  %189 = vmatprep.subr.mxu0 0.0
  %190 = vmatpush1.xpose.msra.mxu0 %v180
  %191 = vmatprep.subr.mxu0 0.0
  %192 = vmatpush1.xpose.msra.mxu0 %v183
  %193 = vmatprep.subr.mxu0 0.0
  %194 = vmatpush1.xpose.msra.mxu0 0.0
  %195 = vmatprep.subr.mxu0 0.0
  %196 = vmatpush1.xpose.msra.mxu0 0.0
  %197 = vmatprep.subr.mxu0 0.0
  %198 = vmatpush1.xpose.msra.mxu0 0.0
  %199 = vmatprep.subr.mxu0 0.0
  %200 = vmatpush1.xpose.msra.mxu0 0.0
  %201 = vmatprep.subr.mxu0 0.0
  %202 = vmatpush1.xpose.msra.mxu0 0.0
  %203 = vmatprep.subr.mxu0 0.0
  %204 = vmatpush1.xpose.msra.mxu0 0.0
  %205 = vmatprep.subr.mxu0 0.0
  %206 = vmatpush1.xpose.msra.mxu0 0.0
  %207 = vmatprep.subr.mxu0 0.0
  %208 = vmatpush1.xpose.msra.mxu0 0.0
  %209 = vmatprep.subr.mxu0 0.0
  %210 = vmatpush1.xpose.msra.mxu0 0.0
  %211 = vmatprep.subr.mxu0 0.0
  %212 = vmatpush1.xpose.msra.mxu0 0.0
  %213 = vmatprep.subr.mxu0 0.0
  %214 = vmatpush1.xpose.msra.mxu0 0.0
  %215 = vmatprep.subr.mxu0 0.0
  %216 = vmatpush1.xpose.msra.mxu0 0.0
  %217 = vmatprep.subr.mxu0 0.0
  %218 = vmatpush1.xpose.msra.mxu0 0.0
  %219 = vmatprep.subr.mxu0 0.0
  %220 = vmatpush1.xpose.msra.mxu0 0.0
  %221 = vmatprep.subr.mxu0 0.0
  %222 = vmatpush1.xpose.msra.mxu0 0.0
  %223 = vmatprep.subr.mxu0 0.0
  %224 = vmatpush1.xpose.msra.mxu0 0.0
  %225 = vmatprep.subr.mxu0 0.0
  %226 = vmatpush1.xpose.msra.mxu0 0.0
  %227 = vmatprep.subr.mxu0 0.0
  %228 = vmatpush1.xpose.msra.mxu0 0.0
  %229 = vmatprep.subr.mxu0 0.0
  %230 = vmatpush1.xpose.msra.mxu0 0.0
  %231 = vmatprep.subr.mxu0 0.0
  %232 = vmatpush1.xpose.msra.mxu0 0.0
  %233 = vmatprep.subr.mxu0 0.0
  %234 = vmatpush1.xpose.msra.mxu0 0.0
  %235 = vmatprep.subr.mxu0 0.0
  %236 = vmatpush1.xpose.msra.mxu0 0.0
  %237 = vmatprep.subr.mxu0 0.0
  %238 = vmatpush1.xpose.msra.mxu0 0.0
  %239 = vmatprep.subr.mxu0 0.0
  %240 = vmatpush1.xpose.msra.mxu0 0.0
  %241 = vmatprep.subr.mxu0 0.0
  %242 = vmatpush1.xpose.msra.mxu0 0.0
  %243 = vmatprep.subr.mxu0 0.0
  %244 = vmatpush1.xpose.msra.mxu0 0.0
  %245 = vmatprep.subr.mxu0 0.0
  %246 = vmatpush1.xpose.msra.mxu0 0.0
  %247 = vmatprep.subr.mxu0 0.0
  %248 = vmatpush1.xpose.msra.mxu0 0.0
  %249 = vmatprep.mubr.f32.mxu0 0.0
  %250 = vmatmul.mubr.f32.gmra.mrb[0].mxu0 %v171
  %v251 = vpop.f32.mrb[0].mxu0
  %v252 = vadd.f32 %v168, %v251
  %v253 = vpop.f32.mrb[0].mxu0
  %254 = vdwg.mxu0
  %v255 = vld [vmem:[%s6] sm:$0xff]
  %v256 = vld [vmem:[%s6 + $0x8] sm:$0xff]
  %v257 = vld [vmem:[%s6 + $0x10] sm:$0xff]
  %v258 = vld [vmem:[%s6 + $0x18] sm:$0xff]
  %v259 = vld [vmem:[%s7] sm:$0x1]
  %v261 = vlaneseq
  %v262 = vshrl.u32 %v261, 7
  %v263 = vsub.s32 0, %v262
  %v264 = vrot.slane %v259, %v263
  %v267 = vsel %vm65, %v255, 0
  %v270 = vsel %vm65, %v256, 0
  %v273 = vsel %vm65, %v257, 0
  %v276 = vsel %vm65, %v258, 0
  %278 = vmatprep.subr.mxu0 0.0
  %279 = vmatpush1.xpose.msra.mxu0 %v267
  %280 = vmatprep.subr.mxu0 0.0
  %281 = vmatpush1.xpose.msra.mxu0 %v270
  %282 = vmatprep.subr.mxu0 0.0
  %283 = vmatpush1.xpose.msra.mxu0 %v273
  %284 = vmatprep.subr.mxu0 0.0
  %285 = vmatpush1.xpose.msra.mxu0 %v276
  %286 = vmatprep.subr.mxu0 0.0
  %287 = vmatpush1.xpose.msra.mxu0 0.0
  %288 = vmatprep.subr.mxu0 0.0
  %289 = vmatpush1.xpose.msra.mxu0 0.0
  %290 = vmatprep.subr.mxu0 0.0
  %291 = vmatpush1.xpose.msra.mxu0 0.0
  %292 = vmatprep.subr.mxu0 0.0
  %293 = vmatpush1.xpose.msra.mxu0 0.0
  %294 = vmatprep.subr.mxu0 0.0
  %295 = vmatpush1.xpose.msra.mxu0 0.0
  %296 = vmatprep.subr.mxu0 0.0
  %297 = vmatpush1.xpose.msra.mxu0 0.0
  %298 = vmatprep.subr.mxu0 0.0
  %299 = vmatpush1.xpose.msra.mxu0 0.0
  %300 = vmatprep.subr.mxu0 0.0
  %301 = vmatpush1.xpose.msra.mxu0 0.0
  %302 = vmatprep.subr.mxu0 0.0
  %303 = vmatpush1.xpose.msra.mxu0 0.0
  %304 = vmatprep.subr.mxu0 0.0
  %305 = vmatpush1.xpose.msra.mxu0 0.0
  %306 = vmatprep.subr.mxu0 0.0
  %307 = vmatpush1.xpose.msra.mxu0 0.0
  %308 = vmatprep.subr.mxu0 0.0
  %309 = vmatpush1.xpose.msra.mxu0 0.0
  %310 = vmatprep.subr.mxu0 0.0
  %311 = vmatpush1.xpose.msra.mxu0 0.0
  %312 = vmatprep.subr.mxu0 0.0
  %313 = vmatpush1.xpose.msra.mxu0 0.0
  %314 = vmatprep.subr.mxu0 0.0
  %315 = vmatpush1.xpose.msra.mxu0 0.0
  %316 = vmatprep.subr.mxu0 0.0
  %317 = vmatpush1.xpose.msra.mxu0 0.0
  %318 = vmatprep.subr.mxu0 0.0
  %319 = vmatpush1.xpose.msra.mxu0 0.0
  %320 = vmatprep.subr.mxu0 0.0
  %321 = vmatpush1.xpose.msra.mxu0 0.0
  %322 = vmatprep.subr.mxu0 0.0
  %323 = vmatpush1.xpose.msra.mxu0 0.0
  %324 = vmatprep.subr.mxu0 0.0
  %325 = vmatpush1.xpose.msra.mxu0 0.0
  %326 = vmatprep.subr.mxu0 0.0
  %327 = vmatpush1.xpose.msra.mxu0 0.0
  %328 = vmatprep.subr.mxu0 0.0
  %329 = vmatpush1.xpose.msra.mxu0 0.0
  %330 = vmatprep.subr.mxu0 0.0
  %331 = vmatpush1.xpose.msra.mxu0 0.0
  %332 = vmatprep.subr.mxu0 0.0
  %333 = vmatpush1.xpose.msra.mxu0 0.0
  %334 = vmatprep.subr.mxu0 0.0
  %335 = vmatpush1.xpose.msra.mxu0 0.0
  %336 = vmatprep.subr.mxu0 0.0
  %337 = vmatpush1.xpose.msra.mxu0 0.0
  %338 = vmatprep.subr.mxu0 0.0
  %339 = vmatpush1.xpose.msra.mxu0 0.0
  %340 = vmatprep.subr.mxu0 0.0
  %341 = vmatpush1.xpose.msra.mxu0 0.0
  %342 = vmatprep.mubr.f32.mxu0 0.0
  %343 = vmatmul.mubr.f32.gmra.mrb[0].mxu0 %v171
  %v344 = vpop.f32.mrb[0].mxu0
  %v345 = vadd.f32 %v264, %v344
  %v346 = vpop.f32.mrb[0].mxu0
  %347 = vdwg.mxu0
  %v348 = vld [vmem:[%s8] sm:$0x1]
  %v350 = vlaneseq
  %v351 = vshrl.u32 %v350, 7
  %v352 = vsub.s32 0, %v351
  %v353 = vrot.slane %v348, %v352
  %v355 = vmul.f32 %v151, %v353
  %v356 = vmul.f32 %v156, %v353
  %v357 = vsel %vm65, %v355, 0.0
  %358 = vadd.xlane.f32.xlu0 %v357
  %v359 = vpop.xlane.xlu0 %358
  %v360 = vsel %vm65, %v356, 0.0
  %361 = vadd.xlane.f32.xlu0 %v360
  %v362 = vpop.xlane.xlu0 %361
  %v363 = vld [vmem:[%s9] sm:$0x1]
  %v365 = vlaneseq
  %v366 = vshrl.u32 %v365, 7
  %v367 = vsub.s32 0, %v366
  %v368 = vrot.slane %v363, %v367
  %v370 = vmul.f32 %v252, %v368
  %vm371 = vcmask 257024
  %v372 = vsel %vm371, %v370, 0.0
  %373 = vadd.xlane.f32.xlu0 %v372
  %v374 = vpop.xlane.xlu0 %373
  %v376 = vlaneseq
  %v377 = vand.u32 %v376, 127
  %v378 = vlaneseq
  %v379 = vshrl.u32 %v378, 7
  %v380 = vsub.s32 %v377, %v379
  %v381 = vrot.slane %v374, %v380
  %vm382 = vcmask 1042434
  %v383 = vsel %vm382, %v381, %v381
  %vm384 = vcmask 1043459
  %v385 = vsel %vm384, %v381, %v383
  %vm386 = vcmask 1044484
  %v387 = vsel %vm386, %v381, %v385
  %vm388 = vcmask 1045509
  %v389 = vsel %vm388, %v381, %v387
  %vm390 = vcmask 1046534
  %v391 = vsel %vm390, %v381, %v389
  %vm392 = vcmask 1047559
  %v393 = vsel %vm392, %v381, %v391
  %v395 = vadd.f32 %v359, %v393
  %v396 = vadd.f32 %v362, %v393
  %v397 = vld [vmem:[#allocation2] sm:$0x1]
  %v399 = vlaneseq
  %v400 = vshrl.u32 %v399, 7
  %v401 = vsub.s32 0, %v400
  %v402 = vrot.slane %v397, %v401
  %403 = vset.pattern.permute.xlu0 0
  %404 = vperm.xlu0 %403, %v402
  %v405 = vpop.permute.xlu0 %404
  %v407 = vadd.f32 %v395, %v405
  %v408 = vadd.f32 %v396, %v405
  %vm409 = vcmask 31744
  %v410 = vsel %vm409, %v407, -inf
  %411 = vmax.xlane.f32.xlu0 %v410
  %v412 = vpop.xlane.xlu0 %411
  %v413 = vsel %vm409, %v408, -inf
  %414 = vmax.xlane.f32.xlu0 %v413
  %v415 = vpop.xlane.xlu0 %414
  %v416 = vsub.f32 %v407, %v412
  %v417 = vsub.f32 %v408, %v415
  %v418 = vmul.f32 %v416, 1.442695
  %v419 = vpow.pop %v418
  %v420 = vmul.f32 %v417, 1.442695
  %v421 = vpow.pop %v420
  %v422 = vsel %vm409, %v419, 0.0
  %423 = vadd.xlane.f32.xlu0 %v422
  %v424 = vpop.xlane.xlu0 %423
  %v425 = vsel %vm409, %v421, 0.0
  %426 = vadd.xlane.f32.xlu0 %v425
  %v427 = vpop.xlane.xlu0 %426
  %v428 = vrcp.pop %v424
  %v429 = vrcp.pop %v427
  %v430 = vmul.f32 %v424, %v428
  %v431 = vmul.f32 %v427, %v429
  %v432 = vsub.f32 2.0, %v430
  %v433 = vsub.f32 2.0, %v431
  %v434 = vmul.f32 %v428, %v432
  %v435 = vmul.f32 %v429, %v433
  %v436 = vmul.f32 %v419, %v434
  %v437 = vmul.f32 %v421, %v435
  %v439 = vsel %vm409, %v436, 0
  %v442 = vsel %vm409, %v437, 0
  %vm444 = vcmask 1043456
  %v446 = vsel %vm444, %v345, 0
  %448 = vmatprep.subr.mxu0 0.0
  %449 = vmatpush1.msra.mxu0 %v446
  %450 = vmatprep.subr.mxu0 0.0
  %451 = vmatpush1.msra.mxu0 0.0
  %452 = vmatprep.subr.mxu0 0.0
  %453 = vmatpush1.msra.mxu0 0.0
  %454 = vmatprep.subr.mxu0 0.0
  %455 = vmatpush1.msra.mxu0 0.0
  %456 = vmatprep.subr.mxu0 0.0
  %457 = vmatpush1.msra.mxu0 0.0
  %458 = vmatprep.subr.mxu0 0.0
  %459 = vmatpush1.msra.mxu0 0.0
  %460 = vmatprep.subr.mxu0 0.0
  %461 = vmatpush1.msra.mxu0 0.0
  %462 = vmatprep.subr.mxu0 0.0
  %463 = vmatpush1.msra.mxu0 0.0
  %464 = vmatprep.subr.mxu0 0.0
  %465 = vmatpush1.msra.mxu0 0.0
  %466 = vmatprep.subr.mxu0 0.0
  %467 = vmatpush1.msra.mxu0 0.0
  %468 = vmatprep.subr.mxu0 0.0
  %469 = vmatpush1.msra.mxu0 0.0
  %470 = vmatprep.subr.mxu0 0.0
  %471 = vmatpush1.msra.mxu0 0.0
  %472 = vmatprep.subr.mxu0 0.0
  %473 = vmatpush1.msra.mxu0 0.0
  %474 = vmatprep.subr.mxu0 0.0
  %475 = vmatpush1.msra.mxu0 0.0
  %476 = vmatprep.subr.mxu0 0.0
  %477 = vmatpush1.msra.mxu0 0.0
  %478 = vmatprep.subr.mxu0 0.0
  %479 = vmatpush1.msra.mxu0 0.0
  %480 = vmatprep.subr.mxu0 0.0
  %481 = vmatpush1.msra.mxu0 0.0
  %482 = vmatprep.subr.mxu0 0.0
  %483 = vmatpush1.msra.mxu0 0.0
  %484 = vmatprep.subr.mxu0 0.0
  %485 = vmatpush1.msra.mxu0 0.0
  %486 = vmatprep.subr.mxu0 0.0
  %487 = vmatpush1.msra.mxu0 0.0
  %488 = vmatprep.subr.mxu0 0.0
  %489 = vmatpush1.msra.mxu0 0.0
  %490 = vmatprep.subr.mxu0 0.0
  %491 = vmatpush1.msra.mxu0 0.0
  %492 = vmatprep.subr.mxu0 0.0
  %493 = vmatpush1.msra.mxu0 0.0
  %494 = vmatprep.subr.mxu0 0.0
  %495 = vmatpush1.msra.mxu0 0.0
  %496 = vmatprep.subr.mxu0 0.0
  %497 = vmatpush1.msra.mxu0 0.0
  %498 = vmatprep.subr.mxu0 0.0
  %499 = vmatpush1.msra.mxu0 0.0
  %500 = vmatprep.subr.mxu0 0.0
  %501 = vmatpush1.msra.mxu0 0.0
  %502 = vmatprep.subr.mxu0 0.0
  %503 = vmatpush1.msra.mxu0 0.0
  %504 = vmatprep.subr.mxu0 0.0
  %505 = vmatpush1.msra.mxu0 0.0
  %506 = vmatprep.subr.mxu0 0.0
  %507 = vmatpush1.msra.mxu0 0.0
  %508 = vmatprep.subr.mxu0 0.0
  %509 = vmatpush1.msra.mxu0 0.0
  %510 = vmatprep.subr.mxu0 0.0
  %511 = vmatpush1.msra.mxu0 0.0
  %512 = vmatprep.mubr.f32.mxu0 0.0
  %513 = vmatmul.mubr.f32.gmra.mrb[0].mxu0 %v439
  %v514 = vpop.f32.mrb[0].mxu0
  %v515 = vadd.f32 0.0, %v514
  %v516 = vpop.f32.mrb[0].mxu0
  %517 = vmatprep.mubr.f32.mxu0 0.0
  %518 = vmatmul.mubr.f32.gmra.mrb[0].mxu0 %v442
  %v519 = vpop.f32.mrb[0].mxu0
  %v520 = vadd.f32 0.0, %v519
  %v521 = vpop.f32.mrb[0].mxu0
  %522 = vdwg.mxu0
  %v523 = vadd.f32 %v515, %v51
  %v524 = vadd.f32 %v520, %v52
  %v525 = vld [vmem:[%s11] sm:$0x1]
  %v527 = vlaneseq
  %v528 = vshrl.u32 %v527, 7
  %v529 = vsub.s32 0, %v528
  %v530 = vrot.slane %v525, %v529
  %v532 = vmul.f32 %v523, %v530
  %v533 = vmul.f32 %v524, %v530
  %v534 = vsel %vm65, %v532, 0.0
  %535 = vadd.xlane.f32.xlu0 %v534
  %v536 = vpop.xlane.xlu0 %535
  %v537 = vsel %vm65, %v533, 0.0
  %538 = vadd.xlane.f32.xlu0 %v537
  %v539 = vpop.xlane.xlu0 %538
  %v540 = vld [vmem:[%s12] sm:$0x1]
  %v542 = vlaneseq
  %v543 = vshrl.u32 %v542, 7
  %v544 = vsub.s32 0, %v543
  %v545 = vrot.slane %v540, %v544
  %v547 = vmul.f32 %v51, %v545
  %v548 = vmul.f32 %v52, %v545
  %v549 = vsel %vm65, %v547, 0.0
  %550 = vadd.xlane.f32.xlu0 %v549
  %v551 = vpop.xlane.xlu0 %550
  %v552 = vsel %vm65, %v548, 0.0
  %553 = vadd.xlane.f32.xlu0 %v552
  %v554 = vpop.xlane.xlu0 %553
  %v555 = vadd.f32 %v536, %v551
  %v556 = vadd.f32 %v539, %v554
  %v557 = vld [vmem:[#allocation3] sm:$0x1]
  %v559 = vlaneseq
  %v560 = vshrl.u32 %v559, 7
  %v561 = vsub.s32 0, %v560
  %v562 = vrot.slane %v557, %v561
  %v564 = vadd.f32 %v555, %v562
  %v565 = vadd.f32 %v556, %v562
  %v566 = vmul.f32 %v564, 0.5
  %v567 = vmul.f32 %v565, 0.5
  %v568 = vtanh.pop %v566
  %v569 = vtanh.pop %v567
  %v570 = vadd.f32 %v568, 1.0
  %v571 = vadd.f32 %v569, 1.0
  %v572 = vmul.f32 %v570, 0.5
  %v573 = vmul.f32 %v571, 0.5
  %575 = vset.pattern.permute.xlu0 0
  %576 = vperm.xlu0 %575, %v572
  %v577 = vpop.permute.xlu0 %576
  %580 = vset.pattern.permute.xlu0 0
  %581 = vperm.xlu0 %580, %v573
  %v582 = vpop.permute.xlu0 %581
  %v584 = vmul.f32 %v577, %v523
  %v585 = vmul.f32 %v582, %v524
  %v586 = vsub.f32 1.0, %v572
  %v587 = vsub.f32 1.0, %v573
  %589 = vset.pattern.permute.xlu0 0
  %590 = vperm.xlu0 %589, %v586
  %v591 = vpop.permute.xlu0 %590
  %594 = vset.pattern.permute.xlu0 0
  %595 = vperm.xlu0 %594, %v587
  %v596 = vpop.permute.xlu0 %595
  %v598 = vmul.f32 %v591, %v51
  %v599 = vmul.f32 %v596, %v52
  %v600 = vadd.f32 %v584, %v598
  %v601 = vadd.f32 %v585, %v599
  %v602 = vadd.f32 %v600, %v51
  %v603 = vadd.f32 %v601, %v52
  %604 = vst.msk [vmem:[%s14] sm:$0xff] %vm65, %v602
  %605 = vst.msk [vmem:[%s14 + $0x8] sm:$0xff] %vm65, %v603
  // Predicated region
  $region58: #{hgat_forward.4} parent=0 // pred_check
    _
  $region59: #{hgat_forward.4} parent=0 // pred_check_branch
    %607 = sbr.rel (0) target = $region61
  $region60: #{hgat_forward.4} parent=0 // pred_region
    _
  $region61: #{hgat_forward.4} parent=0 // pred_fallthru
    _
  // Predicated region
  $region62: #{hgat_forward.4} parent=0 // pred_check
    _
  $region63: #{hgat_forward.4} parent=0 // pred_check_branch
    %609 = sbr.rel (0) target = $region65
  $region64: #{hgat_forward.4} parent=0 // pred_region
    _
  $region65: #{hgat_forward.4} parent=0 // pred_fallthru
    _

// kernel: hgat_forward.6
$region0: #{hgat_forward.6}
  #allocation0 [shape = 'u32[]', space=smem, size = 0x4, offset = 0x4, fixed_abs, tag = 'smem constant byte address 0x4 - core index']
  #allocation1 [shape = 'u32[144,128]{1,0:T(1,128)}', space=vmem, size = 0x12000, scoped, tag = 'internal scratch']
  #allocation2 [shape = 'f32[1,1]{1,0:T(1,128)S(1)}', space=vmem, size = 0x200, scoped, tag = 'scoped memory for hgat_forward.6']
  #allocation3 [shape = 'f32[1,1]{1,0:T(1,128)S(1)}', space=vmem, size = 0x200, scoped, tag = 'scoped memory for hgat_forward.6']
  %s0 = inlined_call_operand.vmem [shape: f32[2,8,32], index: 0, kind: input, shape index: {}]
  %s1 = inlined_call_operand.vmem [shape: f32[2,4,32], index: 1, kind: input, shape index: {}]
  %s2 = inlined_call_operand.vmem [shape: f32[32,32], index: 2, kind: input, shape index: {}]
  %s3 = inlined_call_operand.vmem [shape: f32[1,32], index: 3, kind: input, shape index: {}]
  %s4 = inlined_call_operand.vmem [shape: f32[32,32], index: 4, kind: input, shape index: {}]
  %s5 = inlined_call_operand.vmem [shape: f32[1,32], index: 5, kind: input, shape index: {}]
  %s6 = inlined_call_operand.vmem [shape: f32[32,32], index: 6, kind: input, shape index: {}]
  %s7 = inlined_call_operand.vmem [shape: f32[1,32], index: 7, kind: input, shape index: {}]
  %s8 = inlined_call_operand.vmem [shape: f32[1,32], index: 8, kind: input, shape index: {}]
  %s9 = inlined_call_operand.vmem [shape: f32[1,32], index: 9, kind: input, shape index: {}]
  %s10 = inlined_call_operand.<no memory space> [shape: f32[1,1], index: 10, kind: input, shape index: {}]
  %s11 = inlined_call_operand.vmem [shape: f32[1,32], index: 11, kind: input, shape index: {}]
  %s12 = inlined_call_operand.vmem [shape: f32[1,32], index: 12, kind: input, shape index: {}]
  %s13 = inlined_call_operand.<no memory space> [shape: f32[1,1], index: 13, kind: input, shape index: {}]
  %s14 = inlined_call_operand.vmem [shape: f32[2,8,32], index: 14, kind: output, shape index: {}]
  %s15 = sld [smem:[#allocation0]]
  $region66: #{hgat_forward.6} parent=0
    _
  %s17 = ssub.s32 1, %s15
  %s18 = scalar_select 0, %s17, %s15
  %v19 = vstv %s10
  %20 = vst [vmem:[#allocation2] sm:$0x1] %v19
  %v21 = vstv %s13
  %22 = vst [vmem:[#allocation3] sm:$0x1] %v21
  // Predicated region
  $region2: #{hgat_forward.6} parent=0 // pred_check
    _
  $region3: #{hgat_forward.6} parent=0 // pred_check_branch
    %24 = sbr.rel (0) target = $region5
  $region4: #{hgat_forward.6} parent=0 // pred_region
    _
  $region5: #{hgat_forward.6} parent=0 // pred_fallthru
    _
  // Predicated region
  $region6: #{hgat_forward.6} parent=0 // pred_check
    _
  $region7: #{hgat_forward.6} parent=0 // pred_check_branch
    %26 = sbr.rel (0) target = $region9
  $region8: #{hgat_forward.6} parent=0 // pred_region
    _
  $region9: #{hgat_forward.6} parent=0 // pred_fallthru
    _
  // Predicated region
  $region10: #{hgat_forward.6} parent=0 // pred_check
    _
  $region11: #{hgat_forward.6} parent=0 // pred_check_branch
    %28 = sbr.rel (0) target = $region13
  $region12: #{hgat_forward.6} parent=0 // pred_region
    _
  $region13: #{hgat_forward.6} parent=0 // pred_fallthru
    _
  // Predicated region
  $region14: #{hgat_forward.6} parent=0 // pred_check
    _
  $region15: #{hgat_forward.6} parent=0 // pred_check_branch
    %30 = sbr.rel (0) target = $region17
  $region16: #{hgat_forward.6} parent=0 // pred_region
    _
  $region17: #{hgat_forward.6} parent=0 // pred_fallthru
    _
  // Predicated region
  $region18: #{hgat_forward.6} parent=0 // pred_check
    _
  $region19: #{hgat_forward.6} parent=0 // pred_check_branch
    %32 = sbr.rel (0) target = $region21
  $region20: #{hgat_forward.6} parent=0 // pred_region
    _
  $region21: #{hgat_forward.6} parent=0 // pred_fallthru
    _
  // Predicated region
  $region22: #{hgat_forward.6} parent=0 // pred_check
    _
  $region23: #{hgat_forward.6} parent=0 // pred_check_branch
    %34 = sbr.rel (0) target = $region25
  $region24: #{hgat_forward.6} parent=0 // pred_region
    _
  $region25: #{hgat_forward.6} parent=0 // pred_fallthru
    _
  // Predicated region
  $region26: #{hgat_forward.6} parent=0 // pred_check
    _
  $region27: #{hgat_forward.6} parent=0 // pred_check_branch
    %36 = sbr.rel (0) target = $region29
  $region28: #{hgat_forward.6} parent=0 // pred_region
    _
  $region29: #{hgat_forward.6} parent=0 // pred_fallthru
    _
  // Predicated region
  $region30: #{hgat_forward.6} parent=0 // pred_check
    _
  $region31: #{hgat_forward.6} parent=0 // pred_check_branch
    %38 = sbr.rel (0) target = $region33
  $region32: #{hgat_forward.6} parent=0 // pred_region
    _
  $region33: #{hgat_forward.6} parent=0 // pred_fallthru
    _
  // Predicated region
  $region34: #{hgat_forward.6} parent=0 // pred_check
    _
  $region35: #{hgat_forward.6} parent=0 // pred_check_branch
    %40 = sbr.rel (0) target = $region37
  $region36: #{hgat_forward.6} parent=0 // pred_region
    _
  $region37: #{hgat_forward.6} parent=0 // pred_fallthru
    _
  // Predicated region
  $region38: #{hgat_forward.6} parent=0 // pred_check
    _
  $region39: #{hgat_forward.6} parent=0 // pred_check_branch
    %42 = sbr.rel (0) target = $region41
  $region40: #{hgat_forward.6} parent=0 // pred_region
    _
  $region41: #{hgat_forward.6} parent=0 // pred_fallthru
    _
  // Predicated region
  $region42: #{hgat_forward.6} parent=0 // pred_check
    _
  $region43: #{hgat_forward.6} parent=0 // pred_check_branch
    %44 = sbr.rel (0) target = $region45
  $region44: #{hgat_forward.6} parent=0 // pred_region
    _
  $region45: #{hgat_forward.6} parent=0 // pred_fallthru
    _
  // Predicated region
  $region46: #{hgat_forward.6} parent=0 // pred_check
    _
  $region47: #{hgat_forward.6} parent=0 // pred_check_branch
    %46 = sbr.rel (0) target = $region49
  $region48: #{hgat_forward.6} parent=0 // pred_region
    _
  $region49: #{hgat_forward.6} parent=0 // pred_fallthru
    _
  // Predicated region
  $region50: #{hgat_forward.6} parent=0 // pred_check
    _
  $region51: #{hgat_forward.6} parent=0 // pred_check_branch
    %48 = sbr.rel (0) target = $region53
  $region52: #{hgat_forward.6} parent=0 // pred_region
    _
  $region53: #{hgat_forward.6} parent=0 // pred_fallthru
    _
  // Predicated region
  $region54: #{hgat_forward.6} parent=0 // pred_check
    _
  $region55: #{hgat_forward.6} parent=0 // pred_check_branch
    %50 = sbr.rel (0) target = $region57
  $region56: #{hgat_forward.6} parent=0 // pred_region
    _
  $region57: #{hgat_forward.6} parent=0 // pred_fallthru
    _
  %v51 = vld [vmem:[%s0] sm:$0xff]
  %v52 = vld [vmem:[%s0 + $0x8] sm:$0xff]
  %v53 = vld [vmem:[%s1] sm:$0xf]
  %v54 = vld [vmem:[%s1 + $0x4] sm:$0xf]
  %v55 = vld [vmem:[%s2] sm:$0xff]
  %v56 = vld [vmem:[%s2 + $0x8] sm:$0xff]
  %v57 = vld [vmem:[%s2 + $0x10] sm:$0xff]
  %v58 = vld [vmem:[%s2 + $0x18] sm:$0xff]
  %v59 = vld [vmem:[%s3] sm:$0x1]
  %v61 = vlaneseq
  %v62 = vshrl.u32 %v61, 7
  %v63 = vsub.s32 0, %v62
  %v64 = vrot.slane %v59, %v63
  %vm66 = vcmask 261120
  %v68 = vsel %vm66, %v51, 0
  %v71 = vsel %vm66, %v52, 0
  %v74 = vsel %vm66, %v55, 0
  %v77 = vsel %vm66, %v56, 0
  %v80 = vsel %vm66, %v57, 0
  %v83 = vsel %vm66, %v58, 0
  %85 = vmatprep.subr.mxu0 0.0
  %86 = vmatpush1.xpose.msra.mxu0 %v74
  %87 = vmatprep.subr.mxu0 0.0
  %88 = vmatpush1.xpose.msra.mxu0 %v77
  %89 = vmatprep.subr.mxu0 0.0
  %90 = vmatpush1.xpose.msra.mxu0 %v80
  %91 = vmatprep.subr.mxu0 0.0
  %92 = vmatpush1.xpose.msra.mxu0 %v83
  %93 = vmatprep.subr.mxu0 0.0
  %94 = vmatpush1.xpose.msra.mxu0 0.0
  %95 = vmatprep.subr.mxu0 0.0
  %96 = vmatpush1.xpose.msra.mxu0 0.0
  %97 = vmatprep.subr.mxu0 0.0
  %98 = vmatpush1.xpose.msra.mxu0 0.0
  %99 = vmatprep.subr.mxu0 0.0
  %100 = vmatpush1.xpose.msra.mxu0 0.0
  %101 = vmatprep.subr.mxu0 0.0
  %102 = vmatpush1.xpose.msra.mxu0 0.0
  %103 = vmatprep.subr.mxu0 0.0
  %104 = vmatpush1.xpose.msra.mxu0 0.0
  %105 = vmatprep.subr.mxu0 0.0
  %106 = vmatpush1.xpose.msra.mxu0 0.0
  %107 = vmatprep.subr.mxu0 0.0
  %108 = vmatpush1.xpose.msra.mxu0 0.0
  %109 = vmatprep.subr.mxu0 0.0
  %110 = vmatpush1.xpose.msra.mxu0 0.0
  %111 = vmatprep.subr.mxu0 0.0
  %112 = vmatpush1.xpose.msra.mxu0 0.0
  %113 = vmatprep.subr.mxu0 0.0
  %114 = vmatpush1.xpose.msra.mxu0 0.0
  %115 = vmatprep.subr.mxu0 0.0
  %116 = vmatpush1.xpose.msra.mxu0 0.0
  %117 = vmatprep.subr.mxu0 0.0
  %118 = vmatpush1.xpose.msra.mxu0 0.0
  %119 = vmatprep.subr.mxu0 0.0
  %120 = vmatpush1.xpose.msra.mxu0 0.0
  %121 = vmatprep.subr.mxu0 0.0
  %122 = vmatpush1.xpose.msra.mxu0 0.0
  %123 = vmatprep.subr.mxu0 0.0
  %124 = vmatpush1.xpose.msra.mxu0 0.0
  %125 = vmatprep.subr.mxu0 0.0
  %126 = vmatpush1.xpose.msra.mxu0 0.0
  %127 = vmatprep.subr.mxu0 0.0
  %128 = vmatpush1.xpose.msra.mxu0 0.0
  %129 = vmatprep.subr.mxu0 0.0
  %130 = vmatpush1.xpose.msra.mxu0 0.0
  %131 = vmatprep.subr.mxu0 0.0
  %132 = vmatpush1.xpose.msra.mxu0 0.0
  %133 = vmatprep.subr.mxu0 0.0
  %134 = vmatpush1.xpose.msra.mxu0 0.0
  %135 = vmatprep.subr.mxu0 0.0
  %136 = vmatpush1.xpose.msra.mxu0 0.0
  %137 = vmatprep.subr.mxu0 0.0
  %138 = vmatpush1.xpose.msra.mxu0 0.0
  %139 = vmatprep.subr.mxu0 0.0
  %140 = vmatpush1.xpose.msra.mxu0 0.0
  %141 = vmatprep.subr.mxu0 0.0
  %142 = vmatpush1.xpose.msra.mxu0 0.0
  %143 = vmatprep.subr.mxu0 0.0
  %144 = vmatpush1.xpose.msra.mxu0 0.0
  %145 = vmatprep.subr.mxu0 0.0
  %146 = vmatpush1.xpose.msra.mxu0 0.0
  %147 = vmatprep.subr.mxu0 0.0
  %148 = vmatpush1.xpose.msra.mxu0 0.0
  %149 = vmatprep.mubr.f32.mxu0 0.0
  %150 = vmatmul.mubr.f32.gmra.mrb[0].mxu0 %v68
  %v151 = vpop.f32.mrb[0].mxu0
  %v152 = vadd.f32 %v64, %v151
  %v153 = vpop.f32.mrb[0].mxu0
  %154 = vmatprep.mubr.f32.mxu0 0.0
  %155 = vmatmul.mubr.f32.gmra.mrb[0].mxu0 %v71
  %v156 = vpop.f32.mrb[0].mxu0
  %v157 = vadd.f32 %v64, %v156
  %v158 = vpop.f32.mrb[0].mxu0
  %159 = vdwg.mxu0
  %v160 = vld [vmem:[%s4] sm:$0xff]
  %v161 = vld [vmem:[%s4 + $0x8] sm:$0xff]
  %v162 = vld [vmem:[%s4 + $0x10] sm:$0xff]
  %v163 = vld [vmem:[%s4 + $0x18] sm:$0xff]
  %v164 = vld [vmem:[%s5] sm:$0x1]
  %v166 = vlaneseq
  %v167 = vshrl.u32 %v166, 7
  %v168 = vsub.s32 0, %v167
  %v169 = vrot.slane %v164, %v168
  %v173 = vcombine.low %v53, %v54
  %v174 = vsel %vm66, %v173, 0
  %v177 = vsel %vm66, %v160, 0
  %v180 = vsel %vm66, %v161, 0
  %v183 = vsel %vm66, %v162, 0
  %v186 = vsel %vm66, %v163, 0
  %188 = vmatprep.subr.mxu0 0.0
  %189 = vmatpush1.xpose.msra.mxu0 %v177
  %190 = vmatprep.subr.mxu0 0.0
  %191 = vmatpush1.xpose.msra.mxu0 %v180
  %192 = vmatprep.subr.mxu0 0.0
  %193 = vmatpush1.xpose.msra.mxu0 %v183
  %194 = vmatprep.subr.mxu0 0.0
  %195 = vmatpush1.xpose.msra.mxu0 %v186
  %196 = vmatprep.subr.mxu0 0.0
  %197 = vmatpush1.xpose.msra.mxu0 0.0
  %198 = vmatprep.subr.mxu0 0.0
  %199 = vmatpush1.xpose.msra.mxu0 0.0
  %200 = vmatprep.subr.mxu0 0.0
  %201 = vmatpush1.xpose.msra.mxu0 0.0
  %202 = vmatprep.subr.mxu0 0.0
  %203 = vmatpush1.xpose.msra.mxu0 0.0
  %204 = vmatprep.subr.mxu0 0.0
  %205 = vmatpush1.xpose.msra.mxu0 0.0
  %206 = vmatprep.subr.mxu0 0.0
  %207 = vmatpush1.xpose.msra.mxu0 0.0
  %208 = vmatprep.subr.mxu0 0.0
  %209 = vmatpush1.xpose.msra.mxu0 0.0
  %210 = vmatprep.subr.mxu0 0.0
  %211 = vmatpush1.xpose.msra.mxu0 0.0
  %212 = vmatprep.subr.mxu0 0.0
  %213 = vmatpush1.xpose.msra.mxu0 0.0
  %214 = vmatprep.subr.mxu0 0.0
  %215 = vmatpush1.xpose.msra.mxu0 0.0
  %216 = vmatprep.subr.mxu0 0.0
  %217 = vmatpush1.xpose.msra.mxu0 0.0
  %218 = vmatprep.subr.mxu0 0.0
  %219 = vmatpush1.xpose.msra.mxu0 0.0
  %220 = vmatprep.subr.mxu0 0.0
  %221 = vmatpush1.xpose.msra.mxu0 0.0
  %222 = vmatprep.subr.mxu0 0.0
  %223 = vmatpush1.xpose.msra.mxu0 0.0
  %224 = vmatprep.subr.mxu0 0.0
  %225 = vmatpush1.xpose.msra.mxu0 0.0
  %226 = vmatprep.subr.mxu0 0.0
  %227 = vmatpush1.xpose.msra.mxu0 0.0
  %228 = vmatprep.subr.mxu0 0.0
  %229 = vmatpush1.xpose.msra.mxu0 0.0
  %230 = vmatprep.subr.mxu0 0.0
  %231 = vmatpush1.xpose.msra.mxu0 0.0
  %232 = vmatprep.subr.mxu0 0.0
  %233 = vmatpush1.xpose.msra.mxu0 0.0
  %234 = vmatprep.subr.mxu0 0.0
  %235 = vmatpush1.xpose.msra.mxu0 0.0
  %236 = vmatprep.subr.mxu0 0.0
  %237 = vmatpush1.xpose.msra.mxu0 0.0
  %238 = vmatprep.subr.mxu0 0.0
  %239 = vmatpush1.xpose.msra.mxu0 0.0
  %240 = vmatprep.subr.mxu0 0.0
  %241 = vmatpush1.xpose.msra.mxu0 0.0
  %242 = vmatprep.subr.mxu0 0.0
  %243 = vmatpush1.xpose.msra.mxu0 0.0
  %244 = vmatprep.subr.mxu0 0.0
  %245 = vmatpush1.xpose.msra.mxu0 0.0
  %246 = vmatprep.subr.mxu0 0.0
  %247 = vmatpush1.xpose.msra.mxu0 0.0
  %248 = vmatprep.subr.mxu0 0.0
  %249 = vmatpush1.xpose.msra.mxu0 0.0
  %250 = vmatprep.subr.mxu0 0.0
  %251 = vmatpush1.xpose.msra.mxu0 0.0
  %252 = vmatprep.mubr.f32.mxu0 0.0
  %253 = vmatmul.mubr.f32.gmra.mrb[0].mxu0 %v174
  %v254 = vpop.f32.mrb[0].mxu0
  %v255 = vadd.f32 %v169, %v254
  %v256 = vpop.f32.mrb[0].mxu0
  %257 = vdwg.mxu0
  %v259 = vcombine.high %v255, %v255
  %v261 = vld [vmem:[%s6] sm:$0xff]
  %v262 = vld [vmem:[%s6 + $0x8] sm:$0xff]
  %v263 = vld [vmem:[%s6 + $0x10] sm:$0xff]
  %v264 = vld [vmem:[%s6 + $0x18] sm:$0xff]
  %v265 = vld [vmem:[%s7] sm:$0x1]
  %v267 = vlaneseq
  %v268 = vshrl.u32 %v267, 7
  %v269 = vsub.s32 0, %v268
  %v270 = vrot.slane %v265, %v269
  %v273 = vsel %vm66, %v261, 0
  %v276 = vsel %vm66, %v262, 0
  %v279 = vsel %vm66, %v263, 0
  %v282 = vsel %vm66, %v264, 0
  %284 = vmatprep.subr.mxu0 0.0
  %285 = vmatpush1.xpose.msra.mxu0 %v273
  %286 = vmatprep.subr.mxu0 0.0
  %287 = vmatpush1.xpose.msra.mxu0 %v276
  %288 = vmatprep.subr.mxu0 0.0
  %289 = vmatpush1.xpose.msra.mxu0 %v279
  %290 = vmatprep.subr.mxu0 0.0
  %291 = vmatpush1.xpose.msra.mxu0 %v282
  %292 = vmatprep.subr.mxu0 0.0
  %293 = vmatpush1.xpose.msra.mxu0 0.0
  %294 = vmatprep.subr.mxu0 0.0
  %295 = vmatpush1.xpose.msra.mxu0 0.0
  %296 = vmatprep.subr.mxu0 0.0
  %297 = vmatpush1.xpose.msra.mxu0 0.0
  %298 = vmatprep.subr.mxu0 0.0
  %299 = vmatpush1.xpose.msra.mxu0 0.0
  %300 = vmatprep.subr.mxu0 0.0
  %301 = vmatpush1.xpose.msra.mxu0 0.0
  %302 = vmatprep.subr.mxu0 0.0
  %303 = vmatpush1.xpose.msra.mxu0 0.0
  %304 = vmatprep.subr.mxu0 0.0
  %305 = vmatpush1.xpose.msra.mxu0 0.0
  %306 = vmatprep.subr.mxu0 0.0
  %307 = vmatpush1.xpose.msra.mxu0 0.0
  %308 = vmatprep.subr.mxu0 0.0
  %309 = vmatpush1.xpose.msra.mxu0 0.0
  %310 = vmatprep.subr.mxu0 0.0
  %311 = vmatpush1.xpose.msra.mxu0 0.0
  %312 = vmatprep.subr.mxu0 0.0
  %313 = vmatpush1.xpose.msra.mxu0 0.0
  %314 = vmatprep.subr.mxu0 0.0
  %315 = vmatpush1.xpose.msra.mxu0 0.0
  %316 = vmatprep.subr.mxu0 0.0
  %317 = vmatpush1.xpose.msra.mxu0 0.0
  %318 = vmatprep.subr.mxu0 0.0
  %319 = vmatpush1.xpose.msra.mxu0 0.0
  %320 = vmatprep.subr.mxu0 0.0
  %321 = vmatpush1.xpose.msra.mxu0 0.0
  %322 = vmatprep.subr.mxu0 0.0
  %323 = vmatpush1.xpose.msra.mxu0 0.0
  %324 = vmatprep.subr.mxu0 0.0
  %325 = vmatpush1.xpose.msra.mxu0 0.0
  %326 = vmatprep.subr.mxu0 0.0
  %327 = vmatpush1.xpose.msra.mxu0 0.0
  %328 = vmatprep.subr.mxu0 0.0
  %329 = vmatpush1.xpose.msra.mxu0 0.0
  %330 = vmatprep.subr.mxu0 0.0
  %331 = vmatpush1.xpose.msra.mxu0 0.0
  %332 = vmatprep.subr.mxu0 0.0
  %333 = vmatpush1.xpose.msra.mxu0 0.0
  %334 = vmatprep.subr.mxu0 0.0
  %335 = vmatpush1.xpose.msra.mxu0 0.0
  %336 = vmatprep.subr.mxu0 0.0
  %337 = vmatpush1.xpose.msra.mxu0 0.0
  %338 = vmatprep.subr.mxu0 0.0
  %339 = vmatpush1.xpose.msra.mxu0 0.0
  %340 = vmatprep.subr.mxu0 0.0
  %341 = vmatpush1.xpose.msra.mxu0 0.0
  %342 = vmatprep.subr.mxu0 0.0
  %343 = vmatpush1.xpose.msra.mxu0 0.0
  %344 = vmatprep.subr.mxu0 0.0
  %345 = vmatpush1.xpose.msra.mxu0 0.0
  %346 = vmatprep.subr.mxu0 0.0
  %347 = vmatpush1.xpose.msra.mxu0 0.0
  %348 = vmatprep.mubr.f32.mxu0 0.0
  %349 = vmatmul.mubr.f32.gmra.mrb[0].mxu0 %v174
  %v350 = vpop.f32.mrb[0].mxu0
  %v351 = vadd.f32 %v270, %v350
  %v352 = vpop.f32.mrb[0].mxu0
  %353 = vdwg.mxu0
  %v355 = vcombine.high %v351, %v351
  %v356 = vld [vmem:[%s8] sm:$0x1]
  %v358 = vlaneseq
  %v359 = vshrl.u32 %v358, 7
  %v360 = vsub.s32 0, %v359
  %v361 = vrot.slane %v356, %v360
  %v363 = vmul.f32 %v152, %v361
  %v364 = vmul.f32 %v157, %v361
  %v365 = vsel %vm66, %v363, 0.0
  %366 = vadd.xlane.f32.xlu0 %v365
  %v367 = vpop.xlane.xlu0 %366
  %v368 = vsel %vm66, %v364, 0.0
  %369 = vadd.xlane.f32.xlu0 %v368
  %v370 = vpop.xlane.xlu0 %369
  %v371 = vld [vmem:[%s9] sm:$0x1]
  %v373 = vlaneseq
  %v374 = vshrl.u32 %v373, 7
  %v375 = vsub.s32 0, %v374
  %v376 = vrot.slane %v371, %v375
  %v378 = vmul.f32 %v255, %v376
  %v379 = vmul.f32 %v259, %v376
  %vm380 = vcmask 257024
  %v381 = vsel %vm380, %v378, 0.0
  %382 = vadd.xlane.f32.xlu0 %v381
  %v383 = vpop.xlane.xlu0 %382
  %v384 = vsel %vm380, %v379, 0.0
  %385 = vadd.xlane.f32.xlu0 %v384
  %v386 = vpop.xlane.xlu0 %385
  %v389 = vlaneseq
  %v390 = vand.u32 %v389, 127
  %v391 = vlaneseq
  %v392 = vshrl.u32 %v391, 7
  %v393 = vsub.s32 %v390, %v392
  %v394 = vrot.slane %v383, %v393
  %v395 = vlaneseq
  %v396 = vshrl.u32 %v395, 7
  %v397 = vsub.s32 %v390, %v396
  %v398 = vrot.slane %v386, %v397
  %vm399 = vcmask 1042434
  %v400 = vsel %vm399, %v394, %v394
  %vm401 = vcmask 1043459
  %v402 = vsel %vm401, %v394, %v400
  %vm403 = vcmask 1044484
  %v404 = vsel %vm403, %v394, %v402
  %vm405 = vcmask 1045509
  %v406 = vsel %vm405, %v394, %v404
  %vm407 = vcmask 1046534
  %v408 = vsel %vm407, %v394, %v406
  %vm409 = vcmask 1047559
  %v410 = vsel %vm409, %v394, %v408
  %v411 = vsel %vm399, %v398, %v398
  %v412 = vsel %vm401, %v398, %v411
  %v413 = vsel %vm403, %v398, %v412
  %v414 = vsel %vm405, %v398, %v413
  %v415 = vsel %vm407, %v398, %v414
  %v416 = vsel %vm409, %v398, %v415
  %v419 = vadd.f32 %v367, %v410
  %v420 = vadd.f32 %v370, %v416
  %v421 = vld [vmem:[#allocation2] sm:$0x1]
  %v423 = vlaneseq
  %v424 = vshrl.u32 %v423, 7
  %v425 = vsub.s32 0, %v424
  %v426 = vrot.slane %v421, %v425
  %427 = vset.pattern.permute.xlu0 0
  %428 = vperm.xlu0 %427, %v426
  %v429 = vpop.permute.xlu0 %428
  %v431 = vadd.f32 %v419, %v429
  %v432 = vadd.f32 %v420, %v429
  %vm433 = vcmask 31744
  %v434 = vsel %vm433, %v431, -inf
  %435 = vmax.xlane.f32.xlu0 %v434
  %v436 = vpop.xlane.xlu0 %435
  %v437 = vsel %vm433, %v432, -inf
  %438 = vmax.xlane.f32.xlu0 %v437
  %v439 = vpop.xlane.xlu0 %438
  %v440 = vsub.f32 %v431, %v436
  %v441 = vsub.f32 %v432, %v439
  %v442 = vmul.f32 %v440, 1.442695
  %v443 = vpow.pop %v442
  %v444 = vmul.f32 %v441, 1.442695
  %v445 = vpow.pop %v444
  %v446 = vsel %vm433, %v443, 0.0
  %447 = vadd.xlane.f32.xlu0 %v446
  %v448 = vpop.xlane.xlu0 %447
  %v449 = vsel %vm433, %v445, 0.0
  %450 = vadd.xlane.f32.xlu0 %v449
  %v451 = vpop.xlane.xlu0 %450
  %v452 = vrcp.pop %v448
  %v453 = vrcp.pop %v451
  %v454 = vmul.f32 %v448, %v452
  %v455 = vmul.f32 %v451, %v453
  %v456 = vsub.f32 2.0, %v454
  %v457 = vsub.f32 2.0, %v455
  %v458 = vmul.f32 %v452, %v456
  %v459 = vmul.f32 %v453, %v457
  %v460 = vmul.f32 %v443, %v458
  %v461 = vmul.f32 %v445, %v459
  %v463 = vsel %vm433, %v460, 0
  %vm465 = vcmask 1043456
  %v466 = vsel %vm465, %v351, 0
  %468 = vmatprep.subr.mxu0 0.0
  %469 = vmatpush1.msra.mxu0 %v466
  %470 = vmatprep.subr.mxu0 0.0
  %471 = vmatpush1.msra.mxu0 0.0
  %472 = vmatprep.subr.mxu0 0.0
  %473 = vmatpush1.msra.mxu0 0.0
  %474 = vmatprep.subr.mxu0 0.0
  %475 = vmatpush1.msra.mxu0 0.0
  %476 = vmatprep.subr.mxu0 0.0
  %477 = vmatpush1.msra.mxu0 0.0
  %478 = vmatprep.subr.mxu0 0.0
  %479 = vmatpush1.msra.mxu0 0.0
  %480 = vmatprep.subr.mxu0 0.0
  %481 = vmatpush1.msra.mxu0 0.0
  %482 = vmatprep.subr.mxu0 0.0
  %483 = vmatpush1.msra.mxu0 0.0
  %484 = vmatprep.subr.mxu0 0.0
  %485 = vmatpush1.msra.mxu0 0.0
  %486 = vmatprep.subr.mxu0 0.0
  %487 = vmatpush1.msra.mxu0 0.0
  %488 = vmatprep.subr.mxu0 0.0
  %489 = vmatpush1.msra.mxu0 0.0
  %490 = vmatprep.subr.mxu0 0.0
  %491 = vmatpush1.msra.mxu0 0.0
  %492 = vmatprep.subr.mxu0 0.0
  %493 = vmatpush1.msra.mxu0 0.0
  %494 = vmatprep.subr.mxu0 0.0
  %495 = vmatpush1.msra.mxu0 0.0
  %496 = vmatprep.subr.mxu0 0.0
  %497 = vmatpush1.msra.mxu0 0.0
  %498 = vmatprep.subr.mxu0 0.0
  %499 = vmatpush1.msra.mxu0 0.0
  %500 = vmatprep.subr.mxu0 0.0
  %501 = vmatpush1.msra.mxu0 0.0
  %502 = vmatprep.subr.mxu0 0.0
  %503 = vmatpush1.msra.mxu0 0.0
  %504 = vmatprep.subr.mxu0 0.0
  %505 = vmatpush1.msra.mxu0 0.0
  %506 = vmatprep.subr.mxu0 0.0
  %507 = vmatpush1.msra.mxu0 0.0
  %508 = vmatprep.subr.mxu0 0.0
  %509 = vmatpush1.msra.mxu0 0.0
  %510 = vmatprep.subr.mxu0 0.0
  %511 = vmatpush1.msra.mxu0 0.0
  %512 = vmatprep.subr.mxu0 0.0
  %513 = vmatpush1.msra.mxu0 0.0
  %514 = vmatprep.subr.mxu0 0.0
  %515 = vmatpush1.msra.mxu0 0.0
  %516 = vmatprep.subr.mxu0 0.0
  %517 = vmatpush1.msra.mxu0 0.0
  %518 = vmatprep.subr.mxu0 0.0
  %519 = vmatpush1.msra.mxu0 0.0
  %520 = vmatprep.subr.mxu0 0.0
  %521 = vmatpush1.msra.mxu0 0.0
  %522 = vmatprep.subr.mxu0 0.0
  %523 = vmatpush1.msra.mxu0 0.0
  %524 = vmatprep.subr.mxu0 0.0
  %525 = vmatpush1.msra.mxu0 0.0
  %526 = vmatprep.subr.mxu0 0.0
  %527 = vmatpush1.msra.mxu0 0.0
  %528 = vmatprep.subr.mxu0 0.0
  %529 = vmatpush1.msra.mxu0 0.0
  %530 = vmatprep.subr.mxu0 0.0
  %531 = vmatpush1.msra.mxu0 0.0
  %532 = vmatprep.mubr.f32.mxu0 0.0
  %533 = vmatmul.mubr.f32.gmra.mrb[0].mxu0 %v463
  %v534 = vpop.f32.mrb[0].mxu0
  %v535 = vadd.f32 %v51, %v534
  %v536 = vpop.f32.mrb[0].mxu0
  %537 = vdwg.mxu0
  %v539 = vsel %vm433, %v461, 0
  %v541 = vsel %vm465, %v355, 0
  %543 = vmatprep.subr.mxu0 0.0
  %544 = vmatpush1.msra.mxu0 %v541
  %545 = vmatprep.subr.mxu0 0.0
  %546 = vmatpush1.msra.mxu0 0.0
  %547 = vmatprep.subr.mxu0 0.0
  %548 = vmatpush1.msra.mxu0 0.0
  %549 = vmatprep.subr.mxu0 0.0
  %550 = vmatpush1.msra.mxu0 0.0
  %551 = vmatprep.subr.mxu0 0.0
  %552 = vmatpush1.msra.mxu0 0.0
  %553 = vmatprep.subr.mxu0 0.0
  %554 = vmatpush1.msra.mxu0 0.0
  %555 = vmatprep.subr.mxu0 0.0
  %556 = vmatpush1.msra.mxu0 0.0
  %557 = vmatprep.subr.mxu0 0.0
  %558 = vmatpush1.msra.mxu0 0.0
  %559 = vmatprep.subr.mxu0 0.0
  %560 = vmatpush1.msra.mxu0 0.0
  %561 = vmatprep.subr.mxu0 0.0
  %562 = vmatpush1.msra.mxu0 0.0
  %563 = vmatprep.subr.mxu0 0.0
  %564 = vmatpush1.msra.mxu0 0.0
  %565 = vmatprep.subr.mxu0 0.0
  %566 = vmatpush1.msra.mxu0 0.0
  %567 = vmatprep.subr.mxu0 0.0
  %568 = vmatpush1.msra.mxu0 0.0
  %569 = vmatprep.subr.mxu0 0.0
  %570 = vmatpush1.msra.mxu0 0.0
  %571 = vmatprep.subr.mxu0 0.0
  %572 = vmatpush1.msra.mxu0 0.0
  %573 = vmatprep.subr.mxu0 0.0
  %574 = vmatpush1.msra.mxu0 0.0
  %575 = vmatprep.subr.mxu0 0.0
  %576 = vmatpush1.msra.mxu0 0.0
  %577 = vmatprep.subr.mxu0 0.0
  %578 = vmatpush1.msra.mxu0 0.0
  %579 = vmatprep.subr.mxu0 0.0
  %580 = vmatpush1.msra.mxu0 0.0
  %581 = vmatprep.subr.mxu0 0.0
  %582 = vmatpush1.msra.mxu0 0.0
  %583 = vmatprep.subr.mxu0 0.0
  %584 = vmatpush1.msra.mxu0 0.0
  %585 = vmatprep.subr.mxu0 0.0
  %586 = vmatpush1.msra.mxu0 0.0
  %587 = vmatprep.subr.mxu0 0.0
  %588 = vmatpush1.msra.mxu0 0.0
  %589 = vmatprep.subr.mxu0 0.0
  %590 = vmatpush1.msra.mxu0 0.0
  %591 = vmatprep.subr.mxu0 0.0
  %592 = vmatpush1.msra.mxu0 0.0
  %593 = vmatprep.subr.mxu0 0.0
  %594 = vmatpush1.msra.mxu0 0.0
  %595 = vmatprep.subr.mxu0 0.0
  %596 = vmatpush1.msra.mxu0 0.0
  %597 = vmatprep.subr.mxu0 0.0
  %598 = vmatpush1.msra.mxu0 0.0
  %599 = vmatprep.subr.mxu0 0.0
  %600 = vmatpush1.msra.mxu0 0.0
  %601 = vmatprep.subr.mxu0 0.0
  %602 = vmatpush1.msra.mxu0 0.0
  %603 = vmatprep.subr.mxu0 0.0
  %604 = vmatpush1.msra.mxu0 0.0
  %605 = vmatprep.subr.mxu0 0.0
  %606 = vmatpush1.msra.mxu0 0.0
  %607 = vmatprep.mubr.f32.mxu0 0.0
  %608 = vmatmul.mubr.f32.gmra.mrb[0].mxu0 %v539
  %v609 = vpop.f32.mrb[0].mxu0
  %v610 = vadd.f32 %v52, %v609
  %v611 = vpop.f32.mrb[0].mxu0
  %612 = vdwg.mxu0
  %v613 = vld [vmem:[%s11] sm:$0x1]
  %v615 = vlaneseq
  %v616 = vshrl.u32 %v615, 7
  %v617 = vsub.s32 0, %v616
  %v618 = vrot.slane %v613, %v617
  %v620 = vmul.f32 %v535, %v618
  %v621 = vmul.f32 %v610, %v618
  %v622 = vsel %vm66, %v620, 0.0
  %623 = vadd.xlane.f32.xlu0 %v622
  %v624 = vpop.xlane.xlu0 %623
  %v625 = vsel %vm66, %v621, 0.0
  %626 = vadd.xlane.f32.xlu0 %v625
  %v627 = vpop.xlane.xlu0 %626
  %v628 = vld [vmem:[%s12] sm:$0x1]
  %v630 = vlaneseq
  %v631 = vshrl.u32 %v630, 7
  %v632 = vsub.s32 0, %v631
  %v633 = vrot.slane %v628, %v632
  %v635 = vmul.f32 %v51, %v633
  %v636 = vmul.f32 %v52, %v633
  %v637 = vsel %vm66, %v635, 0.0
  %638 = vadd.xlane.f32.xlu0 %v637
  %v639 = vpop.xlane.xlu0 %638
  %v640 = vsel %vm66, %v636, 0.0
  %641 = vadd.xlane.f32.xlu0 %v640
  %v642 = vpop.xlane.xlu0 %641
  %v643 = vadd.f32 %v624, %v639
  %v644 = vadd.f32 %v627, %v642
  %v645 = vld [vmem:[#allocation3] sm:$0x1]
  %v647 = vlaneseq
  %v648 = vshrl.u32 %v647, 7
  %v649 = vsub.s32 0, %v648
  %v650 = vrot.slane %v645, %v649
  %v652 = vadd.f32 %v643, %v650
  %v653 = vadd.f32 %v644, %v650
  %v654 = vmul.f32 %v652, 0.5
  %v655 = vmul.f32 %v653, 0.5
  %v656 = vtanh.pop %v654
  %v657 = vtanh.pop %v655
  %v658 = vadd.f32 %v656, 1.0
  %v659 = vadd.f32 %v657, 1.0
  %v660 = vmul.f32 %v658, 0.5
  %v661 = vmul.f32 %v659, 0.5
  %663 = vset.pattern.permute.xlu0 0
  %664 = vperm.xlu0 %663, %v660
  %v665 = vpop.permute.xlu0 %664
  %668 = vset.pattern.permute.xlu0 0
  %669 = vperm.xlu0 %668, %v661
  %v670 = vpop.permute.xlu0 %669
  %v672 = vmul.f32 %v665, %v535
  %v673 = vmul.f32 %v670, %v610
  %v674 = vsub.f32 1.0, %v660
  %v675 = vsub.f32 1.0, %v661
  %677 = vset.pattern.permute.xlu0 0
  %678 = vperm.xlu0 %677, %v674
  %v679 = vpop.permute.xlu0 %678
  %682 = vset.pattern.permute.xlu0 0
  %683 = vperm.xlu0 %682, %v675
  %v684 = vpop.permute.xlu0 %683
  %v686 = vmul.f32 %v679, %v51
  %v687 = vmul.f32 %v684, %v52
  %v688 = vadd.f32 %v672, %v686
  %v689 = vadd.f32 %v673, %v687
  %v690 = vadd.f32 %v688, %v51
  %v691 = vadd.f32 %v689, %v52
  %692 = vst.msk [vmem:[%s14] sm:$0xff] %vm66, %v690
  %693 = vst.msk [vmem:[%s14 + $0x8] sm:$0xff] %vm66, %v691
  // Predicated region
  $region58: #{hgat_forward.6} parent=0 // pred_check
    _
  $region59: #{hgat_forward.6} parent=0 // pred_check_branch
    %695 = sbr.rel (0) target = $region61
  $region60: #{hgat_forward.6} parent=0 // pred_region
    _
  $region61: #{hgat_forward.6} parent=0 // pred_fallthru
    _
  // Predicated region
  $region62: #{hgat_forward.6} parent=0 // pred_check
    _
  $region63: #{hgat_forward.6} parent=0 // pred_check_branch
    %697 = sbr.rel (0) target = $region65
  $region64: #{hgat_forward.6} parent=0 // pred_region
    _
  $region65: #{hgat_forward.6} parent=0 // pred_fallthru
    _

// kernel: hgat_forward.7
$region0: #{hgat_forward.7}
  #allocation0 [shape = 'u32[]', space=smem, size = 0x4, offset = 0x4, fixed_abs, tag = 'smem constant byte address 0x4 - core index']
  #allocation1 [shape = 'u32[144,128]{1,0:T(1,128)}', space=vmem, size = 0x12000, scoped, tag = 'internal scratch']
  #allocation2 [shape = 'f32[1,1]{1,0:T(1,128)S(1)}', space=vmem, size = 0x200, scoped, tag = 'scoped memory for hgat_forward.7']
  #allocation3 [shape = 'f32[1,1]{1,0:T(1,128)S(1)}', space=vmem, size = 0x200, scoped, tag = 'scoped memory for hgat_forward.7']
  %s0 = inlined_call_operand.vmem [shape: f32[2,4,32], index: 0, kind: input, shape index: {}]
  %s1 = inlined_call_operand.vmem [shape: f32[2,8,32], index: 1, kind: input, shape index: {}]
  %s2 = inlined_call_operand.vmem [shape: f32[2,1,8], index: 2, kind: input, shape index: {}]
  %s3 = inlined_call_operand.vmem [shape: f32[32,32], index: 3, kind: input, shape index: {}]
  %s4 = inlined_call_operand.vmem [shape: f32[1,32], index: 4, kind: input, shape index: {}]
  %s5 = inlined_call_operand.vmem [shape: f32[32,32], index: 5, kind: input, shape index: {}]
  %s6 = inlined_call_operand.vmem [shape: f32[1,32], index: 6, kind: input, shape index: {}]
  %s7 = inlined_call_operand.vmem [shape: f32[32,32], index: 7, kind: input, shape index: {}]
  %s8 = inlined_call_operand.vmem [shape: f32[1,32], index: 8, kind: input, shape index: {}]
  %s9 = inlined_call_operand.vmem [shape: f32[1,32], index: 9, kind: input, shape index: {}]
  %s10 = inlined_call_operand.vmem [shape: f32[1,32], index: 10, kind: input, shape index: {}]
  %s11 = inlined_call_operand.<no memory space> [shape: f32[1,1], index: 11, kind: input, shape index: {}]
  %s12 = inlined_call_operand.vmem [shape: f32[1,32], index: 12, kind: input, shape index: {}]
  %s13 = inlined_call_operand.vmem [shape: f32[1,32], index: 13, kind: input, shape index: {}]
  %s14 = inlined_call_operand.<no memory space> [shape: f32[1,1], index: 14, kind: input, shape index: {}]
  %s15 = inlined_call_operand.hbm [shape: f32[2,4,32], index: 15, kind: output, shape index: {}]
  %s16 = sld [smem:[#allocation0]]
  $region70: #{hgat_forward.7} parent=0
    _
  %s18 = ssub.s32 1, %s16
  %s19 = scalar_select 0, %s18, %s16
  %v20 = vstv %s11
  %21 = vst [vmem:[#allocation2] sm:$0x1] %v20
  %v22 = vstv %s14
  %23 = vst [vmem:[#allocation3] sm:$0x1] %v22
  $region1: #{hgat_forward.7} parent=0
    #allocation4 [shape = 'u8[4096]{0}', space=vmem, size = 0x1000, scoped, tag = 'output window, operand 0, single buffered']
    #allocation5 [shape = 's32[1]{0}', space=sflag, size = 0x4, scoped, tag = 'scoped memory for hgat_forward.7']
    %24 = vsyncpa [#allocation5], 0
    // Predicated region
    $region2: #{hgat_forward.7} parent=1 // pred_check
      _
    $region3: #{hgat_forward.7} parent=1 // pred_check_branch
      %26 = sbr.rel (0) target = $region5
    $region4: #{hgat_forward.7} parent=1 // pred_region
      _
    $region5: #{hgat_forward.7} parent=1 // pred_fallthru
      _
    // Predicated region
    $region6: #{hgat_forward.7} parent=1 // pred_check
      _
    $region7: #{hgat_forward.7} parent=1 // pred_check_branch
      %28 = sbr.rel (0) target = $region9
    $region8: #{hgat_forward.7} parent=1 // pred_region
      _
    $region9: #{hgat_forward.7} parent=1 // pred_fallthru
      _
    // Predicated region
    $region10: #{hgat_forward.7} parent=1 // pred_check
      _
    $region11: #{hgat_forward.7} parent=1 // pred_check_branch
      %30 = sbr.rel (0) target = $region13
    $region12: #{hgat_forward.7} parent=1 // pred_region
      _
    $region13: #{hgat_forward.7} parent=1 // pred_fallthru
      _
    // Predicated region
    $region14: #{hgat_forward.7} parent=1 // pred_check
      _
    $region15: #{hgat_forward.7} parent=1 // pred_check_branch
      %32 = sbr.rel (0) target = $region17
    $region16: #{hgat_forward.7} parent=1 // pred_region
      _
    $region17: #{hgat_forward.7} parent=1 // pred_fallthru
      _
    // Predicated region
    $region18: #{hgat_forward.7} parent=1 // pred_check
      _
    $region19: #{hgat_forward.7} parent=1 // pred_check_branch
      %34 = sbr.rel (0) target = $region21
    $region20: #{hgat_forward.7} parent=1 // pred_region
      _
    $region21: #{hgat_forward.7} parent=1 // pred_fallthru
      _
    // Predicated region
    $region22: #{hgat_forward.7} parent=1 // pred_check
      _
    $region23: #{hgat_forward.7} parent=1 // pred_check_branch
      %36 = sbr.rel (0) target = $region25
    $region24: #{hgat_forward.7} parent=1 // pred_region
      _
    $region25: #{hgat_forward.7} parent=1 // pred_fallthru
      _
    // Predicated region
    $region26: #{hgat_forward.7} parent=1 // pred_check
      _
    $region27: #{hgat_forward.7} parent=1 // pred_check_branch
      %38 = sbr.rel (0) target = $region29
    $region28: #{hgat_forward.7} parent=1 // pred_region
      _
    $region29: #{hgat_forward.7} parent=1 // pred_fallthru
      _
    // Predicated region
    $region30: #{hgat_forward.7} parent=1 // pred_check
      _
    $region31: #{hgat_forward.7} parent=1 // pred_check_branch
      %40 = sbr.rel (0) target = $region33
    $region32: #{hgat_forward.7} parent=1 // pred_region
      _
    $region33: #{hgat_forward.7} parent=1 // pred_fallthru
      _
    // Predicated region
    $region34: #{hgat_forward.7} parent=1 // pred_check
      _
    $region35: #{hgat_forward.7} parent=1 // pred_check_branch
      %42 = sbr.rel (0) target = $region37
    $region36: #{hgat_forward.7} parent=1 // pred_region
      _
    $region37: #{hgat_forward.7} parent=1 // pred_fallthru
      _
    // Predicated region
    $region38: #{hgat_forward.7} parent=1 // pred_check
      _
    $region39: #{hgat_forward.7} parent=1 // pred_check_branch
      %44 = sbr.rel (0) target = $region41
    $region40: #{hgat_forward.7} parent=1 // pred_region
      _
    $region41: #{hgat_forward.7} parent=1 // pred_fallthru
      _
    // Predicated region
    $region42: #{hgat_forward.7} parent=1 // pred_check
      _
    $region43: #{hgat_forward.7} parent=1 // pred_check_branch
      %46 = sbr.rel (0) target = $region45
    $region44: #{hgat_forward.7} parent=1 // pred_region
      _
    $region45: #{hgat_forward.7} parent=1 // pred_fallthru
      _
    // Predicated region
    $region46: #{hgat_forward.7} parent=1 // pred_check
      _
    $region47: #{hgat_forward.7} parent=1 // pred_check_branch
      %48 = sbr.rel (0) target = $region49
    $region48: #{hgat_forward.7} parent=1 // pred_region
      _
    $region49: #{hgat_forward.7} parent=1 // pred_fallthru
      _
    // Predicated region
    $region50: #{hgat_forward.7} parent=1 // pred_check
      _
    $region51: #{hgat_forward.7} parent=1 // pred_check_branch
      %50 = sbr.rel (0) target = $region53
    $region52: #{hgat_forward.7} parent=1 // pred_region
      _
    $region53: #{hgat_forward.7} parent=1 // pred_fallthru
      _
    // Predicated region
    $region54: #{hgat_forward.7} parent=1 // pred_check
      _
    $region55: #{hgat_forward.7} parent=1 // pred_check_branch
      %52 = sbr.rel (0) target = $region57
    $region56: #{hgat_forward.7} parent=1 // pred_region
      _
    $region57: #{hgat_forward.7} parent=1 // pred_fallthru
      _
    // Predicated region
    $region58: #{hgat_forward.7} parent=1 // pred_check
      _
    $region59: #{hgat_forward.7} parent=1 // pred_check_branch
      %54 = sbr.rel (0) target = $region61
    $region60: #{hgat_forward.7} parent=1 // pred_region
      _
    $region61: #{hgat_forward.7} parent=1 // pred_fallthru
      _
    %v55 = vld [vmem:[%s0] sm:$0xf]
    %v56 = vld [vmem:[%s0 + $0x4] sm:$0xf]
    %v57 = vld [vmem:[%s1] sm:$0xff]
    %v58 = vld [vmem:[%s1 + $0x8] sm:$0xff]
    %v59 = vld [vmem:[%s3] sm:$0xff]
    %v60 = vld [vmem:[%s3 + $0x8] sm:$0xff]
    %v61 = vld [vmem:[%s3 + $0x10] sm:$0xff]
    %v62 = vld [vmem:[%s3 + $0x18] sm:$0xff]
    %v63 = vld [vmem:[%s4] sm:$0x1]
    %v65 = vlaneseq
    %v66 = vshrl.u32 %v65, 7
    %v67 = vsub.s32 0, %v66
    %v68 = vrot.slane %v63, %v67
    %v72 = vcombine.low %v55, %v56
    %vm73 = vcmask 261120
    %v74 = vsel %vm73, %v72, 0
    %v77 = vsel %vm73, %v59, 0
    %v80 = vsel %vm73, %v60, 0
    %v83 = vsel %vm73, %v61, 0
    %v86 = vsel %vm73, %v62, 0
    %88 = vmatprep.subr.mxu0 0.0
    %89 = vmatpush1.xpose.msra.mxu0 %v77
    %90 = vmatprep.subr.mxu0 0.0
    %91 = vmatpush1.xpose.msra.mxu0 %v80
    %92 = vmatprep.subr.mxu0 0.0
    %93 = vmatpush1.xpose.msra.mxu0 %v83
    %94 = vmatprep.subr.mxu0 0.0
    %95 = vmatpush1.xpose.msra.mxu0 %v86
    %96 = vmatprep.subr.mxu0 0.0
    %97 = vmatpush1.xpose.msra.mxu0 0.0
    %98 = vmatprep.subr.mxu0 0.0
    %99 = vmatpush1.xpose.msra.mxu0 0.0
    %100 = vmatprep.subr.mxu0 0.0
    %101 = vmatpush1.xpose.msra.mxu0 0.0
    %102 = vmatprep.subr.mxu0 0.0
    %103 = vmatpush1.xpose.msra.mxu0 0.0
    %104 = vmatprep.subr.mxu0 0.0
    %105 = vmatpush1.xpose.msra.mxu0 0.0
    %106 = vmatprep.subr.mxu0 0.0
    %107 = vmatpush1.xpose.msra.mxu0 0.0
    %108 = vmatprep.subr.mxu0 0.0
    %109 = vmatpush1.xpose.msra.mxu0 0.0
    %110 = vmatprep.subr.mxu0 0.0
    %111 = vmatpush1.xpose.msra.mxu0 0.0
    %112 = vmatprep.subr.mxu0 0.0
    %113 = vmatpush1.xpose.msra.mxu0 0.0
    %114 = vmatprep.subr.mxu0 0.0
    %115 = vmatpush1.xpose.msra.mxu0 0.0
    %116 = vmatprep.subr.mxu0 0.0
    %117 = vmatpush1.xpose.msra.mxu0 0.0
    %118 = vmatprep.subr.mxu0 0.0
    %119 = vmatpush1.xpose.msra.mxu0 0.0
    %120 = vmatprep.subr.mxu0 0.0
    %121 = vmatpush1.xpose.msra.mxu0 0.0
    %122 = vmatprep.subr.mxu0 0.0
    %123 = vmatpush1.xpose.msra.mxu0 0.0
    %124 = vmatprep.subr.mxu0 0.0
    %125 = vmatpush1.xpose.msra.mxu0 0.0
    %126 = vmatprep.subr.mxu0 0.0
    %127 = vmatpush1.xpose.msra.mxu0 0.0
    %128 = vmatprep.subr.mxu0 0.0
    %129 = vmatpush1.xpose.msra.mxu0 0.0
    %130 = vmatprep.subr.mxu0 0.0
    %131 = vmatpush1.xpose.msra.mxu0 0.0
    %132 = vmatprep.subr.mxu0 0.0
    %133 = vmatpush1.xpose.msra.mxu0 0.0
    %134 = vmatprep.subr.mxu0 0.0
    %135 = vmatpush1.xpose.msra.mxu0 0.0
    %136 = vmatprep.subr.mxu0 0.0
    %137 = vmatpush1.xpose.msra.mxu0 0.0
    %138 = vmatprep.subr.mxu0 0.0
    %139 = vmatpush1.xpose.msra.mxu0 0.0
    %140 = vmatprep.subr.mxu0 0.0
    %141 = vmatpush1.xpose.msra.mxu0 0.0
    %142 = vmatprep.subr.mxu0 0.0
    %143 = vmatpush1.xpose.msra.mxu0 0.0
    %144 = vmatprep.subr.mxu0 0.0
    %145 = vmatpush1.xpose.msra.mxu0 0.0
    %146 = vmatprep.subr.mxu0 0.0
    %147 = vmatpush1.xpose.msra.mxu0 0.0
    %148 = vmatprep.subr.mxu0 0.0
    %149 = vmatpush1.xpose.msra.mxu0 0.0
    %150 = vmatprep.subr.mxu0 0.0
    %151 = vmatpush1.xpose.msra.mxu0 0.0
    %152 = vmatprep.mubr.f32.mxu0 0.0
    %153 = vmatmul.mubr.f32.gmra.mrb[0].mxu0 %v74
    %v154 = vpop.f32.mrb[0].mxu0
    %v155 = vadd.f32 %v68, %v154
    %v156 = vpop.f32.mrb[0].mxu0
    %157 = vdwg.mxu0
    %v159 = vcombine.high %v155, %v155
    %v161 = vld [vmem:[%s5] sm:$0xff]
    %v162 = vld [vmem:[%s5 + $0x8] sm:$0xff]
    %v163 = vld [vmem:[%s5 + $0x10] sm:$0xff]
    %v164 = vld [vmem:[%s5 + $0x18] sm:$0xff]
    %v165 = vld [vmem:[%s6] sm:$0x1]
    %v167 = vlaneseq
    %v168 = vshrl.u32 %v167, 7
    %v169 = vsub.s32 0, %v168
    %v170 = vrot.slane %v165, %v169
    %v173 = vsel %vm73, %v57, 0
    %v176 = vsel %vm73, %v58, 0
    %v179 = vsel %vm73, %v161, 0
    %v182 = vsel %vm73, %v162, 0
    %v185 = vsel %vm73, %v163, 0
    %v188 = vsel %vm73, %v164, 0
    %190 = vmatprep.subr.mxu0 0.0
    %191 = vmatpush1.xpose.msra.mxu0 %v179
    %192 = vmatprep.subr.mxu0 0.0
    %193 = vmatpush1.xpose.msra.mxu0 %v182
    %194 = vmatprep.subr.mxu0 0.0
    %195 = vmatpush1.xpose.msra.mxu0 %v185
    %196 = vmatprep.subr.mxu0 0.0
    %197 = vmatpush1.xpose.msra.mxu0 %v188
    %198 = vmatprep.subr.mxu0 0.0
    %199 = vmatpush1.xpose.msra.mxu0 0.0
    %200 = vmatprep.subr.mxu0 0.0
    %201 = vmatpush1.xpose.msra.mxu0 0.0
    %202 = vmatprep.subr.mxu0 0.0
    %203 = vmatpush1.xpose.msra.mxu0 0.0
    %204 = vmatprep.subr.mxu0 0.0
    %205 = vmatpush1.xpose.msra.mxu0 0.0
    %206 = vmatprep.subr.mxu0 0.0
    %207 = vmatpush1.xpose.msra.mxu0 0.0
    %208 = vmatprep.subr.mxu0 0.0
    %209 = vmatpush1.xpose.msra.mxu0 0.0
    %210 = vmatprep.subr.mxu0 0.0
    %211 = vmatpush1.xpose.msra.mxu0 0.0
    %212 = vmatprep.subr.mxu0 0.0
    %213 = vmatpush1.xpose.msra.mxu0 0.0
    %214 = vmatprep.subr.mxu0 0.0
    %215 = vmatpush1.xpose.msra.mxu0 0.0
    %216 = vmatprep.subr.mxu0 0.0
    %217 = vmatpush1.xpose.msra.mxu0 0.0
    %218 = vmatprep.subr.mxu0 0.0
    %219 = vmatpush1.xpose.msra.mxu0 0.0
    %220 = vmatprep.subr.mxu0 0.0
    %221 = vmatpush1.xpose.msra.mxu0 0.0
    %222 = vmatprep.subr.mxu0 0.0
    %223 = vmatpush1.xpose.msra.mxu0 0.0
    %224 = vmatprep.subr.mxu0 0.0
    %225 = vmatpush1.xpose.msra.mxu0 0.0
    %226 = vmatprep.subr.mxu0 0.0
    %227 = vmatpush1.xpose.msra.mxu0 0.0
    %228 = vmatprep.subr.mxu0 0.0
    %229 = vmatpush1.xpose.msra.mxu0 0.0
    %230 = vmatprep.subr.mxu0 0.0
    %231 = vmatpush1.xpose.msra.mxu0 0.0
    %232 = vmatprep.subr.mxu0 0.0
    %233 = vmatpush1.xpose.msra.mxu0 0.0
    %234 = vmatprep.subr.mxu0 0.0
    %235 = vmatpush1.xpose.msra.mxu0 0.0
    %236 = vmatprep.subr.mxu0 0.0
    %237 = vmatpush1.xpose.msra.mxu0 0.0
    %238 = vmatprep.subr.mxu0 0.0
    %239 = vmatpush1.xpose.msra.mxu0 0.0
    %240 = vmatprep.subr.mxu0 0.0
    %241 = vmatpush1.xpose.msra.mxu0 0.0
    %242 = vmatprep.subr.mxu0 0.0
    %243 = vmatpush1.xpose.msra.mxu0 0.0
    %244 = vmatprep.subr.mxu0 0.0
    %245 = vmatpush1.xpose.msra.mxu0 0.0
    %246 = vmatprep.subr.mxu0 0.0
    %247 = vmatpush1.xpose.msra.mxu0 0.0
    %248 = vmatprep.subr.mxu0 0.0
    %249 = vmatpush1.xpose.msra.mxu0 0.0
    %250 = vmatprep.subr.mxu0 0.0
    %251 = vmatpush1.xpose.msra.mxu0 0.0
    %252 = vmatprep.subr.mxu0 0.0
    %253 = vmatpush1.xpose.msra.mxu0 0.0
    %254 = vmatprep.mubr.f32.mxu0 0.0
    %255 = vmatmul.mubr.f32.gmra.mrb[0].mxu0 %v173
    %v256 = vpop.f32.mrb[0].mxu0
    %v257 = vadd.f32 %v170, %v256
    %v258 = vpop.f32.mrb[0].mxu0
    %259 = vmatprep.mubr.f32.mxu0 0.0
    %260 = vmatmul.mubr.f32.gmra.mrb[0].mxu0 %v176
    %v261 = vpop.f32.mrb[0].mxu0
    %v262 = vadd.f32 %v170, %v261
    %v263 = vpop.f32.mrb[0].mxu0
    %264 = vdwg.mxu0
    %v265 = vld [vmem:[%s7] sm:$0xff]
    %v266 = vld [vmem:[%s7 + $0x8] sm:$0xff]
    %v267 = vld [vmem:[%s7 + $0x10] sm:$0xff]
    %v268 = vld [vmem:[%s7 + $0x18] sm:$0xff]
    %v269 = vld [vmem:[%s8] sm:$0x1]
    %v271 = vlaneseq
    %v272 = vshrl.u32 %v271, 7
    %v273 = vsub.s32 0, %v272
    %v274 = vrot.slane %v269, %v273
    %v277 = vsel %vm73, %v265, 0
    %v280 = vsel %vm73, %v266, 0
    %v283 = vsel %vm73, %v267, 0
    %v286 = vsel %vm73, %v268, 0
    %288 = vmatprep.subr.mxu0 0.0
    %289 = vmatpush1.xpose.msra.mxu0 %v277
    %290 = vmatprep.subr.mxu0 0.0
    %291 = vmatpush1.xpose.msra.mxu0 %v280
    %292 = vmatprep.subr.mxu0 0.0
    %293 = vmatpush1.xpose.msra.mxu0 %v283
    %294 = vmatprep.subr.mxu0 0.0
    %295 = vmatpush1.xpose.msra.mxu0 %v286
    %296 = vmatprep.subr.mxu0 0.0
    %297 = vmatpush1.xpose.msra.mxu0 0.0
    %298 = vmatprep.subr.mxu0 0.0
    %299 = vmatpush1.xpose.msra.mxu0 0.0
    %300 = vmatprep.subr.mxu0 0.0
    %301 = vmatpush1.xpose.msra.mxu0 0.0
    %302 = vmatprep.subr.mxu0 0.0
    %303 = vmatpush1.xpose.msra.mxu0 0.0
    %304 = vmatprep.subr.mxu0 0.0
    %305 = vmatpush1.xpose.msra.mxu0 0.0
    %306 = vmatprep.subr.mxu0 0.0
    %307 = vmatpush1.xpose.msra.mxu0 0.0
    %308 = vmatprep.subr.mxu0 0.0
    %309 = vmatpush1.xpose.msra.mxu0 0.0
    %310 = vmatprep.subr.mxu0 0.0
    %311 = vmatpush1.xpose.msra.mxu0 0.0
    %312 = vmatprep.subr.mxu0 0.0
    %313 = vmatpush1.xpose.msra.mxu0 0.0
    %314 = vmatprep.subr.mxu0 0.0
    %315 = vmatpush1.xpose.msra.mxu0 0.0
    %316 = vmatprep.subr.mxu0 0.0
    %317 = vmatpush1.xpose.msra.mxu0 0.0
    %318 = vmatprep.subr.mxu0 0.0
    %319 = vmatpush1.xpose.msra.mxu0 0.0
    %320 = vmatprep.subr.mxu0 0.0
    %321 = vmatpush1.xpose.msra.mxu0 0.0
    %322 = vmatprep.subr.mxu0 0.0
    %323 = vmatpush1.xpose.msra.mxu0 0.0
    %324 = vmatprep.subr.mxu0 0.0
    %325 = vmatpush1.xpose.msra.mxu0 0.0
    %326 = vmatprep.subr.mxu0 0.0
    %327 = vmatpush1.xpose.msra.mxu0 0.0
    %328 = vmatprep.subr.mxu0 0.0
    %329 = vmatpush1.xpose.msra.mxu0 0.0
    %330 = vmatprep.subr.mxu0 0.0
    %331 = vmatpush1.xpose.msra.mxu0 0.0
    %332 = vmatprep.subr.mxu0 0.0
    %333 = vmatpush1.xpose.msra.mxu0 0.0
    %334 = vmatprep.subr.mxu0 0.0
    %335 = vmatpush1.xpose.msra.mxu0 0.0
    %336 = vmatprep.subr.mxu0 0.0
    %337 = vmatpush1.xpose.msra.mxu0 0.0
    %338 = vmatprep.subr.mxu0 0.0
    %339 = vmatpush1.xpose.msra.mxu0 0.0
    %340 = vmatprep.subr.mxu0 0.0
    %341 = vmatpush1.xpose.msra.mxu0 0.0
    %342 = vmatprep.subr.mxu0 0.0
    %343 = vmatpush1.xpose.msra.mxu0 0.0
    %344 = vmatprep.subr.mxu0 0.0
    %345 = vmatpush1.xpose.msra.mxu0 0.0
    %346 = vmatprep.subr.mxu0 0.0
    %347 = vmatpush1.xpose.msra.mxu0 0.0
    %348 = vmatprep.subr.mxu0 0.0
    %349 = vmatpush1.xpose.msra.mxu0 0.0
    %350 = vmatprep.subr.mxu0 0.0
    %351 = vmatpush1.xpose.msra.mxu0 0.0
    %352 = vmatprep.mubr.f32.mxu0 0.0
    %353 = vmatmul.mubr.f32.gmra.mrb[0].mxu0 %v173
    %v354 = vpop.f32.mrb[0].mxu0
    %v355 = vadd.f32 %v274, %v354
    %v356 = vpop.f32.mrb[0].mxu0
    %357 = vmatprep.mubr.f32.mxu0 0.0
    %358 = vmatmul.mubr.f32.gmra.mrb[0].mxu0 %v176
    %v359 = vpop.f32.mrb[0].mxu0
    %v360 = vadd.f32 %v274, %v359
    %v361 = vpop.f32.mrb[0].mxu0
    %362 = vdwg.mxu0
    %v363 = vld [vmem:[%s9] sm:$0x1]
    %v365 = vlaneseq
    %v366 = vshrl.u32 %v365, 7
    %v367 = vsub.s32 0, %v366
    %v368 = vrot.slane %v363, %v367
    %v370 = vmul.f32 %v155, %v368
    %v371 = vmul.f32 %v159, %v368
    %vm372 = vcmask 257024
    %v373 = vsel %vm372, %v370, 0.0
    %374 = vadd.xlane.f32.xlu0 %v373
    %v375 = vpop.xlane.xlu0 %374
    %v376 = vsel %vm372, %v371, 0.0
    %377 = vadd.xlane.f32.xlu0 %v376
    %v378 = vpop.xlane.xlu0 %377
    %v379 = vld [vmem:[%s10] sm:$0x1]
    %v381 = vlaneseq
    %v382 = vshrl.u32 %v381, 7
    %v383 = vsub.s32 0, %v382
    %v384 = vrot.slane %v379, %v383
    %v386 = vmul.f32 %v257, %v384
    %v387 = vmul.f32 %v262, %v384
    %v388 = vsel %vm73, %v386, 0.0
    %389 = vadd.xlane.f32.xlu0 %v388
    %v390 = vpop.xlane.xlu0 %389
    %v391 = vsel %vm73, %v387, 0.0
    %392 = vadd.xlane.f32.xlu0 %v391
    %v393 = vpop.xlane.xlu0 %392
    %v396 = vlaneseq
    %v397 = vand.u32 %v396, 127
    %v398 = vlaneseq
    %v399 = vshrl.u32 %v398, 7
    %v400 = vsub.s32 %v397, %v399
    %v401 = vrot.slane %v390, %v400
    %v402 = vlaneseq
    %v403 = vshrl.u32 %v402, 7
    %v404 = vsub.s32 %v397, %v403
    %v405 = vrot.slane %v393, %v404
    %vm406 = vcmask 1042434
    %v407 = vsel %vm406, %v401, %v401
    %vm408 = vcmask 1043459
    %v409 = vsel %vm408, %v401, %v407
    %v410 = vsel %vm406, %v405, %v405
    %v411 = vsel %vm408, %v405, %v410
    %v414 = vadd.f32 %v375, %v409
    %v415 = vadd.f32 %v378, %v411
    %v416 = vld [vmem:[#allocation2] sm:$0x1]
    %v418 = vlaneseq
    %v419 = vshrl.u32 %v418, 7
    %v420 = vsub.s32 0, %v419
    %v421 = vrot.slane %v416, %v420
    %422 = vset.pattern.permute.xlu0 0
    %423 = vperm.xlu0 %422, %v421
    %v424 = vpop.permute.xlu0 %423
    %v426 = vadd.f32 %v414, %v424
    %v427 = vadd.f32 %v415, %v424
    %v428 = vld [vmem:[%s2] sm:$0x1]
    %v429 = vld [vmem:[%s2 + $0x1] sm:$0x1]
    %vm430 = vcmp.lt.f32.partialorder %v428, 0.5
    %vm431 = vcmp.lt.f32.partialorder %v429, 0.5
    %v432 = vsel %vm430, 1, 0
    %v433 = vsel %vm431, 1, 0
    %v434 = vlaneseq
    %v435 = vshrl.u32 %v434, 7
    %v436 = vsub.s32 0, %v435
    %v437 = vrot.slane %v432, %v436
    %v438 = vlaneseq
    %v439 = vshrl.u32 %v438, 7
    %v440 = vsub.s32 0, %v439
    %v441 = vrot.slane %v433, %v440
    %vm442 = vcmp.eq.s32.totalorder %v437, 1
    %vm443 = vcmp.eq.s32.totalorder %v441, 1
    %v444 = vsel %vm442, -1e+09, %v426
    %v445 = vsel %vm443, -1e+09, %v427
    %vm446 = vcmask 60416
    %v447 = vsel %vm446, %v444, -inf
    %448 = vmax.xlane.f32.xlu0 %v447
    %v449 = vpop.xlane.xlu0 %448
    %v450 = vsel %vm446, %v445, -inf
    %451 = vmax.xlane.f32.xlu0 %v450
    %v452 = vpop.xlane.xlu0 %451
    %v453 = vsub.f32 %v444, %v449
    %v454 = vsub.f32 %v445, %v452
    %v455 = vmul.f32 %v453, 1.442695
    %v456 = vpow.pop %v455
    %v457 = vmul.f32 %v454, 1.442695
    %v458 = vpow.pop %v457
    %v459 = vsel %vm446, %v456, 0.0
    %460 = vadd.xlane.f32.xlu0 %v459
    %v461 = vpop.xlane.xlu0 %460
    %v462 = vsel %vm446, %v458, 0.0
    %463 = vadd.xlane.f32.xlu0 %v462
    %v464 = vpop.xlane.xlu0 %463
    %v465 = vrcp.pop %v461
    %v466 = vrcp.pop %v464
    %v467 = vmul.f32 %v461, %v465
    %v468 = vmul.f32 %v464, %v466
    %v469 = vsub.f32 2.0, %v467
    %v470 = vsub.f32 2.0, %v468
    %v471 = vmul.f32 %v465, %v469
    %v472 = vmul.f32 %v466, %v470
    %v473 = vmul.f32 %v456, %v471
    %v474 = vmul.f32 %v458, %v472
    %vm475 = vcmask 64512
    %v477 = vsel %vm475, %v473, 0
    %479 = vmatprep.subr.mxu0 0.0
    %480 = vmatpush1.msra.mxu0 %v355
    %481 = vmatprep.subr.mxu0 0.0
    %482 = vmatpush1.msra.mxu0 0.0
    %483 = vmatprep.subr.mxu0 0.0
    %484 = vmatpush1.msra.mxu0 0.0
    %485 = vmatprep.subr.mxu0 0.0
    %486 = vmatpush1.msra.mxu0 0.0
    %487 = vmatprep.subr.mxu0 0.0
    %488 = vmatpush1.msra.mxu0 0.0
    %489 = vmatprep.subr.mxu0 0.0
    %490 = vmatpush1.msra.mxu0 0.0
    %491 = vmatprep.subr.mxu0 0.0
    %492 = vmatpush1.msra.mxu0 0.0
    %493 = vmatprep.subr.mxu0 0.0
    %494 = vmatpush1.msra.mxu0 0.0
    %495 = vmatprep.subr.mxu0 0.0
    %496 = vmatpush1.msra.mxu0 0.0
    %497 = vmatprep.subr.mxu0 0.0
    %498 = vmatpush1.msra.mxu0 0.0
    %499 = vmatprep.subr.mxu0 0.0
    %500 = vmatpush1.msra.mxu0 0.0
    %501 = vmatprep.subr.mxu0 0.0
    %502 = vmatpush1.msra.mxu0 0.0
    %503 = vmatprep.subr.mxu0 0.0
    %504 = vmatpush1.msra.mxu0 0.0
    %505 = vmatprep.subr.mxu0 0.0
    %506 = vmatpush1.msra.mxu0 0.0
    %507 = vmatprep.subr.mxu0 0.0
    %508 = vmatpush1.msra.mxu0 0.0
    %509 = vmatprep.subr.mxu0 0.0
    %510 = vmatpush1.msra.mxu0 0.0
    %511 = vmatprep.subr.mxu0 0.0
    %512 = vmatpush1.msra.mxu0 0.0
    %513 = vmatprep.subr.mxu0 0.0
    %514 = vmatpush1.msra.mxu0 0.0
    %515 = vmatprep.subr.mxu0 0.0
    %516 = vmatpush1.msra.mxu0 0.0
    %517 = vmatprep.subr.mxu0 0.0
    %518 = vmatpush1.msra.mxu0 0.0
    %519 = vmatprep.subr.mxu0 0.0
    %520 = vmatpush1.msra.mxu0 0.0
    %521 = vmatprep.subr.mxu0 0.0
    %522 = vmatpush1.msra.mxu0 0.0
    %523 = vmatprep.subr.mxu0 0.0
    %524 = vmatpush1.msra.mxu0 0.0
    %525 = vmatprep.subr.mxu0 0.0
    %526 = vmatpush1.msra.mxu0 0.0
    %527 = vmatprep.subr.mxu0 0.0
    %528 = vmatpush1.msra.mxu0 0.0
    %529 = vmatprep.subr.mxu0 0.0
    %530 = vmatpush1.msra.mxu0 0.0
    %531 = vmatprep.subr.mxu0 0.0
    %532 = vmatpush1.msra.mxu0 0.0
    %533 = vmatprep.subr.mxu0 0.0
    %534 = vmatpush1.msra.mxu0 0.0
    %535 = vmatprep.subr.mxu0 0.0
    %536 = vmatpush1.msra.mxu0 0.0
    %537 = vmatprep.subr.mxu0 0.0
    %538 = vmatpush1.msra.mxu0 0.0
    %539 = vmatprep.subr.mxu0 0.0
    %540 = vmatpush1.msra.mxu0 0.0
    %541 = vmatprep.subr.mxu0 0.0
    %542 = vmatpush1.msra.mxu0 0.0
    %543 = vmatprep.mubr.f32.mxu0 0.0
    %544 = vmatmul.mubr.f32.gmra.mrb[0].mxu0 %v477
    %v545 = vpop.f32.mrb[0].mxu0
    %v546 = vadd.f32 %v55, %v545
    %v547 = vpop.f32.mrb[0].mxu0
    %548 = vdwg.mxu0
    %v550 = vsel %vm475, %v474, 0
    %552 = vmatprep.subr.mxu0 0.0
    %553 = vmatpush1.msra.mxu0 %v360
    %554 = vmatprep.subr.mxu0 0.0
    %555 = vmatpush1.msra.mxu0 0.0
    %556 = vmatprep.subr.mxu0 0.0
    %557 = vmatpush1.msra.mxu0 0.0
    %558 = vmatprep.subr.mxu0 0.0
    %559 = vmatpush1.msra.mxu0 0.0
    %560 = vmatprep.subr.mxu0 0.0
    %561 = vmatpush1.msra.mxu0 0.0
    %562 = vmatprep.subr.mxu0 0.0
    %563 = vmatpush1.msra.mxu0 0.0
    %564 = vmatprep.subr.mxu0 0.0
    %565 = vmatpush1.msra.mxu0 0.0
    %566 = vmatprep.subr.mxu0 0.0
    %567 = vmatpush1.msra.mxu0 0.0
    %568 = vmatprep.subr.mxu0 0.0
    %569 = vmatpush1.msra.mxu0 0.0
    %570 = vmatprep.subr.mxu0 0.0
    %571 = vmatpush1.msra.mxu0 0.0
    %572 = vmatprep.subr.mxu0 0.0
    %573 = vmatpush1.msra.mxu0 0.0
    %574 = vmatprep.subr.mxu0 0.0
    %575 = vmatpush1.msra.mxu0 0.0
    %576 = vmatprep.subr.mxu0 0.0
    %577 = vmatpush1.msra.mxu0 0.0
    %578 = vmatprep.subr.mxu0 0.0
    %579 = vmatpush1.msra.mxu0 0.0
    %580 = vmatprep.subr.mxu0 0.0
    %581 = vmatpush1.msra.mxu0 0.0
    %582 = vmatprep.subr.mxu0 0.0
    %583 = vmatpush1.msra.mxu0 0.0
    %584 = vmatprep.subr.mxu0 0.0
    %585 = vmatpush1.msra.mxu0 0.0
    %586 = vmatprep.subr.mxu0 0.0
    %587 = vmatpush1.msra.mxu0 0.0
    %588 = vmatprep.subr.mxu0 0.0
    %589 = vmatpush1.msra.mxu0 0.0
    %590 = vmatprep.subr.mxu0 0.0
    %591 = vmatpush1.msra.mxu0 0.0
    %592 = vmatprep.subr.mxu0 0.0
    %593 = vmatpush1.msra.mxu0 0.0
    %594 = vmatprep.subr.mxu0 0.0
    %595 = vmatpush1.msra.mxu0 0.0
    %596 = vmatprep.subr.mxu0 0.0
    %597 = vmatpush1.msra.mxu0 0.0
    %598 = vmatprep.subr.mxu0 0.0
    %599 = vmatpush1.msra.mxu0 0.0
    %600 = vmatprep.subr.mxu0 0.0
    %601 = vmatpush1.msra.mxu0 0.0
    %602 = vmatprep.subr.mxu0 0.0
    %603 = vmatpush1.msra.mxu0 0.0
    %604 = vmatprep.subr.mxu0 0.0
    %605 = vmatpush1.msra.mxu0 0.0
    %606 = vmatprep.subr.mxu0 0.0
    %607 = vmatpush1.msra.mxu0 0.0
    %608 = vmatprep.subr.mxu0 0.0
    %609 = vmatpush1.msra.mxu0 0.0
    %610 = vmatprep.subr.mxu0 0.0
    %611 = vmatpush1.msra.mxu0 0.0
    %612 = vmatprep.subr.mxu0 0.0
    %613 = vmatpush1.msra.mxu0 0.0
    %614 = vmatprep.subr.mxu0 0.0
    %615 = vmatpush1.msra.mxu0 0.0
    %616 = vmatprep.mubr.f32.mxu0 0.0
    %617 = vmatmul.mubr.f32.gmra.mrb[0].mxu0 %v550
    %v618 = vpop.f32.mrb[0].mxu0
    %v619 = vadd.f32 %v56, %v618
    %v620 = vpop.f32.mrb[0].mxu0
    %621 = vdwg.mxu0
    %v622 = vld [vmem:[%s12] sm:$0x1]
    %v624 = vlaneseq
    %v625 = vshrl.u32 %v624, 7
    %v626 = vsub.s32 0, %v625
    %v627 = vrot.slane %v622, %v626
    %v629 = vmul.f32 %v546, %v627
    %v630 = vmul.f32 %v619, %v627
    %v631 = vsel %vm372, %v629, 0.0
    %632 = vadd.xlane.f32.xlu0 %v631
    %v633 = vpop.xlane.xlu0 %632
    %v634 = vsel %vm372, %v630, 0.0
    %635 = vadd.xlane.f32.xlu0 %v634
    %v636 = vpop.xlane.xlu0 %635
    %v637 = vld [vmem:[%s13] sm:$0x1]
    %v639 = vlaneseq
    %v640 = vshrl.u32 %v639, 7
    %v641 = vsub.s32 0, %v640
    %v642 = vrot.slane %v637, %v641
    %v644 = vmul.f32 %v55, %v642
    %v645 = vmul.f32 %v56, %v642
    %v646 = vsel %vm372, %v644, 0.0
    %647 = vadd.xlane.f32.xlu0 %v646
    %v648 = vpop.xlane.xlu0 %647
    %v649 = vsel %vm372, %v645, 0.0
    %650 = vadd.xlane.f32.xlu0 %v649
    %v651 = vpop.xlane.xlu0 %650
    %v652 = vadd.f32 %v633, %v648
    %v653 = vadd.f32 %v636, %v651
    %v654 = vld [vmem:[#allocation3] sm:$0x1]
    %v656 = vlaneseq
    %v657 = vshrl.u32 %v656, 7
    %v658 = vsub.s32 0, %v657
    %v659 = vrot.slane %v654, %v658
    %v661 = vadd.f32 %v652, %v659
    %v662 = vadd.f32 %v653, %v659
    %v663 = vmul.f32 %v661, 0.5
    %v664 = vmul.f32 %v662, 0.5
    %v665 = vtanh.pop %v663
    %v666 = vtanh.pop %v664
    %v667 = vadd.f32 %v665, 1.0
    %v668 = vadd.f32 %v666, 1.0
    %v669 = vmul.f32 %v667, 0.5
    %v670 = vmul.f32 %v668, 0.5
    %672 = vset.pattern.permute.xlu0 0
    %673 = vperm.xlu0 %672, %v669
    %v674 = vpop.permute.xlu0 %673
    %677 = vset.pattern.permute.xlu0 0
    %678 = vperm.xlu0 %677, %v670
    %v679 = vpop.permute.xlu0 %678
    %v681 = vmul.f32 %v674, %v546
    %v682 = vmul.f32 %v679, %v619
    %v683 = vsub.f32 1.0, %v669
    %v684 = vsub.f32 1.0, %v670
    %686 = vset.pattern.permute.xlu0 0
    %687 = vperm.xlu0 %686, %v683
    %v688 = vpop.permute.xlu0 %687
    %691 = vset.pattern.permute.xlu0 0
    %692 = vperm.xlu0 %691, %v684
    %v693 = vpop.permute.xlu0 %692
    %v695 = vmul.f32 %v688, %v55
    %v696 = vmul.f32 %v693, %v56
    %v697 = vadd.f32 %v681, %v695
    %v698 = vadd.f32 %v682, %v696
    %v699 = vadd.f32 %v697, %v55
    %v700 = vadd.f32 %v698, %v56
    %701 = vst.msk [vmem:[#allocation4] sm:$0xf] %vm372, %v699
    %702 = vst.msk [vmem:[#allocation4 + $0x4] sm:$0xf] %vm372, %v700
    // Predicated region
    $region62: #{hgat_forward.7} parent=1 // pred_check
      _
    $region63: #{hgat_forward.7} parent=1 // pred_check_branch
      %704 = sbr.rel (0) target = $region65
    $region64: #{hgat_forward.7} parent=1 // pred_region
      %s706 = ssub.s32 128, 128
      %707 = vsyncadd [#allocation5], %s706
      %s708 = sshll.u32 [#allocation4], 4
      %s709 = int_to_ptr.vmem [resolvable:$true] %s708
      %714 = dma.vmem_to_hbm [thread:$0]  %s709, 128, %s15, [#allocation5], 64, 64, 4
    $region65: #{hgat_forward.7} parent=1 // pred_fallthru
      _
    // Predicated region
    $region66: #{hgat_forward.7} parent=1 // pred_check
      _
    $region67: #{hgat_forward.7} parent=1 // pred_check_branch
      %716 = sbr.rel (0) target = $region69
    $region68: #{hgat_forward.7} parent=1 // pred_region
      %717 = dma.done [#allocation5], 128
    $region69: #{hgat_forward.7} parent=1 // pred_fallthru
      _
    %718 = vsyncpa [#allocation5], 1

</llo_original>
